<compile_context>
chip_gen: v7x
topology: tpu7x:2x2x1
jax: 0.10.0
libtpu: 0.0.40
codegen_flags: <defaults>
</compile_context>

<pallas_src>
import functools

import numpy as np
import jax
import jax.numpy as jnp
from jax.experimental import pallas as pl
from jax.experimental.pallas import tpu as pltpu


def _bilinear_matrix(out_size, in_size):
    """Interpolation matrix matching torch bilinear, align_corners=False."""
    scale = in_size / out_size
    m = np.zeros((out_size, in_size), dtype=np.float32)
    for o in range(out_size):
        src = max((o + 0.5) * scale - 0.5, 0.0)
        i0 = min(int(np.floor(src)), in_size - 1)
        i1 = min(i0 + 1, in_size - 1)
        w1 = float(src - i0)
        m[o, i0] += 1.0 - w1
        m[o, i1] += w1
    return m


def _bilinear_taps(out_size, in_size):
    """(i0, i1, w) per output row -- same formula as _bilinear_matrix."""
    scale = in_size / out_size
    taps = []
    for o in range(out_size):
        src = max((o + 0.5) * scale - 0.5, 0.0)
        i0 = min(int(np.floor(src)), in_size - 1)
        i1 = min(i0 + 1, in_size - 1)
        taps.append((i0, i1, float(src - i0)))
    return taps


def _pick_batch_per_step(n, *, c1, c2, cout, hin, win, hout, wout,
                         act_bytes, comp_bytes, out_bytes,
                         budget_bytes=8 * 1024 * 1024):
    """Largest divisor of n whose per-grid-step VMEM footprint fits the budget."""
    cin = c1 + c2
    hw = hout * wout
    seg = hw + 2 * (wout + 1)
    best = 1
    for nb in range(1, n + 1):
        if n % nb:
            continue
        lanes = nb * seg
        need = (2 * nb * hin * c1 * win * act_bytes      # x block (dbl-buffered)
                + 2 * nb * c2 * hw * act_bytes           # skip block
                + 2 * nb * cout * hw * out_bytes         # output block
                + cin * lanes * comp_bytes               # padded flat scratch
                + nb * hin * c1 * wout * 4               # W-interp result
                + 2 * cout * lanes * 4                   # conv accumulator
                + 3 * lanes * comp_bytes)                # wrap masks
        if need <= budget_bytes:
            best = nb
    return best


def _decoder_kernel(x_ref, skip_ref, rwt_ref, w_ref, bias_ref, mask_ref,
                    o_ref, pad_ref, *, nb, hin, hout, wout, c1, c2, cout,
                    h_taps, compute_dtype):
    cin = c1 + c2
    hw = hout * wout
    pad = wout + 1                       # zero lanes on each side of a segment
    seg = hw + 2 * pad                   # lanes per batch segment in pad_ref
    L = nb * seg - 2 * pad               # lanes covered by one conv-tap window

    # ---- 1) bilinear upsample, W direction: one MXU matmul ----
    # x rows are (b, h, c)-major so the H blend below uses contiguous slices.
    t = jnp.dot(x_ref[0].astype(compute_dtype), rwt_ref[...],
                preferred_element_type=jnp.float32)       # (nb*hin*c1, wout)

    # ---- 2) row-padded flat image, one segment per batch element ----
    # The interior of every segment is fully rewritten each step; only the two
    # PAD-wide zero borders per segment are re-zeroed (safe under "parallel").
    for b in range(nb):
        s0 = b * seg
        pad_ref[:, s0:s0 + pad] = jnp.zeros((cin, pad), compute_dtype)
        pad_ref[:, s0 + pad + hw:s0 + seg] = jnp.zeros((cin, pad), compute_dtype)
        # bilinear upsample, H direction: 2-tap blend per output row; the
        # source rows / weights are trace-time constants (pure f32 VPU work).
        base = b * hin * c1
        for o, (i0, i1, w) in enumerate(h_taps):
            r0 = base + i0 * c1
            if i1 == i0 or w == 0.0:
                row = t[r0:r0 + c1, :]
            else:
                r1 = base + i1 * c1
                row = (1.0 - w) * t[r0:r0 + c1, :] + w * t[r1:r1 + c1, :]
            col = s0 + pad + o * wout
            pad_ref[0:c1, col:col + wout] = row.astype(compute_dtype)
        # channel concat == writing skip below the upsampled channels
        pad_ref[c1:cin, s0 + pad:s0 + pad + hw] = skip_ref[b].astype(compute_dtype)

    # ---- 3) 3x3 conv: 9 tap-accumulated matmuls (no materialized im2col) ----
    # H out-of-bounds taps land in the per-segment zero borders; W wrap-around
    # is killed by the precomputed per-column masks (mask_ref rows: kw=0,1,2).
    acc = None
    for kh in range(3):
        for kw in range(3):
            start = pad + (kh - 1) * wout + (kw - 1)
            win = pad_ref[:, start:start + L]             # (cin, L)
            if kw != 1:                                   # kw==1 needs no mask
                win = win * mask_ref[kw:kw + 1, :]
            part = jnp.dot(w_ref[kh * 3 + kw], win,
                           preferred_element_type=jnp.float32)
            acc = part if acc is None else acc + part     # (cout, L) f32

    # ---- 4) bias + ReLU, lane-dense per-batch stores ----
    for b in range(nb):
        y = acc[:, b * seg:b * seg + hw] + bias_ref[...]
        o_ref[b] = jnp.maximum(y, 0.0).astype(o_ref.dtype)


def decoder_block_forward(x_nchw, skip_nchw, w_oihw, bias, *,
                          compute_dtype=jnp.float32):
    """Pallas implementation of DecoderBlock.forward (NCHW in / NCHW out)."""
    N, C1, Hin, Win = x_nchw.shape
    Ns, C2, Hout, Wout = skip_nchw.shape
    Cout, Cin, KH, KW = w_oihw.shape
    assert Ns == N and Cin == C1 + C2 and KH == 3 and KW == 3
    HW = Hout * Wout
    PAD = Wout + 1
    SEG = HW + 2 * PAD

    nb = _pick_batch_per_step(
        N, c1=C1, c2=C2, cout=Cout, hin=Hin, win=Win, hout=Hout, wout=Wout,
        act_bytes=x_nchw.dtype.itemsize,
        comp_bytes=np.dtype(compute_dtype).itemsize,
        out_bytes=x_nchw.dtype.itemsize)
    L = nb * SEG - 2 * PAD

    # Activation glue: free reshapes, NO wrapper dtype casts (casting happens
    # in-kernel).  x gets one tiny NCHW->NHCW transpose so the W-interp matmul
    # has rows in (b, h, c) order and the H blend uses contiguous slices.
    x_rows = jnp.transpose(x_nchw, (0, 2, 1, 3)).reshape(
        N // nb, nb * Hin * C1, Win)
    skip2 = skip_nchw.reshape(N, C2, HW)

    # Grid-invariant operands (all <= a few KiB now that the kron matrix is gone).
    rw_t = jnp.asarray(_bilinear_matrix(Wout, Win).T, dtype=compute_dtype)
    h_taps = _bilinear_taps(Hout, Hin)
    # conv weights packed per tap: (9, Cout, Cin), tap index = kh*3 + kw
    w_taps = jnp.transpose(w_oihw, (2, 3, 0, 1)).reshape(9, Cout, Cin)
    w_taps = w_taps.astype(compute_dtype)
    bias2 = bias.reshape(Cout, 1).astype(jnp.float32)

    # Per-tap W-wrap masks over the segmented lane axis (kw = 0, 1, 2).
    j = np.arange(L)
    k = j % SEG                                  # position within a segment
    wpos = k % Wout
    valid = (k < HW).astype(np.float32)
    colmask = np.stack([valid * (wpos >= 1),
                        valid,
                        valid * (wpos <= Wout - 2)]).astype(np.float32)
    colmask = jnp.asarray(colmask, dtype=compute_dtype)        # (3, L)

    kernel = functools.partial(
        _decoder_kernel, nb=nb, hin=Hin, hout=Hout, wout=Wout,
        c1=C1, c2=C2, cout=Cout, h_taps=h_taps, compute_dtype=compute_dtype)

    out_flat = pl.pallas_call(
        kernel,
        out_shape=jax.ShapeDtypeStruct((N, Cout, HW), x_nchw.dtype),
        grid_spec=pltpu.PrefetchScalarGridSpec(
            num_scalar_prefetch=0,
            grid=(N // nb,),
            in_specs=[
                pl.BlockSpec((1, nb * Hin * C1, Win), lambda g: (g, 0, 0)),
                pl.BlockSpec((nb, C2, HW), lambda g: (g, 0, 0)),
                pl.BlockSpec((Win, Wout), lambda g: (0, 0)),
                pl.BlockSpec((9, Cout, Cin), lambda g: (0, 0, 0)),
                pl.BlockSpec((Cout, 1), lambda g: (0, 0)),
                pl.BlockSpec((3, L), lambda g: (0, 0)),
            ],
            out_specs=pl.BlockSpec((nb, Cout, HW), lambda g: (g, 0, 0)),
            scratch_shapes=[
                pltpu.VMEM((Cin, nb * SEG), compute_dtype),
            ],
        ),
        compiler_params=pltpu.CompilerParams(
            dimension_semantics=("parallel",),
            # Explicit scoped-VMEM limit: default is 32 MiB; 48 MiB leaves
            # headroom on v7x (64 MiB physical), trivially fine on v5e/v6e.
            vmem_limit_bytes=48 * 1024 * 1024),
    )(x_rows, skip2, rw_t, w_taps, bias2, colmask)

    return out_flat.reshape(N, Cout, Hout, Wout)        # NCHW, free reshape


def decoder_block_reference(x_nchw, skip_nchw, w_oihw, bias):
    """Pure-JAX reference with identical semantics (for the correctness check)."""
    _, _, Hin, Win = x_nchw.shape
    _, _, Hout, Wout = skip_nchw.shape
    rh = jnp.asarray(_bilinear_matrix(Hout, Hin))
    rw = jnp.asarray(_bilinear_matrix(Wout, Win))
    x_up = jnp.einsum('oh,nchw->ncow', rh, x_nchw)
    x_up = jnp.einsum('pw,ncow->ncop', rw, x_up)
    cat = jnp.concatenate([x_up, skip_nchw], axis=1)
    y = jax.lax.conv_general_dilated(
        cat, w_oihw, window_strides=(1, 1), padding=((1, 1), (1, 1)),
        dimension_numbers=('NCHW', 'OIHW', 'NCHW'))
    y = y + bias[None, :, None, None]
    return jnp.maximum(y, 0.0)


if __name__ == "__main__":
    key = jax.random.PRNGKey(0)
    k1, k2, k3, k4 = jax.random.split(key, 4)

    # x: (N, C1, Hin, Win), skip_x: (N, C2, Hout, Wout)
    N, C1, Hin, Win = 2, 4, 8, 8
    C2, Hout, Wout = 4, 16, 16
    in_ch, out_ch = C1 + C2, 4                    # DecoderBlock(in_ch, out_ch)

    x = jax.random.normal(k1, (N, C1, Hin, Win), jnp.float32)
    skip_x = jax.random.normal(k2, (N, C2, Hout, Wout), jnp.float32)
    # deterministic conv params: nn.Conv2d(in_ch, out_ch, kernel_size=3, padding=1)
    w = 0.1 * jax.random.normal(k3, (out_ch, in_ch, 3, 3), jnp.float32)
    b = 0.1 * jax.random.normal(k4, (out_ch,), jnp.float32)

    y = decoder_block_forward(x, skip_x, w, b)
    y = jax.block_until_ready(y)

    y_ref = decoder_block_reference(x, skip_x, w, b)
    assert y.shape == (N, out_ch, Hout, Wout)
    max_err = float(jnp.max(jnp.abs(y - y_ref)))
    assert jnp.allclose(y, y_ref, atol=1e-4, rtol=1e-4), max_err
    print("KERNEL_OK")
</pallas_src>

<mosaic_0001>
module attributes {stable_mosaic.version = 11 : i64} {
  func.func @_decoder_kernel(%arg0: i32, %arg1: memref<1x64x8xf32, #tpu.memory_space<vmem>>, %arg2: memref<2x4x256xf32, #tpu.memory_space<vmem>>, %arg3: memref<8x16xf32, #tpu.memory_space<vmem>>, %arg4: memref<9x4x8xf32, #tpu.memory_space<vmem>>, %arg5: memref<4x1xf32, #tpu.memory_space<vmem>>, %arg6: memref<3x546xf32, #tpu.memory_space<vmem>>, %arg7: memref<2x4x256xf32, #tpu.memory_space<vmem>>, %arg8: memref<8x580xf32, #tpu.memory_space<vmem>>) attributes {dimension_semantics = [#tpu.dimension_semantics<parallel>], iteration_bounds = array<i64: 1>, scalar_prefetch = 0 : i64, scratch_operands = 1 : i64, tpu.core_type = #tpu.core_type<tc>, window_params = [{transform_indices = @transform_0, window_bounds = array<i64: 1, 64, 8>}, {transform_indices = @transform_1, window_bounds = array<i64: 2, 4, 256>}, {pipeline_mode = #tpu.pipeline_mode<synchronous>, transform_indices = @transform_2, window_bounds = array<i64: 8, 16>}, {pipeline_mode = #tpu.pipeline_mode<synchronous>, transform_indices = @transform_3, window_bounds = array<i64: 9, 4, 8>}, {pipeline_mode = #tpu.pipeline_mode<synchronous>, transform_indices = @transform_4, window_bounds = array<i64: 4, 1>}, {pipeline_mode = #tpu.pipeline_mode<synchronous>, transform_indices = @transform_5, window_bounds = array<i64: 3, 546>}, {transform_indices = @transform_6, window_bounds = array<i64: 2, 4, 256>}]} {
    %c0 = arith.constant 0 : index
    %c0_0 = arith.constant 0 : index
    %c0_1 = arith.constant 0 : index
    %0 = vector.load %arg1[%c0, %c0_0, %c0_1] : memref<1x64x8xf32, #tpu.memory_space<vmem>>, vector<1x64x8xf32>
    %1 = vector.shape_cast %0 : vector<1x64x8xf32> to vector<64x8xf32>
    %c0_2 = arith.constant 0 : index
    %c0_3 = arith.constant 0 : index
    %2 = vector.load %arg3[%c0_2, %c0_3] : memref<8x16xf32, #tpu.memory_space<vmem>>, vector<8x16xf32>
    %cst = arith.constant dense<0.000000e+00> : vector<64x16xf32>
    %3 = tpu.matmul %1, %2, %cst {dimension_numbers = #tpu.dot_dimension_numbers<[1], [0], [0], [1], [0, 0, 1, 1], [], []>} : vector<64x8xf32>, vector<8x16xf32>, vector<64x16xf32> -> vector<64x16xf32>
    %cst_4 = arith.constant 0.000000e+00 : f32
    %4 = vector.broadcast %cst_4 : f32 to vector<8x17xf32>
    %c0_5 = arith.constant 0 : index
    %c0_6 = arith.constant 0 : index
    %5 = vector.load %arg8[%c0_5, %c0_6] : memref<8x580xf32, #tpu.memory_space<vmem>>, vector<8x17xf32>
    tpu.vector_store %arg8[%c0_5, %c0_6], %4 {strides = array<i32>} : memref<8x580xf32, #tpu.memory_space<vmem>>, vector<8x17xf32>,
    %cst_7 = arith.constant 0.000000e+00 : f32
    %6 = vector.broadcast %cst_7 : f32 to vector<8x17xf32>
    %c0_8 = arith.constant 0 : index
    %c273 = arith.constant 273 : index
    %7 = vector.load %arg8[%c0_8, %c273] : memref<8x580xf32, #tpu.memory_space<vmem>>, vector<8x17xf32>
    tpu.vector_store %arg8[%c0_8, %c273], %6 {strides = array<i32>} : memref<8x580xf32, #tpu.memory_space<vmem>>, vector<8x17xf32>,
    %8 = vector.extract_strided_slice %3 {offsets = [0, 0], sizes = [4, 16], strides = [1, 1]} : vector<64x16xf32> to vector<4x16xf32>
    %c0_9 = arith.constant 0 : index
    %c17 = arith.constant 17 : index
    %9 = vector.load %arg8[%c0_9, %c17] : memref<8x580xf32, #tpu.memory_space<vmem>>, vector<4x16xf32>
    tpu.vector_store %arg8[%c0_9, %c17], %8 {strides = array<i32>} : memref<8x580xf32, #tpu.memory_space<vmem>>, vector<4x16xf32>,
    %10 = vector.extract_strided_slice %3 {offsets = [0, 0], sizes = [4, 16], strides = [1, 1]} : vector<64x16xf32> to vector<4x16xf32>
    %cst_10 = arith.constant 7.500000e-01 : f32
    %11 = vector.broadcast %cst_10 : f32 to vector<4x16xf32>
    %12 = arith.mulf %11, %10 : vector<4x16xf32>
    %13 = vector.extract_strided_slice %3 {offsets = [4, 0], sizes = [4, 16], strides = [1, 1]} : vector<64x16xf32> to vector<4x16xf32>
    %cst_11 = arith.constant 2.500000e-01 : f32
    %14 = vector.broadcast %cst_11 : f32 to vector<4x16xf32>
    %15 = arith.mulf %14, %13 : vector<4x16xf32>
    %16 = arith.addf %12, %15 : vector<4x16xf32>
    %c0_12 = arith.constant 0 : index
    %c33 = arith.constant 33 : index
    %17 = vector.load %arg8[%c0_12, %c33] : memref<8x580xf32, #tpu.memory_space<vmem>>, vector<4x16xf32>
    tpu.vector_store %arg8[%c0_12, %c33], %16 {strides = array<i32>} : memref<8x580xf32, #tpu.memory_space<vmem>>, vector<4x16xf32>,
    %18 = vector.extract_strided_slice %3 {offsets = [0, 0], sizes = [4, 16], strides = [1, 1]} : vector<64x16xf32> to vector<4x16xf32>
    %cst_13 = arith.constant 2.500000e-01 : f32
    %19 = vector.broadcast %cst_13 : f32 to vector<4x16xf32>
    %20 = arith.mulf %19, %18 : vector<4x16xf32>
    %21 = vector.extract_strided_slice %3 {offsets = [4, 0], sizes = [4, 16], strides = [1, 1]} : vector<64x16xf32> to vector<4x16xf32>
    %cst_14 = arith.constant 7.500000e-01 : f32
    %22 = vector.broadcast %cst_14 : f32 to vector<4x16xf32>
    %23 = arith.mulf %22, %21 : vector<4x16xf32>
    %24 = arith.addf %20, %23 : vector<4x16xf32>
    %c0_15 = arith.constant 0 : index
    %c49 = arith.constant 49 : index
    %25 = vector.load %arg8[%c0_15, %c49] : memref<8x580xf32, #tpu.memory_space<vmem>>, vector<4x16xf32>
    tpu.vector_store %arg8[%c0_15, %c49], %24 {strides = array<i32>} : memref<8x580xf32, #tpu.memory_space<vmem>>, vector<4x16xf32>,
    %26 = vector.extract_strided_slice %3 {offsets = [4, 0], sizes = [4, 16], strides = [1, 1]} : vector<64x16xf32> to vector<4x16xf32>
    %cst_16 = arith.constant 7.500000e-01 : f32
    %27 = vector.broadcast %cst_16 : f32 to vector<4x16xf32>
    %28 = arith.mulf %27, %26 : vector<4x16xf32>
    %29 = vector.extract_strided_slice %3 {offsets = [8, 0], sizes = [4, 16], strides = [1, 1]} : vector<64x16xf32> to vector<4x16xf32>
    %cst_17 = arith.constant 2.500000e-01 : f32
    %30 = vector.broadcast %cst_17 : f32 to vector<4x16xf32>
    %31 = arith.mulf %30, %29 : vector<4x16xf32>
    %32 = arith.addf %28, %31 : vector<4x16xf32>
    %c0_18 = arith.constant 0 : index
    %c65 = arith.constant 65 : index
    %33 = vector.load %arg8[%c0_18, %c65] : memref<8x580xf32, #tpu.memory_space<vmem>>, vector<4x16xf32>
    tpu.vector_store %arg8[%c0_18, %c65], %32 {strides = array<i32>} : memref<8x580xf32, #tpu.memory_space<vmem>>, vector<4x16xf32>,
    %34 = vector.extract_strided_slice %3 {offsets = [4, 0], sizes = [4, 16], strides = [1, 1]} : vector<64x16xf32> to vector<4x16xf32>
    %cst_19 = arith.constant 2.500000e-01 : f32
    %35 = vector.broadcast %cst_19 : f32 to vector<4x16xf32>
    %36 = arith.mulf %35, %34 : vector<4x16xf32>
    %37 = vector.extract_strided_slice %3 {offsets = [8, 0], sizes = [4, 16], strides = [1, 1]} : vector<64x16xf32> to vector<4x16xf32>
    %cst_20 = arith.constant 7.500000e-01 : f32
    %38 = vector.broadcast %cst_20 : f32 to vector<4x16xf32>
    %39 = arith.mulf %38, %37 : vector<4x16xf32>
    %40 = arith.addf %36, %39 : vector<4x16xf32>
    %c0_21 = arith.constant 0 : index
    %c81 = arith.constant 81 : index
    %41 = vector.load %arg8[%c0_21, %c81] : memref<8x580xf32, #tpu.memory_space<vmem>>, vector<4x16xf32>
    tpu.vector_store %arg8[%c0_21, %c81], %40 {strides = array<i32>} : memref<8x580xf32, #tpu.memory_space<vmem>>, vector<4x16xf32>,
    %42 = vector.extract_strided_slice %3 {offsets = [8, 0], sizes = [4, 16], strides = [1, 1]} : vector<64x16xf32> to vector<4x16xf32>
    %cst_22 = arith.constant 7.500000e-01 : f32
    %43 = vector.broadcast %cst_22 : f32 to vector<4x16xf32>
    %44 = arith.mulf %43, %42 : vector<4x16xf32>
    %45 = vector.extract_strided_slice %3 {offsets = [12, 0], sizes = [4, 16], strides = [1, 1]} : vector<64x16xf32> to vector<4x16xf32>
    %cst_23 = arith.constant 2.500000e-01 : f32
    %46 = vector.broadcast %cst_23 : f32 to vector<4x16xf32>
    %47 = arith.mulf %46, %45 : vector<4x16xf32>
    %48 = arith.addf %44, %47 : vector<4x16xf32>
    %c0_24 = arith.constant 0 : index
    %c97 = arith.constant 97 : index
    %49 = vector.load %arg8[%c0_24, %c97] : memref<8x580xf32, #tpu.memory_space<vmem>>, vector<4x16xf32>
    tpu.vector_store %arg8[%c0_24, %c97], %48 {strides = array<i32>} : memref<8x580xf32, #tpu.memory_space<vmem>>, vector<4x16xf32>,
    %50 = vector.extract_strided_slice %3 {offsets = [8, 0], sizes = [4, 16], strides = [1, 1]} : vector<64x16xf32> to vector<4x16xf32>
    %cst_25 = arith.constant 2.500000e-01 : f32
    %51 = vector.broadcast %cst_25 : f32 to vector<4x16xf32>
    %52 = arith.mulf %51, %50 : vector<4x16xf32>
    %53 = vector.extract_strided_slice %3 {offsets = [12, 0], sizes = [4, 16], strides = [1, 1]} : vector<64x16xf32> to vector<4x16xf32>
    %cst_26 = arith.constant 7.500000e-01 : f32
    %54 = vector.broadcast %cst_26 : f32 to vector<4x16xf32>
    %55 = arith.mulf %54, %53 : vector<4x16xf32>
    %56 = arith.addf %52, %55 : vector<4x16xf32>
    %c0_27 = arith.constant 0 : index
    %c113 = arith.constant 113 : index
    %57 = vector.load %arg8[%c0_27, %c113] : memref<8x580xf32, #tpu.memory_space<vmem>>, vector<4x16xf32>
    tpu.vector_store %arg8[%c0_27, %c113], %56 {strides = array<i32>} : memref<8x580xf32, #tpu.memory_space<vmem>>, vector<4x16xf32>,
    %58 = vector.extract_strided_slice %3 {offsets = [12, 0], sizes = [4, 16], strides = [1, 1]} : vector<64x16xf32> to vector<4x16xf32>
    %cst_28 = arith.constant 7.500000e-01 : f32
    %59 = vector.broadcast %cst_28 : f32 to vector<4x16xf32>
    %60 = arith.mulf %59, %58 : vector<4x16xf32>
    %61 = vector.extract_strided_slice %3 {offsets = [16, 0], sizes = [4, 16], strides = [1, 1]} : vector<64x16xf32> to vector<4x16xf32>
    %cst_29 = arith.constant 2.500000e-01 : f32
    %62 = vector.broadcast %cst_29 : f32 to vector<4x16xf32>
    %63 = arith.mulf %62, %61 : vector<4x16xf32>
    %64 = arith.addf %60, %63 : vector<4x16xf32>
    %c0_30 = arith.constant 0 : index
    %c129 = arith.constant 129 : index
    %65 = vector.load %arg8[%c0_30, %c129] : memref<8x580xf32, #tpu.memory_space<vmem>>, vector<4x16xf32>
    tpu.vector_store %arg8[%c0_30, %c129], %64 {strides = array<i32>} : memref<8x580xf32, #tpu.memory_space<vmem>>, vector<4x16xf32>,
    %66 = vector.extract_strided_slice %3 {offsets = [12, 0], sizes = [4, 16], strides = [1, 1]} : vector<64x16xf32> to vector<4x16xf32>
    %cst_31 = arith.constant 2.500000e-01 : f32
    %67 = vector.broadcast %cst_31 : f32 to vector<4x16xf32>
    %68 = arith.mulf %67, %66 : vector<4x16xf32>
    %69 = vector.extract_strided_slice %3 {offsets = [16, 0], sizes = [4, 16], strides = [1, 1]} : vector<64x16xf32> to vector<4x16xf32>
    %cst_32 = arith.constant 7.500000e-01 : f32
    %70 = vector.broadcast %cst_32 : f32 to vector<4x16xf32>
    %71 = arith.mulf %70, %69 : vector<4x16xf32>
    %72 = arith.addf %68, %71 : vector<4x16xf32>
    %c0_33 = arith.constant 0 : index
    %c145 = arith.constant 145 : index
    %73 = vector.load %arg8[%c0_33, %c145] : memref<8x580xf32, #tpu.memory_space<vmem>>, vector<4x16xf32>
    tpu.vector_store %arg8[%c0_33, %c145], %72 {strides = array<i32>} : memref<8x580xf32, #tpu.memory_space<vmem>>, vector<4x16xf32>,
    %74 = vector.extract_strided_slice %3 {offsets = [16, 0], sizes = [4, 16], strides = [1, 1]} : vector<64x16xf32> to vector<4x16xf32>
    %cst_34 = arith.constant 7.500000e-01 : f32
    %75 = vector.broadcast %cst_34 : f32 to vector<4x16xf32>
    %76 = arith.mulf %75, %74 : vector<4x16xf32>
    %77 = vector.extract_strided_slice %3 {offsets = [20, 0], sizes = [4, 16], strides = [1, 1]} : vector<64x16xf32> to vector<4x16xf32>
    %cst_35 = arith.constant 2.500000e-01 : f32
    %78 = vector.broadcast %cst_35 : f32 to vector<4x16xf32>
    %79 = arith.mulf %78, %77 : vector<4x16xf32>
    %80 = arith.addf %76, %79 : vector<4x16xf32>
    %c0_36 = arith.constant 0 : index
    %c161 = arith.constant 161 : index
    %81 = vector.load %arg8[%c0_36, %c161] : memref<8x580xf32, #tpu.memory_space<vmem>>, vector<4x16xf32>
    tpu.vector_store %arg8[%c0_36, %c161], %80 {strides = array<i32>} : memref<8x580xf32, #tpu.memory_space<vmem>>, vector<4x16xf32>,
    %82 = vector.extract_strided_slice %3 {offsets = [16, 0], sizes = [4, 16], strides = [1, 1]} : vector<64x16xf32> to vector<4x16xf32>
    %cst_37 = arith.constant 2.500000e-01 : f32
    %83 = vector.broadcast %cst_37 : f32 to vector<4x16xf32>
    %84 = arith.mulf %83, %82 : vector<4x16xf32>
    %85 = vector.extract_strided_slice %3 {offsets = [20, 0], sizes = [4, 16], strides = [1, 1]} : vector<64x16xf32> to vector<4x16xf32>
    %cst_38 = arith.constant 7.500000e-01 : f32
    %86 = vector.broadcast %cst_38 : f32 to vector<4x16xf32>
    %87 = arith.mulf %86, %85 : vector<4x16xf32>
    %88 = arith.addf %84, %87 : vector<4x16xf32>
    %c0_39 = arith.constant 0 : index
    %c177 = arith.constant 177 : index
    %89 = vector.load %arg8[%c0_39, %c177] : memref<8x580xf32, #tpu.memory_space<vmem>>, vector<4x16xf32>
    tpu.vector_store %arg8[%c0_39, %c177], %88 {strides = array<i32>} : memref<8x580xf32, #tpu.memory_space<vmem>>, vector<4x16xf32>,
    %90 = vector.extract_strided_slice %3 {offsets = [20, 0], sizes = [4, 16], strides = [1, 1]} : vector<64x16xf32> to vector<4x16xf32>
    %cst_40 = arith.constant 7.500000e-01 : f32
    %91 = vector.broadcast %cst_40 : f32 to vector<4x16xf32>
    %92 = arith.mulf %91, %90 : vector<4x16xf32>
    %93 = vector.extract_strided_slice %3 {offsets = [24, 0], sizes = [4, 16], strides = [1, 1]} : vector<64x16xf32> to vector<4x16xf32>
    %cst_41 = arith.constant 2.500000e-01 : f32
    %94 = vector.broadcast %cst_41 : f32 to vector<4x16xf32>
    %95 = arith.mulf %94, %93 : vector<4x16xf32>
    %96 = arith.addf %92, %95 : vector<4x16xf32>
    %c0_42 = arith.constant 0 : index
    %c193 = arith.constant 193 : index
    %97 = vector.load %arg8[%c0_42, %c193] : memref<8x580xf32, #tpu.memory_space<vmem>>, vector<4x16xf32>
    tpu.vector_store %arg8[%c0_42, %c193], %96 {strides = array<i32>} : memref<8x580xf32, #tpu.memory_space<vmem>>, vector<4x16xf32>,
    %98 = vector.extract_strided_slice %3 {offsets = [20, 0], sizes = [4, 16], strides = [1, 1]} : vector<64x16xf32> to vector<4x16xf32>
    %cst_43 = arith.constant 2.500000e-01 : f32
    %99 = vector.broadcast %cst_43 : f32 to vector<4x16xf32>
    %100 = arith.mulf %99, %98 : vector<4x16xf32>
    %101 = vector.extract_strided_slice %3 {offsets = [24, 0], sizes = [4, 16], strides = [1, 1]} : vector<64x16xf32> to vector<4x16xf32>
    %cst_44 = arith.constant 7.500000e-01 : f32
    %102 = vector.broadcast %cst_44 : f32 to vector<4x16xf32>
    %103 = arith.mulf %102, %101 : vector<4x16xf32>
    %104 = arith.addf %100, %103 : vector<4x16xf32>
    %c0_45 = arith.constant 0 : index
    %c209 = arith.constant 209 : index
    %105 = vector.load %arg8[%c0_45, %c209] : memref<8x580xf32, #tpu.memory_space<vmem>>, vector<4x16xf32>
    tpu.vector_store %arg8[%c0_45, %c209], %104 {strides = array<i32>} : memref<8x580xf32, #tpu.memory_space<vmem>>, vector<4x16xf32>,
    %106 = vector.extract_strided_slice %3 {offsets = [24, 0], sizes = [4, 16], strides = [1, 1]} : vector<64x16xf32> to vector<4x16xf32>
    %cst_46 = arith.constant 7.500000e-01 : f32
    %107 = vector.broadcast %cst_46 : f32 to vector<4x16xf32>
    %108 = arith.mulf %107, %106 : vector<4x16xf32>
    %109 = vector.extract_strided_slice %3 {offsets = [28, 0], sizes = [4, 16], strides = [1, 1]} : vector<64x16xf32> to vector<4x16xf32>
    %cst_47 = arith.constant 2.500000e-01 : f32
    %110 = vector.broadcast %cst_47 : f32 to vector<4x16xf32>
    %111 = arith.mulf %110, %109 : vector<4x16xf32>
    %112 = arith.addf %108, %111 : vector<4x16xf32>
    %c0_48 = arith.constant 0 : index
    %c225 = arith.constant 225 : index
    %113 = vector.load %arg8[%c0_48, %c225] : memref<8x580xf32, #tpu.memory_space<vmem>>, vector<4x16xf32>
    tpu.vector_store %arg8[%c0_48, %c225], %112 {strides = array<i32>} : memref<8x580xf32, #tpu.memory_space<vmem>>, vector<4x16xf32>,
    %114 = vector.extract_strided_slice %3 {offsets = [24, 0], sizes = [4, 16], strides = [1, 1]} : vector<64x16xf32> to vector<4x16xf32>
    %cst_49 = arith.constant 2.500000e-01 : f32
    %115 = vector.broadcast %cst_49 : f32 to vector<4x16xf32>
    %116 = arith.mulf %115, %114 : vector<4x16xf32>
    %117 = vector.extract_strided_slice %3 {offsets = [28, 0], sizes = [4, 16], strides = [1, 1]} : vector<64x16xf32> to vector<4x16xf32>
    %cst_50 = arith.constant 7.500000e-01 : f32
    %118 = vector.broadcast %cst_50 : f32 to vector<4x16xf32>
    %119 = arith.mulf %118, %117 : vector<4x16xf32>
    %120 = arith.addf %116, %119 : vector<4x16xf32>
    %c0_51 = arith.constant 0 : index
    %c241 = arith.constant 241 : index
    %121 = vector.load %arg8[%c0_51, %c241] : memref<8x580xf32, #tpu.memory_space<vmem>>, vector<4x16xf32>
    tpu.vector_store %arg8[%c0_51, %c241], %120 {strides = array<i32>} : memref<8x580xf32, #tpu.memory_space<vmem>>, vector<4x16xf32>,
    %122 = vector.extract_strided_slice %3 {offsets = [28, 0], sizes = [4, 16], strides = [1, 1]} : vector<64x16xf32> to vector<4x16xf32>
    %c0_52 = arith.constant 0 : index
    %c257 = arith.constant 257 : index
    %123 = vector.load %arg8[%c0_52, %c257] : memref<8x580xf32, #tpu.memory_space<vmem>>, vector<4x16xf32>
    tpu.vector_store %arg8[%c0_52, %c257], %122 {strides = array<i32>} : memref<8x580xf32, #tpu.memory_space<vmem>>, vector<4x16xf32>,
    %c0_53 = arith.constant 0 : index
    %c0_54 = arith.constant 0 : index
    %c0_55 = arith.constant 0 : index
    %124 = vector.load %arg2[%c0_53, %c0_54, %c0_55] : memref<2x4x256xf32, #tpu.memory_space<vmem>>, vector<1x4x256xf32>
    %125 = vector.shape_cast %124 : vector<1x4x256xf32> to vector<4x256xf32>
    %c4 = arith.constant 4 : index
    %c17_56 = arith.constant 17 : index
    %126 = vector.load %arg8[%c4, %c17_56] : memref<8x580xf32, #tpu.memory_space<vmem>>, vector<4x256xf32>
    tpu.vector_store %arg8[%c4, %c17_56], %125 {strides = array<i32>} : memref<8x580xf32, #tpu.memory_space<vmem>>, vector<4x256xf32>,
    %cst_57 = arith.constant 0.000000e+00 : f32
    %127 = vector.broadcast %cst_57 : f32 to vector<8x17xf32>
    %c0_58 = arith.constant 0 : index
    %c290 = arith.constant 290 : index
    %128 = vector.load %arg8[%c0_58, %c290] : memref<8x580xf32, #tpu.memory_space<vmem>>, vector<8x17xf32>
    tpu.vector_store %arg8[%c0_58, %c290], %127 {strides = array<i32>} : memref<8x580xf32, #tpu.memory_space<vmem>>, vector<8x17xf32>,
    %cst_59 = arith.constant 0.000000e+00 : f32
    %129 = vector.broadcast %cst_59 : f32 to vector<8x17xf32>
    %c0_60 = arith.constant 0 : index
    %c563 = arith.constant 563 : index
    %130 = vector.load %arg8[%c0_60, %c563] : memref<8x580xf32, #tpu.memory_space<vmem>>, vector<8x17xf32>
    tpu.vector_store %arg8[%c0_60, %c563], %129 {strides = array<i32>} : memref<8x580xf32, #tpu.memory_space<vmem>>, vector<8x17xf32>,
    %131 = vector.extract_strided_slice %3 {offsets = [32, 0], sizes = [4, 16], strides = [1, 1]} : vector<64x16xf32> to vector<4x16xf32>
    %c0_61 = arith.constant 0 : index
    %c307 = arith.constant 307 : index
    %132 = vector.load %arg8[%c0_61, %c307] : memref<8x580xf32, #tpu.memory_space<vmem>>, vector<4x16xf32>
    tpu.vector_store %arg8[%c0_61, %c307], %131 {strides = array<i32>} : memref<8x580xf32, #tpu.memory_space<vmem>>, vector<4x16xf32>,
    %133 = vector.extract_strided_slice %3 {offsets = [32, 0], sizes = [4, 16], strides = [1, 1]} : vector<64x16xf32> to vector<4x16xf32>
    %cst_62 = arith.constant 7.500000e-01 : f32
    %134 = vector.broadcast %cst_62 : f32 to vector<4x16xf32>
    %135 = arith.mulf %134, %133 : vector<4x16xf32>
    %136 = vector.extract_strided_slice %3 {offsets = [36, 0], sizes = [4, 16], strides = [1, 1]} : vector<64x16xf32> to vector<4x16xf32>
    %cst_63 = arith.constant 2.500000e-01 : f32
    %137 = vector.broadcast %cst_63 : f32 to vector<4x16xf32>
    %138 = arith.mulf %137, %136 : vector<4x16xf32>
    %139 = arith.addf %135, %138 : vector<4x16xf32>
    %c0_64 = arith.constant 0 : index
    %c323 = arith.constant 323 : index
    %140 = vector.load %arg8[%c0_64, %c323] : memref<8x580xf32, #tpu.memory_space<vmem>>, vector<4x16xf32>
    tpu.vector_store %arg8[%c0_64, %c323], %139 {strides = array<i32>} : memref<8x580xf32, #tpu.memory_space<vmem>>, vector<4x16xf32>,
    %141 = vector.extract_strided_slice %3 {offsets = [32, 0], sizes = [4, 16], strides = [1, 1]} : vector<64x16xf32> to vector<4x16xf32>
    %cst_65 = arith.constant 2.500000e-01 : f32
    %142 = vector.broadcast %cst_65 : f32 to vector<4x16xf32>
    %143 = arith.mulf %142, %141 : vector<4x16xf32>
    %144 = vector.extract_strided_slice %3 {offsets = [36, 0], sizes = [4, 16], strides = [1, 1]} : vector<64x16xf32> to vector<4x16xf32>
    %cst_66 = arith.constant 7.500000e-01 : f32
    %145 = vector.broadcast %cst_66 : f32 to vector<4x16xf32>
    %146 = arith.mulf %145, %144 : vector<4x16xf32>
    %147 = arith.addf %143, %146 : vector<4x16xf32>
    %c0_67 = arith.constant 0 : index
    %c339 = arith.constant 339 : index
    %148 = vector.load %arg8[%c0_67, %c339] : memref<8x580xf32, #tpu.memory_space<vmem>>, vector<4x16xf32>
    tpu.vector_store %arg8[%c0_67, %c339], %147 {strides = array<i32>} : memref<8x580xf32, #tpu.memory_space<vmem>>, vector<4x16xf32>,
    %149 = vector.extract_strided_slice %3 {offsets = [36, 0], sizes = [4, 16], strides = [1, 1]} : vector<64x16xf32> to vector<4x16xf32>
    %cst_68 = arith.constant 7.500000e-01 : f32
    %150 = vector.broadcast %cst_68 : f32 to vector<4x16xf32>
    %151 = arith.mulf %150, %149 : vector<4x16xf32>
    %152 = vector.extract_strided_slice %3 {offsets = [40, 0], sizes = [4, 16], strides = [1, 1]} : vector<64x16xf32> to vector<4x16xf32>
    %cst_69 = arith.constant 2.500000e-01 : f32
    %153 = vector.broadcast %cst_69 : f32 to vector<4x16xf32>
    %154 = arith.mulf %153, %152 : vector<4x16xf32>
    %155 = arith.addf %151, %154 : vector<4x16xf32>
    %c0_70 = arith.constant 0 : index
    %c355 = arith.constant 355 : index
    %156 = vector.load %arg8[%c0_70, %c355] : memref<8x580xf32, #tpu.memory_space<vmem>>, vector<4x16xf32>
    tpu.vector_store %arg8[%c0_70, %c355], %155 {strides = array<i32>} : memref<8x580xf32, #tpu.memory_space<vmem>>, vector<4x16xf32>,
    %157 = vector.extract_strided_slice %3 {offsets = [36, 0], sizes = [4, 16], strides = [1, 1]} : vector<64x16xf32> to vector<4x16xf32>
    %cst_71 = arith.constant 2.500000e-01 : f32
    %158 = vector.broadcast %cst_71 : f32 to vector<4x16xf32>
    %159 = arith.mulf %158, %157 : vector<4x16xf32>
    %160 = vector.extract_strided_slice %3 {offsets = [40, 0], sizes = [4, 16], strides = [1, 1]} : vector<64x16xf32> to vector<4x16xf32>
    %cst_72 = arith.constant 7.500000e-01 : f32
    %161 = vector.broadcast %cst_72 : f32 to vector<4x16xf32>
    %162 = arith.mulf %161, %160 : vector<4x16xf32>
    %163 = arith.addf %159, %162 : vector<4x16xf32>
    %c0_73 = arith.constant 0 : index
    %c371 = arith.constant 371 : index
    %164 = vector.load %arg8[%c0_73, %c371] : memref<8x580xf32, #tpu.memory_space<vmem>>, vector<4x16xf32>
    tpu.vector_store %arg8[%c0_73, %c371], %163 {strides = array<i32>} : memref<8x580xf32, #tpu.memory_space<vmem>>, vector<4x16xf32>,
    %165 = vector.extract_strided_slice %3 {offsets = [40, 0], sizes = [4, 16], strides = [1, 1]} : vector<64x16xf32> to vector<4x16xf32>
    %cst_74 = arith.constant 7.500000e-01 : f32
    %166 = vector.broadcast %cst_74 : f32 to vector<4x16xf32>
    %167 = arith.mulf %166, %165 : vector<4x16xf32>
    %168 = vector.extract_strided_slice %3 {offsets = [44, 0], sizes = [4, 16], strides = [1, 1]} : vector<64x16xf32> to vector<4x16xf32>
    %cst_75 = arith.constant 2.500000e-01 : f32
    %169 = vector.broadcast %cst_75 : f32 to vector<4x16xf32>
    %170 = arith.mulf %169, %168 : vector<4x16xf32>
    %171 = arith.addf %167, %170 : vector<4x16xf32>
    %c0_76 = arith.constant 0 : index
    %c387 = arith.constant 387 : index
    %172 = vector.load %arg8[%c0_76, %c387] : memref<8x580xf32, #tpu.memory_space<vmem>>, vector<4x16xf32>
    tpu.vector_store %arg8[%c0_76, %c387], %171 {strides = array<i32>} : memref<8x580xf32, #tpu.memory_space<vmem>>, vector<4x16xf32>,
    %173 = vector.extract_strided_slice %3 {offsets = [40, 0], sizes = [4, 16], strides = [1, 1]} : vector<64x16xf32> to vector<4x16xf32>
    %cst_77 = arith.constant 2.500000e-01 : f32
    %174 = vector.broadcast %cst_77 : f32 to vector<4x16xf32>
    %175 = arith.mulf %174, %173 : vector<4x16xf32>
    %176 = vector.extract_strided_slice %3 {offsets = [44, 0], sizes = [4, 16], strides = [1, 1]} : vector<64x16xf32> to vector<4x16xf32>
    %cst_78 = arith.constant 7.500000e-01 : f32
    %177 = vector.broadcast %cst_78 : f32 to vector<4x16xf32>
    %178 = arith.mulf %177, %176 : vector<4x16xf32>
    %179 = arith.addf %175, %178 : vector<4x16xf32>
    %c0_79 = arith.constant 0 : index
    %c403 = arith.constant 403 : index
    %180 = vector.load %arg8[%c0_79, %c403] : memref<8x580xf32, #tpu.memory_space<vmem>>, vector<4x16xf32>
    tpu.vector_store %arg8[%c0_79, %c403], %179 {strides = array<i32>} : memref<8x580xf32, #tpu.memory_space<vmem>>, vector<4x16xf32>,
    %181 = vector.extract_strided_slice %3 {offsets = [44, 0], sizes = [4, 16], strides = [1, 1]} : vector<64x16xf32> to vector<4x16xf32>
    %cst_80 = arith.constant 7.500000e-01 : f32
    %182 = vector.broadcast %cst_80 : f32 to vector<4x16xf32>
    %183 = arith.mulf %182, %181 : vector<4x16xf32>
    %184 = vector.extract_strided_slice %3 {offsets = [48, 0], sizes = [4, 16], strides = [1, 1]} : vector<64x16xf32> to vector<4x16xf32>
    %cst_81 = arith.constant 2.500000e-01 : f32
    %185 = vector.broadcast %cst_81 : f32 to vector<4x16xf32>
    %186 = arith.mulf %185, %184 : vector<4x16xf32>
    %187 = arith.addf %183, %186 : vector<4x16xf32>
    %c0_82 = arith.constant 0 : index
    %c419 = arith.constant 419 : index
    %188 = vector.load %arg8[%c0_82, %c419] : memref<8x580xf32, #tpu.memory_space<vmem>>, vector<4x16xf32>
    tpu.vector_store %arg8[%c0_82, %c419], %187 {strides = array<i32>} : memref<8x580xf32, #tpu.memory_space<vmem>>, vector<4x16xf32>,
    %189 = vector.extract_strided_slice %3 {offsets = [44, 0], sizes = [4, 16], strides = [1, 1]} : vector<64x16xf32> to vector<4x16xf32>
    %cst_83 = arith.constant 2.500000e-01 : f32
    %190 = vector.broadcast %cst_83 : f32 to vector<4x16xf32>
    %191 = arith.mulf %190, %189 : vector<4x16xf32>
    %192 = vector.extract_strided_slice %3 {offsets = [48, 0], sizes = [4, 16], strides = [1, 1]} : vector<64x16xf32> to vector<4x16xf32>
    %cst_84 = arith.constant 7.500000e-01 : f32
    %193 = vector.broadcast %cst_84 : f32 to vector<4x16xf32>
    %194 = arith.mulf %193, %192 : vector<4x16xf32>
    %195 = arith.addf %191, %194 : vector<4x16xf32>
    %c0_85 = arith.constant 0 : index
    %c435 = arith.constant 435 : index
    %196 = vector.load %arg8[%c0_85, %c435] : memref<8x580xf32, #tpu.memory_space<vmem>>, vector<4x16xf32>
    tpu.vector_store %arg8[%c0_85, %c435], %195 {strides = array<i32>} : memref<8x580xf32, #tpu.memory_space<vmem>>, vector<4x16xf32>,
    %197 = vector.extract_strided_slice %3 {offsets = [48, 0], sizes = [4, 16], strides = [1, 1]} : vector<64x16xf32> to vector<4x16xf32>
    %cst_86 = arith.constant 7.500000e-01 : f32
    %198 = vector.broadcast %cst_86 : f32 to vector<4x16xf32>
    %199 = arith.mulf %198, %197 : vector<4x16xf32>
    %200 = vector.extract_strided_slice %3 {offsets = [52, 0], sizes = [4, 16], strides = [1, 1]} : vector<64x16xf32> to vector<4x16xf32>
    %cst_87 = arith.constant 2.500000e-01 : f32
    %201 = vector.broadcast %cst_87 : f32 to vector<4x16xf32>
    %202 = arith.mulf %201, %200 : vector<4x16xf32>
    %203 = arith.addf %199, %202 : vector<4x16xf32>
    %c0_88 = arith.constant 0 : index
    %c451 = arith.constant 451 : index
    %204 = vector.load %arg8[%c0_88, %c451] : memref<8x580xf32, #tpu.memory_space<vmem>>, vector<4x16xf32>
    tpu.vector_store %arg8[%c0_88, %c451], %203 {strides = array<i32>} : memref<8x580xf32, #tpu.memory_space<vmem>>, vector<4x16xf32>,
    %205 = vector.extract_strided_slice %3 {offsets = [48, 0], sizes = [4, 16], strides = [1, 1]} : vector<64x16xf32> to vector<4x16xf32>
    %cst_89 = arith.constant 2.500000e-01 : f32
    %206 = vector.broadcast %cst_89 : f32 to vector<4x16xf32>
    %207 = arith.mulf %206, %205 : vector<4x16xf32>
    %208 = vector.extract_strided_slice %3 {offsets = [52, 0], sizes = [4, 16], strides = [1, 1]} : vector<64x16xf32> to vector<4x16xf32>
    %cst_90 = arith.constant 7.500000e-01 : f32
    %209 = vector.broadcast %cst_90 : f32 to vector<4x16xf32>
    %210 = arith.mulf %209, %208 : vector<4x16xf32>
    %211 = arith.addf %207, %210 : vector<4x16xf32>
    %c0_91 = arith.constant 0 : index
    %c467 = arith.constant 467 : index
    %212 = vector.load %arg8[%c0_91, %c467] : memref<8x580xf32, #tpu.memory_space<vmem>>, vector<4x16xf32>
    tpu.vector_store %arg8[%c0_91, %c467], %211 {strides = array<i32>} : memref<8x580xf32, #tpu.memory_space<vmem>>, vector<4x16xf32>,
    %213 = vector.extract_strided_slice %3 {offsets = [52, 0], sizes = [4, 16], strides = [1, 1]} : vector<64x16xf32> to vector<4x16xf32>
    %cst_92 = arith.constant 7.500000e-01 : f32
    %214 = vector.broadcast %cst_92 : f32 to vector<4x16xf32>
    %215 = arith.mulf %214, %213 : vector<4x16xf32>
    %216 = vector.extract_strided_slice %3 {offsets = [56, 0], sizes = [4, 16], strides = [1, 1]} : vector<64x16xf32> to vector<4x16xf32>
    %cst_93 = arith.constant 2.500000e-01 : f32
    %217 = vector.broadcast %cst_93 : f32 to vector<4x16xf32>
    %218 = arith.mulf %217, %216 : vector<4x16xf32>
    %219 = arith.addf %215, %218 : vector<4x16xf32>
    %c0_94 = arith.constant 0 : index
    %c483 = arith.constant 483 : index
    %220 = vector.load %arg8[%c0_94, %c483] : memref<8x580xf32, #tpu.memory_space<vmem>>, vector<4x16xf32>
    tpu.vector_store %arg8[%c0_94, %c483], %219 {strides = array<i32>} : memref<8x580xf32, #tpu.memory_space<vmem>>, vector<4x16xf32>,
    %221 = vector.extract_strided_slice %3 {offsets = [52, 0], sizes = [4, 16], strides = [1, 1]} : vector<64x16xf32> to vector<4x16xf32>
    %cst_95 = arith.constant 2.500000e-01 : f32
    %222 = vector.broadcast %cst_95 : f32 to vector<4x16xf32>
    %223 = arith.mulf %222, %221 : vector<4x16xf32>
    %224 = vector.extract_strided_slice %3 {offsets = [56, 0], sizes = [4, 16], strides = [1, 1]} : vector<64x16xf32> to vector<4x16xf32>
    %cst_96 = arith.constant 7.500000e-01 : f32
    %225 = vector.broadcast %cst_96 : f32 to vector<4x16xf32>
    %226 = arith.mulf %225, %224 : vector<4x16xf32>
    %227 = arith.addf %223, %226 : vector<4x16xf32>
    %c0_97 = arith.constant 0 : index
    %c499 = arith.constant 499 : index
    %228 = vector.load %arg8[%c0_97, %c499] : memref<8x580xf32, #tpu.memory_space<vmem>>, vector<4x16xf32>
    tpu.vector_store %arg8[%c0_97, %c499], %227 {strides = array<i32>} : memref<8x580xf32, #tpu.memory_space<vmem>>, vector<4x16xf32>,
    %229 = vector.extract_strided_slice %3 {offsets = [56, 0], sizes = [4, 16], strides = [1, 1]} : vector<64x16xf32> to vector<4x16xf32>
    %cst_98 = arith.constant 7.500000e-01 : f32
    %230 = vector.broadcast %cst_98 : f32 to vector<4x16xf32>
    %231 = arith.mulf %230, %229 : vector<4x16xf32>
    %232 = vector.extract_strided_slice %3 {offsets = [60, 0], sizes = [4, 16], strides = [1, 1]} : vector<64x16xf32> to vector<4x16xf32>
    %cst_99 = arith.constant 2.500000e-01 : f32
    %233 = vector.broadcast %cst_99 : f32 to vector<4x16xf32>
    %234 = arith.mulf %233, %232 : vector<4x16xf32>
    %235 = arith.addf %231, %234 : vector<4x16xf32>
    %c0_100 = arith.constant 0 : index
    %c515 = arith.constant 515 : index
    %236 = vector.load %arg8[%c0_100, %c515] : memref<8x580xf32, #tpu.memory_space<vmem>>, vector<4x16xf32>
    tpu.vector_store %arg8[%c0_100, %c515], %235 {strides = array<i32>} : memref<8x580xf32, #tpu.memory_space<vmem>>, vector<4x16xf32>,
    %237 = vector.extract_strided_slice %3 {offsets = [56, 0], sizes = [4, 16], strides = [1, 1]} : vector<64x16xf32> to vector<4x16xf32>
    %cst_101 = arith.constant 2.500000e-01 : f32
    %238 = vector.broadcast %cst_101 : f32 to vector<4x16xf32>
    %239 = arith.mulf %238, %237 : vector<4x16xf32>
    %240 = vector.extract_strided_slice %3 {offsets = [60, 0], sizes = [4, 16], strides = [1, 1]} : vector<64x16xf32> to vector<4x16xf32>
    %cst_102 = arith.constant 7.500000e-01 : f32
    %241 = vector.broadcast %cst_102 : f32 to vector<4x16xf32>
    %242 = arith.mulf %241, %240 : vector<4x16xf32>
    %243 = arith.addf %239, %242 : vector<4x16xf32>
    %c0_103 = arith.constant 0 : index
    %c531 = arith.constant 531 : index
    %244 = vector.load %arg8[%c0_103, %c531] : memref<8x580xf32, #tpu.memory_space<vmem>>, vector<4x16xf32>
    tpu.vector_store %arg8[%c0_103, %c531], %243 {strides = array<i32>} : memref<8x580xf32, #tpu.memory_space<vmem>>, vector<4x16xf32>,
    %245 = vector.extract_strided_slice %3 {offsets = [60, 0], sizes = [4, 16], strides = [1, 1]} : vector<64x16xf32> to vector<4x16xf32>
    %c0_104 = arith.constant 0 : index
    %c547 = arith.constant 547 : index
    %246 = vector.load %arg8[%c0_104, %c547] : memref<8x580xf32, #tpu.memory_space<vmem>>, vector<4x16xf32>
    tpu.vector_store %arg8[%c0_104, %c547], %245 {strides = array<i32>} : memref<8x580xf32, #tpu.memory_space<vmem>>, vector<4x16xf32>,
    %c1 = arith.constant 1 : index
    %c0_105 = arith.constant 0 : index
    %c0_106 = arith.constant 0 : index
    %247 = vector.load %arg2[%c1, %c0_105, %c0_106] : memref<2x4x256xf32, #tpu.memory_space<vmem>>, vector<1x4x256xf32>
    %248 = vector.shape_cast %247 : vector<1x4x256xf32> to vector<4x256xf32>
    %c4_107 = arith.constant 4 : index
    %c307_108 = arith.constant 307 : index
    %249 = vector.load %arg8[%c4_107, %c307_108] : memref<8x580xf32, #tpu.memory_space<vmem>>, vector<4x256xf32>
    tpu.vector_store %arg8[%c4_107, %c307_108], %248 {strides = array<i32>} : memref<8x580xf32, #tpu.memory_space<vmem>>, vector<4x256xf32>,
    %c0_109 = arith.constant 0 : index
    %c0_110 = arith.constant 0 : index
    %250 = vector.load %arg8[%c0_109, %c0_110] : memref<8x580xf32, #tpu.memory_space<vmem>>, vector<8x546xf32>
    %c0_111 = arith.constant 0 : index
    %c0_112 = arith.constant 0 : index
    %251 = vector.load %arg6[%c0_111, %c0_112] : memref<3x546xf32, #tpu.memory_space<vmem>>, vector<1x546xf32>
    %252 = vector.broadcast %251 : vector<1x546xf32> to vector<8x546xf32>
    %253 = arith.mulf %250, %252 : vector<8x546xf32>
    %c0_113 = arith.constant 0 : index
    %c0_114 = arith.constant 0 : index
    %c0_115 = arith.constant 0 : index
    %254 = vector.load %arg4[%c0_113, %c0_114, %c0_115] : memref<9x4x8xf32, #tpu.memory_space<vmem>>, vector<1x4x8xf32>
    %255 = vector.shape_cast %254 : vector<1x4x8xf32> to vector<4x8xf32>
    %cst_116 = arith.constant dense<0.000000e+00> : vector<4x546xf32>
    %256 = tpu.matmul %255, %253, %cst_116 {dimension_numbers = #tpu.dot_dimension_numbers<[1], [0], [0], [1], [0, 0, 1, 1], [], []>} : vector<4x8xf32>, vector<8x546xf32>, vector<4x546xf32> -> vector<4x546xf32>
    %c0_117 = arith.constant 0 : index
    %c1_118 = arith.constant 1 : index
    %257 = vector.load %arg8[%c0_117, %c1_118] : memref<8x580xf32, #tpu.memory_space<vmem>>, vector<8x546xf32>
    %c1_119 = arith.constant 1 : index
    %c0_120 = arith.constant 0 : index
    %c0_121 = arith.constant 0 : index
    %258 = vector.load %arg4[%c1_119, %c0_120, %c0_121] : memref<9x4x8xf32, #tpu.memory_space<vmem>>, vector<1x4x8xf32>
    %259 = vector.shape_cast %258 : vector<1x4x8xf32> to vector<4x8xf32>
    %cst_122 = arith.constant dense<0.000000e+00> : vector<4x546xf32>
    %260 = tpu.matmul %259, %257, %cst_122 {dimension_numbers = #tpu.dot_dimension_numbers<[1], [0], [0], [1], [0, 0, 1, 1], [], []>} : vector<4x8xf32>, vector<8x546xf32>, vector<4x546xf32> -> vector<4x546xf32>
    %261 = arith.addf %256, %260 : vector<4x546xf32>
    %c0_123 = arith.constant 0 : index
    %c2 = arith.constant 2 : index
    %262 = vector.load %arg8[%c0_123, %c2] : memref<8x580xf32, #tpu.memory_space<vmem>>, vector<8x546xf32>
    %c2_124 = arith.constant 2 : index
    %c0_125 = arith.constant 0 : index
    %263 = vector.load %arg6[%c2_124, %c0_125] : memref<3x546xf32, #tpu.memory_space<vmem>>, vector<1x546xf32>
    %264 = vector.broadcast %263 : vector<1x546xf32> to vector<8x546xf32>
    %265 = arith.mulf %262, %264 : vector<8x546xf32>
    %c2_126 = arith.constant 2 : index
    %c0_127 = arith.constant 0 : index
    %c0_128 = arith.constant 0 : index
    %266 = vector.load %arg4[%c2_126, %c0_127, %c0_128] : memref<9x4x8xf32, #tpu.memory_space<vmem>>, vector<1x4x8xf32>
    %267 = vector.shape_cast %266 : vector<1x4x8xf32> to vector<4x8xf32>
    %cst_129 = arith.constant dense<0.000000e+00> : vector<4x546xf32>
    %268 = tpu.matmul %267, %265, %cst_129 {dimension_numbers = #tpu.dot_dimension_numbers<[1], [0], [0], [1], [0, 0, 1, 1], [], []>} : vector<4x8xf32>, vector<8x546xf32>, vector<4x546xf32> -> vector<4x546xf32>
    %269 = arith.addf %261, %268 : vector<4x546xf32>
    %c0_130 = arith.constant 0 : index
    %c16 = arith.constant 16 : index
    %270 = vector.load %arg8[%c0_130, %c16] : memref<8x580xf32, #tpu.memory_space<vmem>>, vector<8x546xf32>
    %c0_131 = arith.constant 0 : index
    %c0_132 = arith.constant 0 : index
    %271 = vector.load %arg6[%c0_131, %c0_132] : memref<3x546xf32, #tpu.memory_space<vmem>>, vector<1x546xf32>
    %272 = vector.broadcast %271 : vector<1x546xf32> to vector<8x546xf32>
    %273 = arith.mulf %270, %272 : vector<8x546xf32>
    %c3 = arith.constant 3 : index
    %c0_133 = arith.constant 0 : index
    %c0_134 = arith.constant 0 : index
    %274 = vector.load %arg4[%c3, %c0_133, %c0_134] : memref<9x4x8xf32, #tpu.memory_space<vmem>>, vector<1x4x8xf32>
    %275 = vector.shape_cast %274 : vector<1x4x8xf32> to vector<4x8xf32>
    %cst_135 = arith.constant dense<0.000000e+00> : vector<4x546xf32>
    %276 = tpu.matmul %275, %273, %cst_135 {dimension_numbers = #tpu.dot_dimension_numbers<[1], [0], [0], [1], [0, 0, 1, 1], [], []>} : vector<4x8xf32>, vector<8x546xf32>, vector<4x546xf32> -> vector<4x546xf32>
    %277 = arith.addf %269, %276 : vector<4x546xf32>
    %c0_136 = arith.constant 0 : index
    %c17_137 = arith.constant 17 : index
    %278 = vector.load %arg8[%c0_136, %c17_137] : memref<8x580xf32, #tpu.memory_space<vmem>>, vector<8x546xf32>
    %c4_138 = arith.constant 4 : index
    %c0_139 = arith.constant 0 : index
    %c0_140 = arith.constant 0 : index
    %279 = vector.load %arg4[%c4_138, %c0_139, %c0_140] : memref<9x4x8xf32, #tpu.memory_space<vmem>>, vector<1x4x8xf32>
    %280 = vector.shape_cast %279 : vector<1x4x8xf32> to vector<4x8xf32>
    %cst_141 = arith.constant dense<0.000000e+00> : vector<4x546xf32>
    %281 = tpu.matmul %280, %278, %cst_141 {dimension_numbers = #tpu.dot_dimension_numbers<[1], [0], [0], [1], [0, 0, 1, 1], [], []>} : vector<4x8xf32>, vector<8x546xf32>, vector<4x546xf32> -> vector<4x546xf32>
    %282 = arith.addf %277, %281 : vector<4x546xf32>
    %c0_142 = arith.constant 0 : index
    %c18 = arith.constant 18 : index
    %283 = vector.load %arg8[%c0_142, %c18] : memref<8x580xf32, #tpu.memory_space<vmem>>, vector<8x546xf32>
    %c2_143 = arith.constant 2 : index
    %c0_144 = arith.constant 0 : index
    %284 = vector.load %arg6[%c2_143, %c0_144] : memref<3x546xf32, #tpu.memory_space<vmem>>, vector<1x546xf32>
    %285 = vector.broadcast %284 : vector<1x546xf32> to vector<8x546xf32>
    %286 = arith.mulf %283, %285 : vector<8x546xf32>
    %c5 = arith.constant 5 : index
    %c0_145 = arith.constant 0 : index
    %c0_146 = arith.constant 0 : index
    %287 = vector.load %arg4[%c5, %c0_145, %c0_146] : memref<9x4x8xf32, #tpu.memory_space<vmem>>, vector<1x4x8xf32>
    %288 = vector.shape_cast %287 : vector<1x4x8xf32> to vector<4x8xf32>
    %cst_147 = arith.constant dense<0.000000e+00> : vector<4x546xf32>
    %289 = tpu.matmul %288, %286, %cst_147 {dimension_numbers = #tpu.dot_dimension_numbers<[1], [0], [0], [1], [0, 0, 1, 1], [], []>} : vector<4x8xf32>, vector<8x546xf32>, vector<4x546xf32> -> vector<4x546xf32>
    %290 = arith.addf %282, %289 : vector<4x546xf32>
    %c0_148 = arith.constant 0 : index
    %c32 = arith.constant 32 : index
    %291 = vector.load %arg8[%c0_148, %c32] : memref<8x580xf32, #tpu.memory_space<vmem>>, vector<8x546xf32>
    %c0_149 = arith.constant 0 : index
    %c0_150 = arith.constant 0 : index
    %292 = vector.load %arg6[%c0_149, %c0_150] : memref<3x546xf32, #tpu.memory_space<vmem>>, vector<1x546xf32>
    %293 = vector.broadcast %292 : vector<1x546xf32> to vector<8x546xf32>
    %294 = arith.mulf %291, %293 : vector<8x546xf32>
    %c6 = arith.constant 6 : index
    %c0_151 = arith.constant 0 : index
    %c0_152 = arith.constant 0 : index
    %295 = vector.load %arg4[%c6, %c0_151, %c0_152] : memref<9x4x8xf32, #tpu.memory_space<vmem>>, vector<1x4x8xf32>
    %296 = vector.shape_cast %295 : vector<1x4x8xf32> to vector<4x8xf32>
    %cst_153 = arith.constant dense<0.000000e+00> : vector<4x546xf32>
    %297 = tpu.matmul %296, %294, %cst_153 {dimension_numbers = #tpu.dot_dimension_numbers<[1], [0], [0], [1], [0, 0, 1, 1], [], []>} : vector<4x8xf32>, vector<8x546xf32>, vector<4x546xf32> -> vector<4x546xf32>
    %298 = arith.addf %290, %297 : vector<4x546xf32>
    %c0_154 = arith.constant 0 : index
    %c33_155 = arith.constant 33 : index
    %299 = vector.load %arg8[%c0_154, %c33_155] : memref<8x580xf32, #tpu.memory_space<vmem>>, vector<8x546xf32>
    %c7 = arith.constant 7 : index
    %c0_156 = arith.constant 0 : index
    %c0_157 = arith.constant 0 : index
    %300 = vector.load %arg4[%c7, %c0_156, %c0_157] : memref<9x4x8xf32, #tpu.memory_space<vmem>>, vector<1x4x8xf32>
    %301 = vector.shape_cast %300 : vector<1x4x8xf32> to vector<4x8xf32>
    %cst_158 = arith.constant dense<0.000000e+00> : vector<4x546xf32>
    %302 = tpu.matmul %301, %299, %cst_158 {dimension_numbers = #tpu.dot_dimension_numbers<[1], [0], [0], [1], [0, 0, 1, 1], [], []>} : vector<4x8xf32>, vector<8x546xf32>, vector<4x546xf32> -> vector<4x546xf32>
    %303 = arith.addf %298, %302 : vector<4x546xf32>
    %c0_159 = arith.constant 0 : index
    %c34 = arith.constant 34 : index
    %304 = vector.load %arg8[%c0_159, %c34] : memref<8x580xf32, #tpu.memory_space<vmem>>, vector<8x546xf32>
    %c2_160 = arith.constant 2 : index
    %c0_161 = arith.constant 0 : index
    %305 = vector.load %arg6[%c2_160, %c0_161] : memref<3x546xf32, #tpu.memory_space<vmem>>, vector<1x546xf32>
    %306 = vector.broadcast %305 : vector<1x546xf32> to vector<8x546xf32>
    %307 = arith.mulf %304, %306 : vector<8x546xf32>
    %c8 = arith.constant 8 : index
    %c0_162 = arith.constant 0 : index
    %c0_163 = arith.constant 0 : index
    %308 = vector.load %arg4[%c8, %c0_162, %c0_163] : memref<9x4x8xf32, #tpu.memory_space<vmem>>, vector<1x4x8xf32>
    %309 = vector.shape_cast %308 : vector<1x4x8xf32> to vector<4x8xf32>
    %cst_164 = arith.constant dense<0.000000e+00> : vector<4x546xf32>
    %310 = tpu.matmul %309, %307, %cst_164 {dimension_numbers = #tpu.dot_dimension_numbers<[1], [0], [0], [1], [0, 0, 1, 1], [], []>} : vector<4x8xf32>, vector<8x546xf32>, vector<4x546xf32> -> vector<4x546xf32>
    %311 = arith.addf %303, %310 : vector<4x546xf32>
    %312 = vector.extract_strided_slice %311 {offsets = [0, 0], sizes = [4, 256], strides = [1, 1]} : vector<4x546xf32> to vector<4x256xf32>
    %c0_165 = arith.constant 0 : index
    %c0_166 = arith.constant 0 : index
    %313 = vector.load %arg5[%c0_165, %c0_166] : memref<4x1xf32, #tpu.memory_space<vmem>>, vector<4x1xf32>
    %314 = vector.broadcast %313 : vector<4x1xf32> to vector<4x256xf32>
    %315 = arith.addf %312, %314 : vector<4x256xf32>
    %cst_167 = arith.constant 0.000000e+00 : f32
    %316 = vector.broadcast %cst_167 : f32 to vector<4x256xf32>
    %317 = arith.maximumf %315, %316 : vector<4x256xf32>
    %c0_168 = arith.constant 0 : index
    %c0_169 = arith.constant 0 : index
    %c0_170 = arith.constant 0 : index
    %318 = vector.load %arg7[%c0_168, %c0_169, %c0_170] : memref<2x4x256xf32, #tpu.memory_space<vmem>>, vector<1x4x256xf32>
    %319 = vector.shape_cast %318 : vector<1x4x256xf32> to vector<4x256xf32>
    %320 = vector.shape_cast %317 : vector<4x256xf32> to vector<1x4x256xf32>
    tpu.vector_store %arg7[%c0_168, %c0_169, %c0_170], %320 {strides = array<i32>} : memref<2x4x256xf32, #tpu.memory_space<vmem>>, vector<1x4x256xf32>,
    %321 = vector.extract_strided_slice %311 {offsets = [0, 290], sizes = [4, 256], strides = [1, 1]} : vector<4x546xf32> to vector<4x256xf32>
    %c0_171 = arith.constant 0 : index
    %c0_172 = arith.constant 0 : index
    %322 = vector.load %arg5[%c0_171, %c0_172] : memref<4x1xf32, #tpu.memory_space<vmem>>, vector<4x1xf32>
    %323 = vector.broadcast %322 : vector<4x1xf32> to vector<4x256xf32>
    %324 = arith.addf %321, %323 : vector<4x256xf32>
    %cst_173 = arith.constant 0.000000e+00 : f32
    %325 = vector.broadcast %cst_173 : f32 to vector<4x256xf32>
    %326 = arith.maximumf %324, %325 : vector<4x256xf32>
    %c1_174 = arith.constant 1 : index
    %c0_175 = arith.constant 0 : index
    %c0_176 = arith.constant 0 : index
    %327 = vector.load %arg7[%c1_174, %c0_175, %c0_176] : memref<2x4x256xf32, #tpu.memory_space<vmem>>, vector<1x4x256xf32>
    %328 = vector.shape_cast %327 : vector<1x4x256xf32> to vector<4x256xf32>
    %329 = vector.shape_cast %326 : vector<4x256xf32> to vector<1x4x256xf32>
    tpu.vector_store %arg7[%c1_174, %c0_175, %c0_176], %329 {strides = array<i32>} : memref<2x4x256xf32, #tpu.memory_space<vmem>>, vector<1x4x256xf32>,
    return
  }
  func.func @transform_0(%arg0: i32) -> (i32, i32, i32) {
    %c0_i32 = arith.constant 0 : i32
    %c0_i32_0 = arith.constant 0 : i32
    %c0_i32_1 = arith.constant 0 : i32
    return %arg0, %c0_i32, %c0_i32_0 : i32, i32, i32
  }
  func.func @transform_1(%arg0: i32) -> (i32, i32, i32) {
    %c0_i32 = arith.constant 0 : i32
    %c0_i32_0 = arith.constant 0 : i32
    %c0_i32_1 = arith.constant 0 : i32
    return %arg0, %c0_i32, %c0_i32_0 : i32, i32, i32
  }
  func.func @transform_2(%arg0: i32) -> (i32, i32) {
    %c0_i32 = arith.constant 0 : i32
    %c0_i32_0 = arith.constant 0 : i32
    %c0_i32_1 = arith.constant 0 : i32
    return %c0_i32, %c0_i32_0 : i32, i32
  }
  func.func @transform_3(%arg0: i32) -> (i32, i32, i32) {
    %c0_i32 = arith.constant 0 : i32
    %c0_i32_0 = arith.constant 0 : i32
    %c0_i32_1 = arith.constant 0 : i32
    %c0_i32_2 = arith.constant 0 : i32
    return %c0_i32, %c0_i32_0, %c0_i32_1 : i32, i32, i32
  }
  func.func @transform_4(%arg0: i32) -> (i32, i32) {
    %c0_i32 = arith.constant 0 : i32
    %c0_i32_0 = arith.constant 0 : i32
    %c0_i32_1 = arith.constant 0 : i32
    return %c0_i32, %c0_i32_0 : i32, i32
  }
  func.func @transform_5(%arg0: i32) -> (i32, i32) {
    %c0_i32 = arith.constant 0 : i32
    %c0_i32_0 = arith.constant 0 : i32
    %c0_i32_1 = arith.constant 0 : i32
    return %c0_i32, %c0_i32_0 : i32, i32
  }
  func.func @transform_6(%arg0: i32) -> (i32, i32, i32) {
    %c0_i32 = arith.constant 0 : i32
    %c0_i32_0 = arith.constant 0 : i32
    %c0_i32_1 = arith.constant 0 : i32
    return %arg0, %c0_i32, %c0_i32_0 : i32, i32, i32
  }
}

</mosaic_0001>

<llo_original>
// kernel: tpu_custom_call.1
$region0: #{tpu_custom_call.1}
  #allocation0 [shape = 'u32[]', space=smem, size = 0x4, offset = 0x4, fixed_abs, tag = 'smem constant byte address 0x4 - core index']
  #allocation1 [shape = 'u32[144,128]{1,0:T(1,128)}', space=vmem, size = 0x12000, scoped, tag = 'internal scratch']
  #allocation2 [shape = 'f32[8,580]{1,0:T(8,128)}', space=vmem, size = 0x5000, scoped, tag = 'scratch operand']
  %s0 = inlined_call_operand.vmem [shape: f32[1,64,8], index: 0, kind: input, shape index: {}]
  %s1 = inlined_call_operand.vmem [shape: f32[2,4,256], index: 1, kind: input, shape index: {}]
  %s2 = inlined_call_operand.vmem [shape: f32[8,16], index: 2, kind: input, shape index: {}]
  %s3 = inlined_call_operand.vmem [shape: f32[9,4,8], index: 3, kind: input, shape index: {}]
  %s4 = inlined_call_operand.vmem [shape: f32[4,1], index: 4, kind: input, shape index: {}]
  %s5 = inlined_call_operand.vmem [shape: f32[3,546], index: 5, kind: input, shape index: {}]
  %s6 = inlined_call_operand.hbm [shape: f32[2,4,256], index: 6, kind: output, shape index: {}]
  %s7 = sld [smem:[#allocation0]]
  $region34: #{tpu_custom_call.1} parent=0
    _
  %s9 = ssub.s32 1, %s7
  %s10 = scalar_select 0, %s9, %s7
  $region1: #{tpu_custom_call.1} parent=0
    #allocation3 [shape = 'u8[8192]{0}', space=vmem, size = 0x2000, scoped, tag = 'output window, operand 0, single buffered']
    #allocation4 [shape = 's32[1]{0}', space=sflag, size = 0x4, scoped, tag = 'scoped memory for tpu_custom_call.1']
    %11 = vsyncpa [#allocation4], 0
    // Predicated region
    $region2: #{tpu_custom_call.1} parent=1 // pred_check
      _
    $region3: #{tpu_custom_call.1} parent=1 // pred_check_branch
      %13 = sbr.rel (0) target = $region5
    $region4: #{tpu_custom_call.1} parent=1 // pred_region
      _
    $region5: #{tpu_custom_call.1} parent=1 // pred_fallthru
      _
    // Predicated region
    $region6: #{tpu_custom_call.1} parent=1 // pred_check
      _
    $region7: #{tpu_custom_call.1} parent=1 // pred_check_branch
      %15 = sbr.rel (0) target = $region9
    $region8: #{tpu_custom_call.1} parent=1 // pred_region
      _
    $region9: #{tpu_custom_call.1} parent=1 // pred_fallthru
      _
    // Predicated region
    $region10: #{tpu_custom_call.1} parent=1 // pred_check
      _
    $region11: #{tpu_custom_call.1} parent=1 // pred_check_branch
      %17 = sbr.rel (0) target = $region13
    $region12: #{tpu_custom_call.1} parent=1 // pred_region
      _
    $region13: #{tpu_custom_call.1} parent=1 // pred_fallthru
      _
    // Predicated region
    $region14: #{tpu_custom_call.1} parent=1 // pred_check
      _
    $region15: #{tpu_custom_call.1} parent=1 // pred_check_branch
      %19 = sbr.rel (0) target = $region17
    $region16: #{tpu_custom_call.1} parent=1 // pred_region
      _
    $region17: #{tpu_custom_call.1} parent=1 // pred_fallthru
      _
    // Predicated region
    $region18: #{tpu_custom_call.1} parent=1 // pred_check
      _
    $region19: #{tpu_custom_call.1} parent=1 // pred_check_branch
      %21 = sbr.rel (0) target = $region21
    $region20: #{tpu_custom_call.1} parent=1 // pred_region
      _
    $region21: #{tpu_custom_call.1} parent=1 // pred_fallthru
      _
    // Predicated region
    $region22: #{tpu_custom_call.1} parent=1 // pred_check
      _
    $region23: #{tpu_custom_call.1} parent=1 // pred_check_branch
      %23 = sbr.rel (0) target = $region25
    $region24: #{tpu_custom_call.1} parent=1 // pred_region
      _
    $region25: #{tpu_custom_call.1} parent=1 // pred_fallthru
      _
    %v24 = vld [vmem:[%s0] sm:$0xff]
    %v25 = vld [vmem:[%s0 + $0x8] sm:$0xff]
    %v26 = vld [vmem:[%s0 + $0x10] sm:$0xff]
    %v27 = vld [vmem:[%s0 + $0x18] sm:$0xff]
    %v28 = vld [vmem:[%s0 + $0x20] sm:$0xff]
    %v29 = vld [vmem:[%s0 + $0x28] sm:$0xff]
    %v30 = vld [vmem:[%s0 + $0x30] sm:$0xff]
    %v31 = vld [vmem:[%s0 + $0x38] sm:$0xff]
    %v32 = vld [vmem:[%s2] sm:$0xff]
    %vm33 = vcmask 64512
    %v35 = vsel %vm33, %v24, 0
    %v38 = vsel %vm33, %v25, 0
    %v41 = vsel %vm33, %v26, 0
    %v44 = vsel %vm33, %v27, 0
    %v47 = vsel %vm33, %v28, 0
    %v50 = vsel %vm33, %v29, 0
    %v53 = vsel %vm33, %v30, 0
    %v56 = vsel %vm33, %v31, 0
    %58 = vmatprep.subr.mxu0 0.0
    %59 = vmatpush1.msra.mxu0 %v32
    %60 = vmatprep.subr.mxu0 0.0
    %61 = vmatpush1.msra.mxu0 0.0
    %62 = vmatprep.subr.mxu0 0.0
    %63 = vmatpush1.msra.mxu0 0.0
    %64 = vmatprep.subr.mxu0 0.0
    %65 = vmatpush1.msra.mxu0 0.0
    %66 = vmatprep.subr.mxu0 0.0
    %67 = vmatpush1.msra.mxu0 0.0
    %68 = vmatprep.subr.mxu0 0.0
    %69 = vmatpush1.msra.mxu0 0.0
    %70 = vmatprep.subr.mxu0 0.0
    %71 = vmatpush1.msra.mxu0 0.0
    %72 = vmatprep.subr.mxu0 0.0
    %73 = vmatpush1.msra.mxu0 0.0
    %74 = vmatprep.subr.mxu0 0.0
    %75 = vmatpush1.msra.mxu0 0.0
    %76 = vmatprep.subr.mxu0 0.0
    %77 = vmatpush1.msra.mxu0 0.0
    %78 = vmatprep.subr.mxu0 0.0
    %79 = vmatpush1.msra.mxu0 0.0
    %80 = vmatprep.subr.mxu0 0.0
    %81 = vmatpush1.msra.mxu0 0.0
    %82 = vmatprep.subr.mxu0 0.0
    %83 = vmatpush1.msra.mxu0 0.0
    %84 = vmatprep.subr.mxu0 0.0
    %85 = vmatpush1.msra.mxu0 0.0
    %86 = vmatprep.subr.mxu0 0.0
    %87 = vmatpush1.msra.mxu0 0.0
    %88 = vmatprep.subr.mxu0 0.0
    %89 = vmatpush1.msra.mxu0 0.0
    %90 = vmatprep.subr.mxu0 0.0
    %91 = vmatpush1.msra.mxu0 0.0
    %92 = vmatprep.subr.mxu0 0.0
    %93 = vmatpush1.msra.mxu0 0.0
    %94 = vmatprep.subr.mxu0 0.0
    %95 = vmatpush1.msra.mxu0 0.0
    %96 = vmatprep.subr.mxu0 0.0
    %97 = vmatpush1.msra.mxu0 0.0
    %98 = vmatprep.subr.mxu0 0.0
    %99 = vmatpush1.msra.mxu0 0.0
    %100 = vmatprep.subr.mxu0 0.0
    %101 = vmatpush1.msra.mxu0 0.0
    %102 = vmatprep.subr.mxu0 0.0
    %103 = vmatpush1.msra.mxu0 0.0
    %104 = vmatprep.subr.mxu0 0.0
    %105 = vmatpush1.msra.mxu0 0.0
    %106 = vmatprep.subr.mxu0 0.0
    %107 = vmatpush1.msra.mxu0 0.0
    %108 = vmatprep.subr.mxu0 0.0
    %109 = vmatpush1.msra.mxu0 0.0
    %110 = vmatprep.subr.mxu0 0.0
    %111 = vmatpush1.msra.mxu0 0.0
    %112 = vmatprep.subr.mxu0 0.0
    %113 = vmatpush1.msra.mxu0 0.0
    %114 = vmatprep.subr.mxu0 0.0
    %115 = vmatpush1.msra.mxu0 0.0
    %116 = vmatprep.subr.mxu0 0.0
    %117 = vmatpush1.msra.mxu0 0.0
    %118 = vmatprep.subr.mxu0 0.0
    %119 = vmatpush1.msra.mxu0 0.0
    %120 = vmatprep.subr.mxu0 0.0
    %121 = vmatpush1.msra.mxu0 0.0
    %122 = vmatprep.mubr.f32.mxu0 0.0
    %123 = vmatmul.mubr.f32.gmra.mrb[0].mxu0 %v35
    %v124 = vpop.f32.mrb[0].mxu0
    %v125 = vadd.f32 0.0, %v124
    %v126 = vpop.f32.mrb[0].mxu0
    %127 = vmatprep.mubr.f32.mxu0 0.0
    %128 = vmatmul.mubr.f32.gmra.mrb[0].mxu0 %v38
    %v129 = vpop.f32.mrb[0].mxu0
    %v130 = vadd.f32 0.0, %v129
    %v131 = vpop.f32.mrb[0].mxu0
    %132 = vmatprep.mubr.f32.mxu0 0.0
    %133 = vmatmul.mubr.f32.gmra.mrb[0].mxu0 %v41
    %v134 = vpop.f32.mrb[0].mxu0
    %v135 = vadd.f32 0.0, %v134
    %v136 = vpop.f32.mrb[0].mxu0
    %137 = vmatprep.mubr.f32.mxu0 0.0
    %138 = vmatmul.mubr.f32.gmra.mrb[0].mxu0 %v44
    %v139 = vpop.f32.mrb[0].mxu0
    %v140 = vadd.f32 0.0, %v139
    %v141 = vpop.f32.mrb[0].mxu0
    %142 = vmatprep.mubr.f32.mxu0 0.0
    %143 = vmatmul.mubr.f32.gmra.mrb[0].mxu0 %v47
    %v144 = vpop.f32.mrb[0].mxu0
    %v145 = vadd.f32 0.0, %v144
    %v146 = vpop.f32.mrb[0].mxu0
    %147 = vmatprep.mubr.f32.mxu0 0.0
    %148 = vmatmul.mubr.f32.gmra.mrb[0].mxu0 %v50
    %v149 = vpop.f32.mrb[0].mxu0
    %v150 = vadd.f32 0.0, %v149
    %v151 = vpop.f32.mrb[0].mxu0
    %152 = vmatprep.mubr.f32.mxu0 0.0
    %153 = vmatmul.mubr.f32.gmra.mrb[0].mxu0 %v53
    %v154 = vpop.f32.mrb[0].mxu0
    %v155 = vadd.f32 0.0, %v154
    %v156 = vpop.f32.mrb[0].mxu0
    %157 = vmatprep.mubr.f32.mxu0 0.0
    %158 = vmatmul.mubr.f32.gmra.mrb[0].mxu0 %v56
    %v159 = vpop.f32.mrb[0].mxu0
    %v160 = vadd.f32 0.0, %v159
    %v161 = vpop.f32.mrb[0].mxu0
    %162 = vdwg.mxu0
    %vm163 = vcmask 138240
    %164 = vst.msk [vmem:[#allocation2] sm:$0xff] %vm163, 0.0
    %vm165 = vcmask 277640
    %166 = vst.msk [vmem:[#allocation2 + $0x10] sm:$0xff] %vm165, 0.0
    %168 = vrot.lane.b32.xlu0 %v125, 17
    %v169 = vpop.permute.xlu0 %168
    %vm171 = vcmask 265352
    %172 = vst.msk [vmem:[#allocation2] sm:$0xf] %vm171, %v169
    %v173 = vmul.f32 %v125, 0.75
    %v174 = vmul.f32 %v125, 0.25
    %v176 = vrot.slane %v174, 4
    %v178 = vadd.f32 %v173, %v176
    %180 = vrot.lane.b32.xlu0 %v178, 33
    %v181 = vpop.permute.xlu0 %180
    %vm183 = vcmask 396552
    %184 = vst.msk [vmem:[#allocation2] sm:$0xf] %vm183, %v181
    %v186 = vrot.slane %v173, 4
    %v188 = vadd.f32 %v174, %v186
    %190 = vrot.lane.b32.xlu0 %v188, 49
    %v191 = vpop.permute.xlu0 %190
    %vm193 = vcmask 527752
    %194 = vst.msk [vmem:[#allocation2] sm:$0xf] %vm193, %v191
    %v195 = vmul.f32 %v130, 0.25
    %v197 = vrot.slane %v195, 4
    %v199 = vadd.f32 %v173, %v197
    %v201 = vrot.slane %v199, 4
    %202 = vrot.lane.b32.xlu0 %v201, 65
    %v203 = vpop.permute.xlu0 %202
    %vm205 = vcmask 658952
    %206 = vst.msk [vmem:[#allocation2] sm:$0xf] %vm205, %v203
    %v207 = vmul.f32 %v130, 0.75
    %v209 = vrot.slane %v207, 4
    %v211 = vadd.f32 %v174, %v209
    %v213 = vrot.slane %v211, 4
    %214 = vrot.lane.b32.xlu0 %v213, 81
    %v215 = vpop.permute.xlu0 %214
    %vm217 = vcmask 790152
    %218 = vst.msk [vmem:[#allocation2] sm:$0xf] %vm217, %v215
    %v219 = vadd.f32 %v207, %v197
    %221 = vrot.lane.b32.xlu0 %v219, 97
    %v222 = vpop.permute.xlu0 %221
    %vm224 = vcmask 921352
    %225 = vst.msk [vmem:[#allocation2] sm:$0xf] %vm224, %v222
    %v226 = vadd.f32 %v195, %v209
    %228 = vrot.lane.b32.xlu0 %v226, 113
    %v229 = vpop.permute.xlu0 %228
    %vm231 = vcmask 1044360
    %232 = vst.msk [vmem:[#allocation2] sm:$0xf] %vm231, %v229
    %vm233 = vcmask 3072
    %234 = vst.msk [vmem:[#allocation2 + $0x8] sm:$0xf] %vm233, %v229
    %v235 = vmul.f32 %v135, 0.25
    %v237 = vrot.slane %v235, 4
    %v239 = vadd.f32 %v207, %v237
    %v241 = vrot.slane %v239, 4
    %242 = vrot.lane.b32.xlu0 %v241, 1
    %v243 = vpop.permute.xlu0 %242
    %vm245 = vcmask 134152
    %246 = vst.msk [vmem:[#allocation2 + $0x8] sm:$0xf] %vm245, %v243
    %v247 = vmul.f32 %v135, 0.75
    %v249 = vrot.slane %v247, 4
    %v251 = vadd.f32 %v195, %v249
    %v253 = vrot.slane %v251, 4
    %254 = vrot.lane.b32.xlu0 %v253, 17
    %v255 = vpop.permute.xlu0 %254
    %257 = vst.msk [vmem:[#allocation2 + $0x8] sm:$0xf] %vm171, %v255
    %v258 = vadd.f32 %v247, %v237
    %260 = vrot.lane.b32.xlu0 %v258, 33
    %v261 = vpop.permute.xlu0 %260
    %263 = vst.msk [vmem:[#allocation2 + $0x8] sm:$0xf] %vm183, %v261
    %v264 = vadd.f32 %v235, %v249
    %266 = vrot.lane.b32.xlu0 %v264, 49
    %v267 = vpop.permute.xlu0 %266
    %269 = vst.msk [vmem:[#allocation2 + $0x8] sm:$0xf] %vm193, %v267
    %v270 = vmul.f32 %v140, 0.25
    %v272 = vrot.slane %v270, 4
    %v274 = vadd.f32 %v247, %v272
    %v276 = vrot.slane %v274, 4
    %277 = vrot.lane.b32.xlu0 %v276, 65
    %v278 = vpop.permute.xlu0 %277
    %280 = vst.msk [vmem:[#allocation2 + $0x8] sm:$0xf] %vm205, %v278
    %v281 = vmul.f32 %v140, 0.75
    %v283 = vrot.slane %v281, 4
    %v285 = vadd.f32 %v235, %v283
    %v287 = vrot.slane %v285, 4
    %288 = vrot.lane.b32.xlu0 %v287, 81
    %v289 = vpop.permute.xlu0 %288
    %291 = vst.msk [vmem:[#allocation2 + $0x8] sm:$0xf] %vm217, %v289
    %v292 = vadd.f32 %v281, %v272
    %294 = vrot.lane.b32.xlu0 %v292, 97
    %v295 = vpop.permute.xlu0 %294
    %297 = vst.msk [vmem:[#allocation2 + $0x8] sm:$0xf] %vm224, %v295
    %v298 = vadd.f32 %v270, %v283
    %300 = vrot.lane.b32.xlu0 %v298, 113
    %v301 = vpop.permute.xlu0 %300
    %303 = vst.msk [vmem:[#allocation2 + $0x8] sm:$0xf] %vm231, %v301
    %304 = vst.msk [vmem:[#allocation2 + $0x10] sm:$0xf] %vm233, %v301
    %v306 = vrot.slane %v140, 4
    %307 = vrot.lane.b32.xlu0 %v306, 1
    %v308 = vpop.permute.xlu0 %307
    %310 = vst.msk [vmem:[#allocation2 + $0x10] sm:$0xf] %vm245, %v308
    %v311 = vld [vmem:[%s1] sm:$0xff]
    %v313 = vcombine.low %v311, %v311
    %314 = vrot.lane.b32.xlu0 %v313, 17
    %v315 = vpop.permute.xlu0 %314
    %316 = vrot.lane.b32.xlu0 %v311, 17
    %v317 = vpop.permute.xlu0 %316
    %v318 = vsel %vm163, %v315, %v317
    %vm322 = vcmask 1047692
    %323 = vst.msk [vmem:[#allocation2] sm:$0xf0] %vm322, %v315
    %324 = vst [vmem:[#allocation2 + $0x8] sm:$0xf0] %v318
    %vm325 = vcmask 138244
    %326 = vst.msk [vmem:[#allocation2 + $0x10] sm:$0xf0] %vm325, %v317
    %vm327 = vcmask 417040
    %328 = vst.msk [vmem:[#allocation2 + $0x10] sm:$0xff] %vm327, 0.0
    %vm329 = vcmask 556440
    %330 = vst.msk [vmem:[#allocation2 + $0x20] sm:$0xff] %vm329, 0.0
    %332 = vrot.lane.b32.xlu0 %v145, 51
    %v333 = vpop.permute.xlu0 %332
    %vm335 = vcmask 544152
    %336 = vst.msk [vmem:[#allocation2 + $0x10] sm:$0xf] %vm335, %v333
    %v337 = vmul.f32 %v145, 0.75
    %v338 = vmul.f32 %v145, 0.25
    %v340 = vrot.slane %v338, 4
    %v342 = vadd.f32 %v337, %v340
    %344 = vrot.lane.b32.xlu0 %v342, 67
    %v345 = vpop.permute.xlu0 %344
    %vm347 = vcmask 675352
    %348 = vst.msk [vmem:[#allocation2 + $0x10] sm:$0xf] %vm347, %v345
    %v350 = vrot.slane %v337, 4
    %v352 = vadd.f32 %v338, %v350
    %354 = vrot.lane.b32.xlu0 %v352, 83
    %v355 = vpop.permute.xlu0 %354
    %vm357 = vcmask 806552
    %358 = vst.msk [vmem:[#allocation2 + $0x10] sm:$0xf] %vm357, %v355
    %v359 = vmul.f32 %v150, 0.25
    %v361 = vrot.slane %v359, 4
    %v363 = vadd.f32 %v337, %v361
    %v365 = vrot.slane %v363, 4
    %366 = vrot.lane.b32.xlu0 %v365, 99
    %v367 = vpop.permute.xlu0 %366
    %vm369 = vcmask 937752
    %370 = vst.msk [vmem:[#allocation2 + $0x10] sm:$0xf] %vm369, %v367
    %v371 = vmul.f32 %v150, 0.75
    %v373 = vrot.slane %v371, 4
    %v375 = vadd.f32 %v338, %v373
    %v377 = vrot.slane %v375, 4
    %378 = vrot.lane.b32.xlu0 %v377, 115
    %v379 = vpop.permute.xlu0 %378
    %vm381 = vcmask 1044376
    %382 = vst.msk [vmem:[#allocation2 + $0x10] sm:$0xf] %vm381, %v379
    %vm383 = vcmask 19456
    %384 = vst.msk [vmem:[#allocation2 + $0x18] sm:$0xf] %vm383, %v379
    %v385 = vadd.f32 %v371, %v361
    %387 = vrot.lane.b32.xlu0 %v385, 3
    %v388 = vpop.permute.xlu0 %387
    %vm390 = vcmask 150552
    %391 = vst.msk [vmem:[#allocation2 + $0x18] sm:$0xf] %vm390, %v388
    %v392 = vadd.f32 %v359, %v373
    %394 = vrot.lane.b32.xlu0 %v392, 19
    %v395 = vpop.permute.xlu0 %394
    %vm397 = vcmask 281752
    %398 = vst.msk [vmem:[#allocation2 + $0x18] sm:$0xf] %vm397, %v395
    %v399 = vmul.f32 %v155, 0.25
    %v401 = vrot.slane %v399, 4
    %v403 = vadd.f32 %v371, %v401
    %v405 = vrot.slane %v403, 4
    %406 = vrot.lane.b32.xlu0 %v405, 35
    %v407 = vpop.permute.xlu0 %406
    %vm409 = vcmask 412952
    %410 = vst.msk [vmem:[#allocation2 + $0x18] sm:$0xf] %vm409, %v407
    %v411 = vmul.f32 %v155, 0.75
    %v413 = vrot.slane %v411, 4
    %v415 = vadd.f32 %v359, %v413
    %v417 = vrot.slane %v415, 4
    %418 = vrot.lane.b32.xlu0 %v417, 51
    %v419 = vpop.permute.xlu0 %418
    %421 = vst.msk [vmem:[#allocation2 + $0x18] sm:$0xf] %vm335, %v419
    %v422 = vadd.f32 %v411, %v401
    %424 = vrot.lane.b32.xlu0 %v422, 67
    %v425 = vpop.permute.xlu0 %424
    %427 = vst.msk [vmem:[#allocation2 + $0x18] sm:$0xf] %vm347, %v425
    %v428 = vadd.f32 %v399, %v413
    %430 = vrot.lane.b32.xlu0 %v428, 83
    %v431 = vpop.permute.xlu0 %430
    %433 = vst.msk [vmem:[#allocation2 + $0x18] sm:$0xf] %vm357, %v431
    %v434 = vmul.f32 %v160, 0.25
    %v436 = vrot.slane %v434, 4
    %v438 = vadd.f32 %v411, %v436
    %v440 = vrot.slane %v438, 4
    %441 = vrot.lane.b32.xlu0 %v440, 99
    %v442 = vpop.permute.xlu0 %441
    %444 = vst.msk [vmem:[#allocation2 + $0x18] sm:$0xf] %vm369, %v442
    %v445 = vmul.f32 %v160, 0.75
    %v447 = vrot.slane %v445, 4
    %v449 = vadd.f32 %v399, %v447
    %v451 = vrot.slane %v449, 4
    %452 = vrot.lane.b32.xlu0 %v451, 115
    %v453 = vpop.permute.xlu0 %452
    %455 = vst.msk [vmem:[#allocation2 + $0x18] sm:$0xf] %vm381, %v453
    %456 = vst.msk [vmem:[#allocation2 + $0x20] sm:$0xf] %vm383, %v453
    %v457 = vadd.f32 %v445, %v436
    %459 = vrot.lane.b32.xlu0 %v457, 3
    %v460 = vpop.permute.xlu0 %459
    %462 = vst.msk [vmem:[#allocation2 + $0x20] sm:$0xf] %vm390, %v460
    %v463 = vadd.f32 %v434, %v447
    %465 = vrot.lane.b32.xlu0 %v463, 19
    %v466 = vpop.permute.xlu0 %465
    %468 = vst.msk [vmem:[#allocation2 + $0x20] sm:$0xf] %vm397, %v466
    %v470 = vrot.slane %v160, 4
    %471 = vrot.lane.b32.xlu0 %v470, 35
    %v472 = vpop.permute.xlu0 %471
    %474 = vst.msk [vmem:[#allocation2 + $0x20] sm:$0xf] %vm409, %v472
    %s475 = scalar_lea.vmem %s1, 8
    %v476 = vld [vmem:[%s475] sm:$0xff]
    %v478 = vcombine.low %v476, %v476
    %479 = vrot.lane.b32.xlu0 %v478, 51
    %v480 = vpop.permute.xlu0 %479
    %481 = vrot.lane.b32.xlu0 %v476, 51
    %v482 = vpop.permute.xlu0 %481
    %vm483 = vcmask 416768
    %v484 = vsel %vm483, %v480, %v482
    %vm488 = vcmask 1047964
    %489 = vst.msk [vmem:[#allocation2 + $0x10] sm:$0xf0] %vm488, %v480
    %490 = vst [vmem:[#allocation2 + $0x18] sm:$0xf0] %v484
    %vm491 = vcmask 416772
    %492 = vst.msk [vmem:[#allocation2 + $0x20] sm:$0xf0] %vm491, %v482
    %v493 = vld [vmem:[#allocation2] sm:$0xff]
    %v494 = vld [vmem:[#allocation2 + $0x8] sm:$0xff]
    %v495 = vld [vmem:[#allocation2 + $0x10] sm:$0xff]
    %v496 = vld [vmem:[#allocation2 + $0x18] sm:$0xff]
    %v497 = vld [vmem:[#allocation2 + $0x20] sm:$0xff]
    %v498 = vld [vmem:[%s5] ss:$4 sm:$0x1f]
    %v500 = vlaneseq
    %v501 = vshrl.u32 %v500, 7
    %v502 = vsub.s32 0, %v501
    %v503 = vrot.slane %v498, %v502
    %v504 = vlaneseq
    %v505 = vshrl.u32 %v504, 7
    %v506 = vsub.s32 1, %v505
    %v507 = vrot.slane %v498, %v506
    %v508 = vlaneseq
    %v509 = vshrl.u32 %v508, 7
    %v510 = vsub.s32 2, %v509
    %v511 = vrot.slane %v498, %v510
    %v512 = vlaneseq
    %v513 = vshrl.u32 %v512, 7
    %v514 = vsub.s32 3, %v513
    %v515 = vrot.slane %v498, %v514
    %v516 = vlaneseq
    %v517 = vshrl.u32 %v516, 7
    %v518 = vsub.s32 4, %v517
    %v519 = vrot.slane %v498, %v518
    %v525 = vmul.f32 %v493, %v503
    %v526 = vmul.f32 %v494, %v507
    %v527 = vmul.f32 %v495, %v511
    %v528 = vmul.f32 %v496, %v515
    %v529 = vmul.f32 %v497, %v519
    %v530 = vld [vmem:[%s3] sm:$0xf]
    %s531 = scalar_lea.vmem %s3, 4
    %v532 = vld [vmem:[%s531] sm:$0xf]
    %538 = vrot.lane.b32.xlu0 %v493, 127
    %v539 = vpop.permute.xlu0 %538
    %540 = vrot.lane.b32.xlu0 %v494, 127
    %v541 = vpop.permute.xlu0 %540
    %542 = vrot.lane.b32.xlu0 %v495, 127
    %v543 = vpop.permute.xlu0 %542
    %544 = vrot.lane.b32.xlu0 %v496, 127
    %v545 = vpop.permute.xlu0 %544
    %546 = vrot.lane.b32.xlu0 %v497, 127
    %v547 = vpop.permute.xlu0 %546
    %vm548 = vcmask 1039360
    %v549 = vsel %vm548, %v539, %v541
    %v550 = vsel %vm548, %v541, %v543
    %v551 = vsel %vm548, %v543, %v545
    %v552 = vsel %vm548, %v545, %v547
    %v559 = vsel %vm33, %v532, 0
    %561 = vmatprep.subr.mxu0 %v550
    %562 = vmatpush1.msra.mxu0 %v549
    %563 = vmatprep.subr.mxu0 0.0
    %564 = vmatpush1.msra.mxu0 0.0
    %565 = vmatprep.subr.mxu0 0.0
    %566 = vmatpush1.msra.mxu0 0.0
    %567 = vmatprep.subr.mxu0 0.0
    %568 = vmatpush1.msra.mxu0 0.0
    %569 = vmatprep.subr.mxu0 0.0
    %570 = vmatpush1.msra.mxu0 0.0
    %571 = vmatprep.subr.mxu0 0.0
    %572 = vmatpush1.msra.mxu0 0.0
    %573 = vmatprep.subr.mxu0 0.0
    %574 = vmatpush1.msra.mxu0 0.0
    %575 = vmatprep.subr.mxu0 0.0
    %576 = vmatpush1.msra.mxu0 0.0
    %577 = vmatprep.subr.mxu0 0.0
    %578 = vmatpush1.msra.mxu0 0.0
    %579 = vmatprep.subr.mxu0 0.0
    %580 = vmatpush1.msra.mxu0 0.0
    %581 = vmatprep.subr.mxu0 0.0
    %582 = vmatpush1.msra.mxu0 0.0
    %583 = vmatprep.subr.mxu0 0.0
    %584 = vmatpush1.msra.mxu0 0.0
    %585 = vmatprep.subr.mxu0 0.0
    %586 = vmatpush1.msra.mxu0 0.0
    %587 = vmatprep.subr.mxu0 0.0
    %588 = vmatpush1.msra.mxu0 0.0
    %589 = vmatprep.subr.mxu0 0.0
    %590 = vmatpush1.msra.mxu0 0.0
    %591 = vmatprep.subr.mxu0 0.0
    %592 = vmatpush1.msra.mxu0 0.0
    %593 = vmatprep.subr.mxu0 0.0
    %594 = vmatpush1.msra.mxu0 0.0
    %595 = vmatprep.subr.mxu0 0.0
    %596 = vmatpush1.msra.mxu0 0.0
    %597 = vmatprep.subr.mxu0 0.0
    %598 = vmatpush1.msra.mxu0 0.0
    %599 = vmatprep.subr.mxu0 0.0
    %600 = vmatpush1.msra.mxu0 0.0
    %601 = vmatprep.subr.mxu0 0.0
    %602 = vmatpush1.msra.mxu0 0.0
    %603 = vmatprep.subr.mxu0 0.0
    %604 = vmatpush1.msra.mxu0 0.0
    %605 = vmatprep.subr.mxu0 0.0
    %606 = vmatpush1.msra.mxu0 0.0
    %607 = vmatprep.subr.mxu0 0.0
    %608 = vmatpush1.msra.mxu0 0.0
    %609 = vmatprep.subr.mxu0 0.0
    %610 = vmatpush1.msra.mxu0 0.0
    %611 = vmatprep.subr.mxu0 0.0
    %612 = vmatpush1.msra.mxu0 0.0
    %613 = vmatprep.subr.mxu0 0.0
    %614 = vmatpush1.msra.mxu0 0.0
    %615 = vmatprep.subr.mxu0 0.0
    %616 = vmatpush1.msra.mxu0 0.0
    %617 = vmatprep.subr.mxu0 0.0
    %618 = vmatpush1.msra.mxu0 0.0
    %619 = vmatprep.subr.mxu0 0.0
    %620 = vmatpush1.msra.mxu0 0.0
    %621 = vmatprep.subr.mxu0 0.0
    %622 = vmatpush1.msra.mxu0 0.0
    %623 = vmatprep.subr.mxu0 0.0
    %624 = vmatpush1.msra.mxu0 0.0
    %625 = vmatprep.mubr.f32.mxu0 0.0
    %626 = vmatmul.mubr.f32.gmra.mrb[0].mxu0 %v559
    %v627 = vpop.f32.mrb[0].mxu0
    %v628 = vadd.f32 0.0, %v627
    %v629 = vpop.f32.mrb[0].mxu0
    %v630 = vadd.f32 0.0, %v629
    %631 = vdwg.mxu0
    %632 = vmatprep.subr.mxu0 %v552
    %633 = vmatpush1.msra.mxu0 %v551
    %634 = vmatprep.subr.mxu0 0.0
    %635 = vmatpush1.msra.mxu0 0.0
    %636 = vmatprep.subr.mxu0 0.0
    %637 = vmatpush1.msra.mxu0 0.0
    %638 = vmatprep.subr.mxu0 0.0
    %639 = vmatpush1.msra.mxu0 0.0
    %640 = vmatprep.subr.mxu0 0.0
    %641 = vmatpush1.msra.mxu0 0.0
    %642 = vmatprep.subr.mxu0 0.0
    %643 = vmatpush1.msra.mxu0 0.0
    %644 = vmatprep.subr.mxu0 0.0
    %645 = vmatpush1.msra.mxu0 0.0
    %646 = vmatprep.subr.mxu0 0.0
    %647 = vmatpush1.msra.mxu0 0.0
    %648 = vmatprep.subr.mxu0 0.0
    %649 = vmatpush1.msra.mxu0 0.0
    %650 = vmatprep.subr.mxu0 0.0
    %651 = vmatpush1.msra.mxu0 0.0
    %652 = vmatprep.subr.mxu0 0.0
    %653 = vmatpush1.msra.mxu0 0.0
    %654 = vmatprep.subr.mxu0 0.0
    %655 = vmatpush1.msra.mxu0 0.0
    %656 = vmatprep.subr.mxu0 0.0
    %657 = vmatpush1.msra.mxu0 0.0
    %658 = vmatprep.subr.mxu0 0.0
    %659 = vmatpush1.msra.mxu0 0.0
    %660 = vmatprep.subr.mxu0 0.0
    %661 = vmatpush1.msra.mxu0 0.0
    %662 = vmatprep.subr.mxu0 0.0
    %663 = vmatpush1.msra.mxu0 0.0
    %664 = vmatprep.subr.mxu0 0.0
    %665 = vmatpush1.msra.mxu0 0.0
    %666 = vmatprep.subr.mxu0 0.0
    %667 = vmatpush1.msra.mxu0 0.0
    %668 = vmatprep.subr.mxu0 0.0
    %669 = vmatpush1.msra.mxu0 0.0
    %670 = vmatprep.subr.mxu0 0.0
    %671 = vmatpush1.msra.mxu0 0.0
    %672 = vmatprep.subr.mxu0 0.0
    %673 = vmatpush1.msra.mxu0 0.0
    %674 = vmatprep.subr.mxu0 0.0
    %675 = vmatpush1.msra.mxu0 0.0
    %676 = vmatprep.subr.mxu0 0.0
    %677 = vmatpush1.msra.mxu0 0.0
    %678 = vmatprep.subr.mxu0 0.0
    %679 = vmatpush1.msra.mxu0 0.0
    %680 = vmatprep.subr.mxu0 0.0
    %681 = vmatpush1.msra.mxu0 0.0
    %682 = vmatprep.subr.mxu0 0.0
    %683 = vmatpush1.msra.mxu0 0.0
    %684 = vmatprep.subr.mxu0 0.0
    %685 = vmatpush1.msra.mxu0 0.0
    %686 = vmatprep.subr.mxu0 0.0
    %687 = vmatpush1.msra.mxu0 0.0
    %688 = vmatprep.subr.mxu0 0.0
    %689 = vmatpush1.msra.mxu0 0.0
    %690 = vmatprep.subr.mxu0 0.0
    %691 = vmatpush1.msra.mxu0 0.0
    %692 = vmatprep.subr.mxu0 0.0
    %693 = vmatpush1.msra.mxu0 0.0
    %694 = vmatprep.subr.mxu0 0.0
    %695 = vmatpush1.msra.mxu0 0.0
    %696 = vmatprep.mubr.f32.mxu0 0.0
    %697 = vmatmul.mubr.f32.gmra.mrb[0].mxu0 %v559
    %v698 = vpop.f32.mrb[0].mxu0
    %v699 = vadd.f32 0.0, %v698
    %v700 = vpop.f32.mrb[0].mxu0
    %v701 = vadd.f32 0.0, %v700
    %702 = vdwg.mxu0
    %703 = vmatprep.subr.mxu0 0.0
    %704 = vmatpush1.msra.mxu0 %v547
    %705 = vmatprep.subr.mxu0 0.0
    %706 = vmatpush1.msra.mxu0 0.0
    %707 = vmatprep.subr.mxu0 0.0
    %708 = vmatpush1.msra.mxu0 0.0
    %709 = vmatprep.subr.mxu0 0.0
    %710 = vmatpush1.msra.mxu0 0.0
    %711 = vmatprep.subr.mxu0 0.0
    %712 = vmatpush1.msra.mxu0 0.0
    %713 = vmatprep.subr.mxu0 0.0
    %714 = vmatpush1.msra.mxu0 0.0
    %715 = vmatprep.subr.mxu0 0.0
    %716 = vmatpush1.msra.mxu0 0.0
    %717 = vmatprep.subr.mxu0 0.0
    %718 = vmatpush1.msra.mxu0 0.0
    %719 = vmatprep.subr.mxu0 0.0
    %720 = vmatpush1.msra.mxu0 0.0
    %721 = vmatprep.subr.mxu0 0.0
    %722 = vmatpush1.msra.mxu0 0.0
    %723 = vmatprep.subr.mxu0 0.0
    %724 = vmatpush1.msra.mxu0 0.0
    %725 = vmatprep.subr.mxu0 0.0
    %726 = vmatpush1.msra.mxu0 0.0
    %727 = vmatprep.subr.mxu0 0.0
    %728 = vmatpush1.msra.mxu0 0.0
    %729 = vmatprep.subr.mxu0 0.0
    %730 = vmatpush1.msra.mxu0 0.0
    %731 = vmatprep.subr.mxu0 0.0
    %732 = vmatpush1.msra.mxu0 0.0
    %733 = vmatprep.subr.mxu0 0.0
    %734 = vmatpush1.msra.mxu0 0.0
    %735 = vmatprep.subr.mxu0 0.0
    %736 = vmatpush1.msra.mxu0 0.0
    %737 = vmatprep.subr.mxu0 0.0
    %738 = vmatpush1.msra.mxu0 0.0
    %739 = vmatprep.subr.mxu0 0.0
    %740 = vmatpush1.msra.mxu0 0.0
    %741 = vmatprep.subr.mxu0 0.0
    %742 = vmatpush1.msra.mxu0 0.0
    %743 = vmatprep.subr.mxu0 0.0
    %744 = vmatpush1.msra.mxu0 0.0
    %745 = vmatprep.subr.mxu0 0.0
    %746 = vmatpush1.msra.mxu0 0.0
    %747 = vmatprep.subr.mxu0 0.0
    %748 = vmatpush1.msra.mxu0 0.0
    %749 = vmatprep.subr.mxu0 0.0
    %750 = vmatpush1.msra.mxu0 0.0
    %751 = vmatprep.subr.mxu0 0.0
    %752 = vmatpush1.msra.mxu0 0.0
    %753 = vmatprep.subr.mxu0 0.0
    %754 = vmatpush1.msra.mxu0 0.0
    %755 = vmatprep.subr.mxu0 0.0
    %756 = vmatpush1.msra.mxu0 0.0
    %757 = vmatprep.subr.mxu0 0.0
    %758 = vmatpush1.msra.mxu0 0.0
    %759 = vmatprep.subr.mxu0 0.0
    %760 = vmatpush1.msra.mxu0 0.0
    %761 = vmatprep.subr.mxu0 0.0
    %762 = vmatpush1.msra.mxu0 0.0
    %763 = vmatprep.subr.mxu0 0.0
    %764 = vmatpush1.msra.mxu0 0.0
    %765 = vmatprep.subr.mxu0 0.0
    %766 = vmatpush1.msra.mxu0 0.0
    %767 = vmatprep.mubr.f32.mxu0 0.0
    %768 = vmatmul.mubr.f32.gmra.mrb[0].mxu0 %v559
    %v769 = vpop.f32.mrb[0].mxu0
    %v770 = vadd.f32 0.0, %v769
    %v771 = vpop.f32.mrb[0].mxu0
    %772 = vdwg.mxu0
    %v774 = vsel %vm33, %v530, 0
    %776 = vmatprep.subr.mxu0 %v526
    %777 = vmatpush1.msra.mxu0 %v525
    %778 = vmatprep.subr.mxu0 0.0
    %779 = vmatpush1.msra.mxu0 0.0
    %780 = vmatprep.subr.mxu0 0.0
    %781 = vmatpush1.msra.mxu0 0.0
    %782 = vmatprep.subr.mxu0 0.0
    %783 = vmatpush1.msra.mxu0 0.0
    %784 = vmatprep.subr.mxu0 0.0
    %785 = vmatpush1.msra.mxu0 0.0
    %786 = vmatprep.subr.mxu0 0.0
    %787 = vmatpush1.msra.mxu0 0.0
    %788 = vmatprep.subr.mxu0 0.0
    %789 = vmatpush1.msra.mxu0 0.0
    %790 = vmatprep.subr.mxu0 0.0
    %791 = vmatpush1.msra.mxu0 0.0
    %792 = vmatprep.subr.mxu0 0.0
    %793 = vmatpush1.msra.mxu0 0.0
    %794 = vmatprep.subr.mxu0 0.0
    %795 = vmatpush1.msra.mxu0 0.0
    %796 = vmatprep.subr.mxu0 0.0
    %797 = vmatpush1.msra.mxu0 0.0
    %798 = vmatprep.subr.mxu0 0.0
    %799 = vmatpush1.msra.mxu0 0.0
    %800 = vmatprep.subr.mxu0 0.0
    %801 = vmatpush1.msra.mxu0 0.0
    %802 = vmatprep.subr.mxu0 0.0
    %803 = vmatpush1.msra.mxu0 0.0
    %804 = vmatprep.subr.mxu0 0.0
    %805 = vmatpush1.msra.mxu0 0.0
    %806 = vmatprep.subr.mxu0 0.0
    %807 = vmatpush1.msra.mxu0 0.0
    %808 = vmatprep.subr.mxu0 0.0
    %809 = vmatpush1.msra.mxu0 0.0
    %810 = vmatprep.subr.mxu0 0.0
    %811 = vmatpush1.msra.mxu0 0.0
    %812 = vmatprep.subr.mxu0 0.0
    %813 = vmatpush1.msra.mxu0 0.0
    %814 = vmatprep.subr.mxu0 0.0
    %815 = vmatpush1.msra.mxu0 0.0
    %816 = vmatprep.subr.mxu0 0.0
    %817 = vmatpush1.msra.mxu0 0.0
    %818 = vmatprep.subr.mxu0 0.0
    %819 = vmatpush1.msra.mxu0 0.0
    %820 = vmatprep.subr.mxu0 0.0
    %821 = vmatpush1.msra.mxu0 0.0
    %822 = vmatprep.subr.mxu0 0.0
    %823 = vmatpush1.msra.mxu0 0.0
    %824 = vmatprep.subr.mxu0 0.0
    %825 = vmatpush1.msra.mxu0 0.0
    %826 = vmatprep.subr.mxu0 0.0
    %827 = vmatpush1.msra.mxu0 0.0
    %828 = vmatprep.subr.mxu0 0.0
    %829 = vmatpush1.msra.mxu0 0.0
    %830 = vmatprep.subr.mxu0 0.0
    %831 = vmatpush1.msra.mxu0 0.0
    %832 = vmatprep.subr.mxu0 0.0
    %833 = vmatpush1.msra.mxu0 0.0
    %834 = vmatprep.subr.mxu0 0.0
    %835 = vmatpush1.msra.mxu0 0.0
    %836 = vmatprep.subr.mxu0 0.0
    %837 = vmatpush1.msra.mxu0 0.0
    %838 = vmatprep.subr.mxu0 0.0
    %839 = vmatpush1.msra.mxu0 0.0
    %840 = vmatprep.mubr.f32.mxu0 0.0
    %841 = vmatmul.mubr.f32.gmra.mrb[0].mxu0 %v774
    %v842 = vpop.f32.mrb[0].mxu0
    %v843 = vadd.f32 %v628, %v842
    %v844 = vpop.f32.mrb[0].mxu0
    %v845 = vadd.f32 %v630, %v844
    %846 = vdwg.mxu0
    %847 = vmatprep.subr.mxu0 %v528
    %848 = vmatpush1.msra.mxu0 %v527
    %849 = vmatprep.subr.mxu0 0.0
    %850 = vmatpush1.msra.mxu0 0.0
    %851 = vmatprep.subr.mxu0 0.0
    %852 = vmatpush1.msra.mxu0 0.0
    %853 = vmatprep.subr.mxu0 0.0
    %854 = vmatpush1.msra.mxu0 0.0
    %855 = vmatprep.subr.mxu0 0.0
    %856 = vmatpush1.msra.mxu0 0.0
    %857 = vmatprep.subr.mxu0 0.0
    %858 = vmatpush1.msra.mxu0 0.0
    %859 = vmatprep.subr.mxu0 0.0
    %860 = vmatpush1.msra.mxu0 0.0
    %861 = vmatprep.subr.mxu0 0.0
    %862 = vmatpush1.msra.mxu0 0.0
    %863 = vmatprep.subr.mxu0 0.0
    %864 = vmatpush1.msra.mxu0 0.0
    %865 = vmatprep.subr.mxu0 0.0
    %866 = vmatpush1.msra.mxu0 0.0
    %867 = vmatprep.subr.mxu0 0.0
    %868 = vmatpush1.msra.mxu0 0.0
    %869 = vmatprep.subr.mxu0 0.0
    %870 = vmatpush1.msra.mxu0 0.0
    %871 = vmatprep.subr.mxu0 0.0
    %872 = vmatpush1.msra.mxu0 0.0
    %873 = vmatprep.subr.mxu0 0.0
    %874 = vmatpush1.msra.mxu0 0.0
    %875 = vmatprep.subr.mxu0 0.0
    %876 = vmatpush1.msra.mxu0 0.0
    %877 = vmatprep.subr.mxu0 0.0
    %878 = vmatpush1.msra.mxu0 0.0
    %879 = vmatprep.subr.mxu0 0.0
    %880 = vmatpush1.msra.mxu0 0.0
    %881 = vmatprep.subr.mxu0 0.0
    %882 = vmatpush1.msra.mxu0 0.0
    %883 = vmatprep.subr.mxu0 0.0
    %884 = vmatpush1.msra.mxu0 0.0
    %885 = vmatprep.subr.mxu0 0.0
    %886 = vmatpush1.msra.mxu0 0.0
    %887 = vmatprep.subr.mxu0 0.0
    %888 = vmatpush1.msra.mxu0 0.0
    %889 = vmatprep.subr.mxu0 0.0
    %890 = vmatpush1.msra.mxu0 0.0
    %891 = vmatprep.subr.mxu0 0.0
    %892 = vmatpush1.msra.mxu0 0.0
    %893 = vmatprep.subr.mxu0 0.0
    %894 = vmatpush1.msra.mxu0 0.0
    %895 = vmatprep.subr.mxu0 0.0
    %896 = vmatpush1.msra.mxu0 0.0
    %897 = vmatprep.subr.mxu0 0.0
    %898 = vmatpush1.msra.mxu0 0.0
    %899 = vmatprep.subr.mxu0 0.0
    %900 = vmatpush1.msra.mxu0 0.0
    %901 = vmatprep.subr.mxu0 0.0
    %902 = vmatpush1.msra.mxu0 0.0
    %903 = vmatprep.subr.mxu0 0.0
    %904 = vmatpush1.msra.mxu0 0.0
    %905 = vmatprep.subr.mxu0 0.0
    %906 = vmatpush1.msra.mxu0 0.0
    %907 = vmatprep.subr.mxu0 0.0
    %908 = vmatpush1.msra.mxu0 0.0
    %909 = vmatprep.subr.mxu0 0.0
    %910 = vmatpush1.msra.mxu0 0.0
    %911 = vmatprep.mubr.f32.mxu0 0.0
    %912 = vmatmul.mubr.f32.gmra.mrb[0].mxu0 %v774
    %v913 = vpop.f32.mrb[0].mxu0
    %v914 = vadd.f32 %v699, %v913
    %v915 = vpop.f32.mrb[0].mxu0
    %v916 = vadd.f32 %v701, %v915
    %917 = vdwg.mxu0
    %918 = vmatprep.subr.mxu0 0.0
    %919 = vmatpush1.msra.mxu0 %v529
    %920 = vmatprep.subr.mxu0 0.0
    %921 = vmatpush1.msra.mxu0 0.0
    %922 = vmatprep.subr.mxu0 0.0
    %923 = vmatpush1.msra.mxu0 0.0
    %924 = vmatprep.subr.mxu0 0.0
    %925 = vmatpush1.msra.mxu0 0.0
    %926 = vmatprep.subr.mxu0 0.0
    %927 = vmatpush1.msra.mxu0 0.0
    %928 = vmatprep.subr.mxu0 0.0
    %929 = vmatpush1.msra.mxu0 0.0
    %930 = vmatprep.subr.mxu0 0.0
    %931 = vmatpush1.msra.mxu0 0.0
    %932 = vmatprep.subr.mxu0 0.0
    %933 = vmatpush1.msra.mxu0 0.0
    %934 = vmatprep.subr.mxu0 0.0
    %935 = vmatpush1.msra.mxu0 0.0
    %936 = vmatprep.subr.mxu0 0.0
    %937 = vmatpush1.msra.mxu0 0.0
    %938 = vmatprep.subr.mxu0 0.0
    %939 = vmatpush1.msra.mxu0 0.0
    %940 = vmatprep.subr.mxu0 0.0
    %941 = vmatpush1.msra.mxu0 0.0
    %942 = vmatprep.subr.mxu0 0.0
    %943 = vmatpush1.msra.mxu0 0.0
    %944 = vmatprep.subr.mxu0 0.0
    %945 = vmatpush1.msra.mxu0 0.0
    %946 = vmatprep.subr.mxu0 0.0
    %947 = vmatpush1.msra.mxu0 0.0
    %948 = vmatprep.subr.mxu0 0.0
    %949 = vmatpush1.msra.mxu0 0.0
    %950 = vmatprep.subr.mxu0 0.0
    %951 = vmatpush1.msra.mxu0 0.0
    %952 = vmatprep.subr.mxu0 0.0
    %953 = vmatpush1.msra.mxu0 0.0
    %954 = vmatprep.subr.mxu0 0.0
    %955 = vmatpush1.msra.mxu0 0.0
    %956 = vmatprep.subr.mxu0 0.0
    %957 = vmatpush1.msra.mxu0 0.0
    %958 = vmatprep.subr.mxu0 0.0
    %959 = vmatpush1.msra.mxu0 0.0
    %960 = vmatprep.subr.mxu0 0.0
    %961 = vmatpush1.msra.mxu0 0.0
    %962 = vmatprep.subr.mxu0 0.0
    %963 = vmatpush1.msra.mxu0 0.0
    %964 = vmatprep.subr.mxu0 0.0
    %965 = vmatpush1.msra.mxu0 0.0
    %966 = vmatprep.subr.mxu0 0.0
    %967 = vmatpush1.msra.mxu0 0.0
    %968 = vmatprep.subr.mxu0 0.0
    %969 = vmatpush1.msra.mxu0 0.0
    %970 = vmatprep.subr.mxu0 0.0
    %971 = vmatpush1.msra.mxu0 0.0
    %972 = vmatprep.subr.mxu0 0.0
    %973 = vmatpush1.msra.mxu0 0.0
    %974 = vmatprep.subr.mxu0 0.0
    %975 = vmatpush1.msra.mxu0 0.0
    %976 = vmatprep.subr.mxu0 0.0
    %977 = vmatpush1.msra.mxu0 0.0
    %978 = vmatprep.subr.mxu0 0.0
    %979 = vmatpush1.msra.mxu0 0.0
    %980 = vmatprep.subr.mxu0 0.0
    %981 = vmatpush1.msra.mxu0 0.0
    %982 = vmatprep.mubr.f32.mxu0 0.0
    %983 = vmatmul.mubr.f32.gmra.mrb[0].mxu0 %v774
    %v984 = vpop.f32.mrb[0].mxu0
    %v985 = vadd.f32 %v770, %v984
    %v986 = vpop.f32.mrb[0].mxu0
    %987 = vdwg.mxu0
    %s988 = scalar_lea.vmem %s5, 2
    %v989 = vld [vmem:[%s988] ss:$4 sm:$0x1f]
    %v991 = vlaneseq
    %v992 = vshrl.u32 %v991, 7
    %v993 = vsub.s32 0, %v992
    %v994 = vrot.slane %v989, %v993
    %v995 = vlaneseq
    %v996 = vshrl.u32 %v995, 7
    %v997 = vsub.s32 1, %v996
    %v998 = vrot.slane %v989, %v997
    %v999 = vlaneseq
    %v1000 = vshrl.u32 %v999, 7
    %v1001 = vsub.s32 2, %v1000
    %v1002 = vrot.slane %v989, %v1001
    %v1003 = vlaneseq
    %v1004 = vshrl.u32 %v1003, 7
    %v1005 = vsub.s32 3, %v1004
    %v1006 = vrot.slane %v989, %v1005
    %v1007 = vlaneseq
    %v1008 = vshrl.u32 %v1007, 7
    %v1009 = vsub.s32 4, %v1008
    %v1010 = vrot.slane %v989, %v1009
    %1011 = vrot.lane.b32.xlu0 %v994, 2
    %v1012 = vpop.permute.xlu0 %1011
    %1013 = vrot.lane.b32.xlu0 %v998, 2
    %v1014 = vpop.permute.xlu0 %1013
    %1015 = vrot.lane.b32.xlu0 %v1002, 2
    %v1016 = vpop.permute.xlu0 %1015
    %1017 = vrot.lane.b32.xlu0 %v1006, 2
    %v1018 = vpop.permute.xlu0 %1017
    %1019 = vrot.lane.b32.xlu0 %v1010, 2
    %v1020 = vpop.permute.xlu0 %1019
    %vm1021 = vcmask 15360
    %v1022 = vsel %vm1021, %v1012, %v1014
    %v1023 = vsel %vm1021, %v1014, %v1016
    %v1024 = vsel %vm1021, %v1016, %v1018
    %v1025 = vsel %vm1021, %v1018, %v1020
    %v1031 = vmul.f32 %v493, %v1012
    %v1032 = vmul.f32 %v494, %v1022
    %v1033 = vmul.f32 %v495, %v1023
    %v1034 = vmul.f32 %v496, %v1024
    %v1035 = vmul.f32 %v497, %v1025
    %s1036 = scalar_lea.vmem %s3, 8
    %v1037 = vld [vmem:[%s1036] sm:$0xf]
    %1043 = vrot.lane.b32.xlu0 %v1031, 126
    %v1044 = vpop.permute.xlu0 %1043
    %1045 = vrot.lane.b32.xlu0 %v1032, 126
    %v1046 = vpop.permute.xlu0 %1045
    %1047 = vrot.lane.b32.xlu0 %v1033, 126
    %v1048 = vpop.permute.xlu0 %1047
    %1049 = vrot.lane.b32.xlu0 %v1034, 126
    %v1050 = vpop.permute.xlu0 %1049
    %1051 = vrot.lane.b32.xlu0 %v1035, 126
    %v1052 = vpop.permute.xlu0 %1051
    %vm1053 = vcmask 1031168
    %v1054 = vsel %vm1053, %v1044, %v1046
    %v1055 = vsel %vm1053, %v1046, %v1048
    %v1056 = vsel %vm1053, %v1048, %v1050
    %v1057 = vsel %vm1053, %v1050, %v1052
    %v1064 = vsel %vm33, %v1037, 0
    %1066 = vmatprep.subr.mxu0 %v1055
    %1067 = vmatpush1.msra.mxu0 %v1054
    %1068 = vmatprep.subr.mxu0 0.0
    %1069 = vmatpush1.msra.mxu0 0.0
    %1070 = vmatprep.subr.mxu0 0.0
    %1071 = vmatpush1.msra.mxu0 0.0
    %1072 = vmatprep.subr.mxu0 0.0
    %1073 = vmatpush1.msra.mxu0 0.0
    %1074 = vmatprep.subr.mxu0 0.0
    %1075 = vmatpush1.msra.mxu0 0.0
    %1076 = vmatprep.subr.mxu0 0.0
    %1077 = vmatpush1.msra.mxu0 0.0
    %1078 = vmatprep.subr.mxu0 0.0
    %1079 = vmatpush1.msra.mxu0 0.0
    %1080 = vmatprep.subr.mxu0 0.0
    %1081 = vmatpush1.msra.mxu0 0.0
    %1082 = vmatprep.subr.mxu0 0.0
    %1083 = vmatpush1.msra.mxu0 0.0
    %1084 = vmatprep.subr.mxu0 0.0
    %1085 = vmatpush1.msra.mxu0 0.0
    %1086 = vmatprep.subr.mxu0 0.0
    %1087 = vmatpush1.msra.mxu0 0.0
    %1088 = vmatprep.subr.mxu0 0.0
    %1089 = vmatpush1.msra.mxu0 0.0
    %1090 = vmatprep.subr.mxu0 0.0
    %1091 = vmatpush1.msra.mxu0 0.0
    %1092 = vmatprep.subr.mxu0 0.0
    %1093 = vmatpush1.msra.mxu0 0.0
    %1094 = vmatprep.subr.mxu0 0.0
    %1095 = vmatpush1.msra.mxu0 0.0
    %1096 = vmatprep.subr.mxu0 0.0
    %1097 = vmatpush1.msra.mxu0 0.0
    %1098 = vmatprep.subr.mxu0 0.0
    %1099 = vmatpush1.msra.mxu0 0.0
    %1100 = vmatprep.subr.mxu0 0.0
    %1101 = vmatpush1.msra.mxu0 0.0
    %1102 = vmatprep.subr.mxu0 0.0
    %1103 = vmatpush1.msra.mxu0 0.0
    %1104 = vmatprep.subr.mxu0 0.0
    %1105 = vmatpush1.msra.mxu0 0.0
    %1106 = vmatprep.subr.mxu0 0.0
    %1107 = vmatpush1.msra.mxu0 0.0
    %1108 = vmatprep.subr.mxu0 0.0
    %1109 = vmatpush1.msra.mxu0 0.0
    %1110 = vmatprep.subr.mxu0 0.0
    %1111 = vmatpush1.msra.mxu0 0.0
    %1112 = vmatprep.subr.mxu0 0.0
    %1113 = vmatpush1.msra.mxu0 0.0
    %1114 = vmatprep.subr.mxu0 0.0
    %1115 = vmatpush1.msra.mxu0 0.0
    %1116 = vmatprep.subr.mxu0 0.0
    %1117 = vmatpush1.msra.mxu0 0.0
    %1118 = vmatprep.subr.mxu0 0.0
    %1119 = vmatpush1.msra.mxu0 0.0
    %1120 = vmatprep.subr.mxu0 0.0
    %1121 = vmatpush1.msra.mxu0 0.0
    %1122 = vmatprep.subr.mxu0 0.0
    %1123 = vmatpush1.msra.mxu0 0.0
    %1124 = vmatprep.subr.mxu0 0.0
    %1125 = vmatpush1.msra.mxu0 0.0
    %1126 = vmatprep.subr.mxu0 0.0
    %1127 = vmatpush1.msra.mxu0 0.0
    %1128 = vmatprep.subr.mxu0 0.0
    %1129 = vmatpush1.msra.mxu0 0.0
    %1130 = vmatprep.mubr.f32.mxu0 0.0
    %1131 = vmatmul.mubr.f32.gmra.mrb[0].mxu0 %v1064
    %v1132 = vpop.f32.mrb[0].mxu0
    %v1133 = vadd.f32 0.0, %v1132
    %v1134 = vpop.f32.mrb[0].mxu0
    %v1135 = vadd.f32 0.0, %v1134
    %1136 = vdwg.mxu0
    %1137 = vmatprep.subr.mxu0 %v1057
    %1138 = vmatpush1.msra.mxu0 %v1056
    %1139 = vmatprep.subr.mxu0 0.0
    %1140 = vmatpush1.msra.mxu0 0.0
    %1141 = vmatprep.subr.mxu0 0.0
    %1142 = vmatpush1.msra.mxu0 0.0
    %1143 = vmatprep.subr.mxu0 0.0
    %1144 = vmatpush1.msra.mxu0 0.0
    %1145 = vmatprep.subr.mxu0 0.0
    %1146 = vmatpush1.msra.mxu0 0.0
    %1147 = vmatprep.subr.mxu0 0.0
    %1148 = vmatpush1.msra.mxu0 0.0
    %1149 = vmatprep.subr.mxu0 0.0
    %1150 = vmatpush1.msra.mxu0 0.0
    %1151 = vmatprep.subr.mxu0 0.0
    %1152 = vmatpush1.msra.mxu0 0.0
    %1153 = vmatprep.subr.mxu0 0.0
    %1154 = vmatpush1.msra.mxu0 0.0
    %1155 = vmatprep.subr.mxu0 0.0
    %1156 = vmatpush1.msra.mxu0 0.0
    %1157 = vmatprep.subr.mxu0 0.0
    %1158 = vmatpush1.msra.mxu0 0.0
    %1159 = vmatprep.subr.mxu0 0.0
    %1160 = vmatpush1.msra.mxu0 0.0
    %1161 = vmatprep.subr.mxu0 0.0
    %1162 = vmatpush1.msra.mxu0 0.0
    %1163 = vmatprep.subr.mxu0 0.0
    %1164 = vmatpush1.msra.mxu0 0.0
    %1165 = vmatprep.subr.mxu0 0.0
    %1166 = vmatpush1.msra.mxu0 0.0
    %1167 = vmatprep.subr.mxu0 0.0
    %1168 = vmatpush1.msra.mxu0 0.0
    %1169 = vmatprep.subr.mxu0 0.0
    %1170 = vmatpush1.msra.mxu0 0.0
    %1171 = vmatprep.subr.mxu0 0.0
    %1172 = vmatpush1.msra.mxu0 0.0
    %1173 = vmatprep.subr.mxu0 0.0
    %1174 = vmatpush1.msra.mxu0 0.0
    %1175 = vmatprep.subr.mxu0 0.0
    %1176 = vmatpush1.msra.mxu0 0.0
    %1177 = vmatprep.subr.mxu0 0.0
    %1178 = vmatpush1.msra.mxu0 0.0
    %1179 = vmatprep.subr.mxu0 0.0
    %1180 = vmatpush1.msra.mxu0 0.0
    %1181 = vmatprep.subr.mxu0 0.0
    %1182 = vmatpush1.msra.mxu0 0.0
    %1183 = vmatprep.subr.mxu0 0.0
    %1184 = vmatpush1.msra.mxu0 0.0
    %1185 = vmatprep.subr.mxu0 0.0
    %1186 = vmatpush1.msra.mxu0 0.0
    %1187 = vmatprep.subr.mxu0 0.0
    %1188 = vmatpush1.msra.mxu0 0.0
    %1189 = vmatprep.subr.mxu0 0.0
    %1190 = vmatpush1.msra.mxu0 0.0
    %1191 = vmatprep.subr.mxu0 0.0
    %1192 = vmatpush1.msra.mxu0 0.0
    %1193 = vmatprep.subr.mxu0 0.0
    %1194 = vmatpush1.msra.mxu0 0.0
    %1195 = vmatprep.subr.mxu0 0.0
    %1196 = vmatpush1.msra.mxu0 0.0
    %1197 = vmatprep.subr.mxu0 0.0
    %1198 = vmatpush1.msra.mxu0 0.0
    %1199 = vmatprep.subr.mxu0 0.0
    %1200 = vmatpush1.msra.mxu0 0.0
    %1201 = vmatprep.mubr.f32.mxu0 0.0
    %1202 = vmatmul.mubr.f32.gmra.mrb[0].mxu0 %v1064
    %v1203 = vpop.f32.mrb[0].mxu0
    %v1204 = vadd.f32 0.0, %v1203
    %v1205 = vpop.f32.mrb[0].mxu0
    %v1206 = vadd.f32 0.0, %v1205
    %1207 = vdwg.mxu0
    %1208 = vmatprep.subr.mxu0 0.0
    %1209 = vmatpush1.msra.mxu0 %v1052
    %1210 = vmatprep.subr.mxu0 0.0
    %1211 = vmatpush1.msra.mxu0 0.0
    %1212 = vmatprep.subr.mxu0 0.0
    %1213 = vmatpush1.msra.mxu0 0.0
    %1214 = vmatprep.subr.mxu0 0.0
    %1215 = vmatpush1.msra.mxu0 0.0
    %1216 = vmatprep.subr.mxu0 0.0
    %1217 = vmatpush1.msra.mxu0 0.0
    %1218 = vmatprep.subr.mxu0 0.0
    %1219 = vmatpush1.msra.mxu0 0.0
    %1220 = vmatprep.subr.mxu0 0.0
    %1221 = vmatpush1.msra.mxu0 0.0
    %1222 = vmatprep.subr.mxu0 0.0
    %1223 = vmatpush1.msra.mxu0 0.0
    %1224 = vmatprep.subr.mxu0 0.0
    %1225 = vmatpush1.msra.mxu0 0.0
    %1226 = vmatprep.subr.mxu0 0.0
    %1227 = vmatpush1.msra.mxu0 0.0
    %1228 = vmatprep.subr.mxu0 0.0
    %1229 = vmatpush1.msra.mxu0 0.0
    %1230 = vmatprep.subr.mxu0 0.0
    %1231 = vmatpush1.msra.mxu0 0.0
    %1232 = vmatprep.subr.mxu0 0.0
    %1233 = vmatpush1.msra.mxu0 0.0
    %1234 = vmatprep.subr.mxu0 0.0
    %1235 = vmatpush1.msra.mxu0 0.0
    %1236 = vmatprep.subr.mxu0 0.0
    %1237 = vmatpush1.msra.mxu0 0.0
    %1238 = vmatprep.subr.mxu0 0.0
    %1239 = vmatpush1.msra.mxu0 0.0
    %1240 = vmatprep.subr.mxu0 0.0
    %1241 = vmatpush1.msra.mxu0 0.0
    %1242 = vmatprep.subr.mxu0 0.0
    %1243 = vmatpush1.msra.mxu0 0.0
    %1244 = vmatprep.subr.mxu0 0.0
    %1245 = vmatpush1.msra.mxu0 0.0
    %1246 = vmatprep.subr.mxu0 0.0
    %1247 = vmatpush1.msra.mxu0 0.0
    %1248 = vmatprep.subr.mxu0 0.0
    %1249 = vmatpush1.msra.mxu0 0.0
    %1250 = vmatprep.subr.mxu0 0.0
    %1251 = vmatpush1.msra.mxu0 0.0
    %1252 = vmatprep.subr.mxu0 0.0
    %1253 = vmatpush1.msra.mxu0 0.0
    %1254 = vmatprep.subr.mxu0 0.0
    %1255 = vmatpush1.msra.mxu0 0.0
    %1256 = vmatprep.subr.mxu0 0.0
    %1257 = vmatpush1.msra.mxu0 0.0
    %1258 = vmatprep.subr.mxu0 0.0
    %1259 = vmatpush1.msra.mxu0 0.0
    %1260 = vmatprep.subr.mxu0 0.0
    %1261 = vmatpush1.msra.mxu0 0.0
    %1262 = vmatprep.subr.mxu0 0.0
    %1263 = vmatpush1.msra.mxu0 0.0
    %1264 = vmatprep.subr.mxu0 0.0
    %1265 = vmatpush1.msra.mxu0 0.0
    %1266 = vmatprep.subr.mxu0 0.0
    %1267 = vmatpush1.msra.mxu0 0.0
    %1268 = vmatprep.subr.mxu0 0.0
    %1269 = vmatpush1.msra.mxu0 0.0
    %1270 = vmatprep.subr.mxu0 0.0
    %1271 = vmatpush1.msra.mxu0 0.0
    %1272 = vmatprep.mubr.f32.mxu0 0.0
    %1273 = vmatmul.mubr.f32.gmra.mrb[0].mxu0 %v1064
    %v1274 = vpop.f32.mrb[0].mxu0
    %v1275 = vadd.f32 0.0, %v1274
    %v1276 = vpop.f32.mrb[0].mxu0
    %1277 = vdwg.mxu0
    %v1278 = vadd.f32 %v843, %v1133
    %v1279 = vadd.f32 %v845, %v1135
    %v1280 = vadd.f32 %v914, %v1204
    %v1281 = vadd.f32 %v916, %v1206
    %v1282 = vadd.f32 %v985, %v1275
    %1283 = vrot.lane.b32.xlu0 %v503, 16
    %v1284 = vpop.permute.xlu0 %1283
    %1285 = vrot.lane.b32.xlu0 %v507, 16
    %v1286 = vpop.permute.xlu0 %1285
    %1287 = vrot.lane.b32.xlu0 %v511, 16
    %v1288 = vpop.permute.xlu0 %1287
    %1289 = vrot.lane.b32.xlu0 %v515, 16
    %v1290 = vpop.permute.xlu0 %1289
    %1291 = vrot.lane.b32.xlu0 %v519, 16
    %v1292 = vpop.permute.xlu0 %1291
    %vm1293 = vcmask 130048
    %v1294 = vsel %vm1293, %v1284, %v1286
    %v1295 = vsel %vm1293, %v1286, %v1288
    %v1296 = vsel %vm1293, %v1288, %v1290
    %v1297 = vsel %vm1293, %v1290, %v1292
    %v1303 = vmul.f32 %v493, %v1284
    %v1304 = vmul.f32 %v494, %v1294
    %v1305 = vmul.f32 %v495, %v1295
    %v1306 = vmul.f32 %v496, %v1296
    %v1307 = vmul.f32 %v497, %v1297
    %s1308 = scalar_lea.vmem %s3, 12
    %v1309 = vld [vmem:[%s1308] sm:$0xf]
    %1315 = vrot.lane.b32.xlu0 %v1303, 112
    %v1316 = vpop.permute.xlu0 %1315
    %1317 = vrot.lane.b32.xlu0 %v1304, 112
    %v1318 = vpop.permute.xlu0 %1317
    %1319 = vrot.lane.b32.xlu0 %v1305, 112
    %v1320 = vpop.permute.xlu0 %1319
    %1321 = vrot.lane.b32.xlu0 %v1306, 112
    %v1322 = vpop.permute.xlu0 %1321
    %1323 = vrot.lane.b32.xlu0 %v1307, 112
    %v1324 = vpop.permute.xlu0 %1323
    %vm1325 = vcmask 916480
    %v1326 = vsel %vm1325, %v1316, %v1318
    %v1327 = vsel %vm1325, %v1318, %v1320
    %v1328 = vsel %vm1325, %v1320, %v1322
    %v1329 = vsel %vm1325, %v1322, %v1324
    %v1336 = vsel %vm33, %v1309, 0
    %1338 = vmatprep.subr.mxu0 %v1327
    %1339 = vmatpush1.msra.mxu0 %v1326
    %1340 = vmatprep.subr.mxu0 0.0
    %1341 = vmatpush1.msra.mxu0 0.0
    %1342 = vmatprep.subr.mxu0 0.0
    %1343 = vmatpush1.msra.mxu0 0.0
    %1344 = vmatprep.subr.mxu0 0.0
    %1345 = vmatpush1.msra.mxu0 0.0
    %1346 = vmatprep.subr.mxu0 0.0
    %1347 = vmatpush1.msra.mxu0 0.0
    %1348 = vmatprep.subr.mxu0 0.0
    %1349 = vmatpush1.msra.mxu0 0.0
    %1350 = vmatprep.subr.mxu0 0.0
    %1351 = vmatpush1.msra.mxu0 0.0
    %1352 = vmatprep.subr.mxu0 0.0
    %1353 = vmatpush1.msra.mxu0 0.0
    %1354 = vmatprep.subr.mxu0 0.0
    %1355 = vmatpush1.msra.mxu0 0.0
    %1356 = vmatprep.subr.mxu0 0.0
    %1357 = vmatpush1.msra.mxu0 0.0
    %1358 = vmatprep.subr.mxu0 0.0
    %1359 = vmatpush1.msra.mxu0 0.0
    %1360 = vmatprep.subr.mxu0 0.0
    %1361 = vmatpush1.msra.mxu0 0.0
    %1362 = vmatprep.subr.mxu0 0.0
    %1363 = vmatpush1.msra.mxu0 0.0
    %1364 = vmatprep.subr.mxu0 0.0
    %1365 = vmatpush1.msra.mxu0 0.0
    %1366 = vmatprep.subr.mxu0 0.0
    %1367 = vmatpush1.msra.mxu0 0.0
    %1368 = vmatprep.subr.mxu0 0.0
    %1369 = vmatpush1.msra.mxu0 0.0
    %1370 = vmatprep.subr.mxu0 0.0
    %1371 = vmatpush1.msra.mxu0 0.0
    %1372 = vmatprep.subr.mxu0 0.0
    %1373 = vmatpush1.msra.mxu0 0.0
    %1374 = vmatprep.subr.mxu0 0.0
    %1375 = vmatpush1.msra.mxu0 0.0
    %1376 = vmatprep.subr.mxu0 0.0
    %1377 = vmatpush1.msra.mxu0 0.0
    %1378 = vmatprep.subr.mxu0 0.0
    %1379 = vmatpush1.msra.mxu0 0.0
    %1380 = vmatprep.subr.mxu0 0.0
    %1381 = vmatpush1.msra.mxu0 0.0
    %1382 = vmatprep.subr.mxu0 0.0
    %1383 = vmatpush1.msra.mxu0 0.0
    %1384 = vmatprep.subr.mxu0 0.0
    %1385 = vmatpush1.msra.mxu0 0.0
    %1386 = vmatprep.subr.mxu0 0.0
    %1387 = vmatpush1.msra.mxu0 0.0
    %1388 = vmatprep.subr.mxu0 0.0
    %1389 = vmatpush1.msra.mxu0 0.0
    %1390 = vmatprep.subr.mxu0 0.0
    %1391 = vmatpush1.msra.mxu0 0.0
    %1392 = vmatprep.subr.mxu0 0.0
    %1393 = vmatpush1.msra.mxu0 0.0
    %1394 = vmatprep.subr.mxu0 0.0
    %1395 = vmatpush1.msra.mxu0 0.0
    %1396 = vmatprep.subr.mxu0 0.0
    %1397 = vmatpush1.msra.mxu0 0.0
    %1398 = vmatprep.subr.mxu0 0.0
    %1399 = vmatpush1.msra.mxu0 0.0
    %1400 = vmatprep.subr.mxu0 0.0
    %1401 = vmatpush1.msra.mxu0 0.0
    %1402 = vmatprep.mubr.f32.mxu0 0.0
    %1403 = vmatmul.mubr.f32.gmra.mrb[0].mxu0 %v1336
    %v1404 = vpop.f32.mrb[0].mxu0
    %v1405 = vadd.f32 0.0, %v1404
    %v1406 = vpop.f32.mrb[0].mxu0
    %v1407 = vadd.f32 0.0, %v1406
    %1408 = vdwg.mxu0
    %1409 = vmatprep.subr.mxu0 %v1329
    %1410 = vmatpush1.msra.mxu0 %v1328
    %1411 = vmatprep.subr.mxu0 0.0
    %1412 = vmatpush1.msra.mxu0 0.0
    %1413 = vmatprep.subr.mxu0 0.0
    %1414 = vmatpush1.msra.mxu0 0.0
    %1415 = vmatprep.subr.mxu0 0.0
    %1416 = vmatpush1.msra.mxu0 0.0
    %1417 = vmatprep.subr.mxu0 0.0
    %1418 = vmatpush1.msra.mxu0 0.0
    %1419 = vmatprep.subr.mxu0 0.0
    %1420 = vmatpush1.msra.mxu0 0.0
    %1421 = vmatprep.subr.mxu0 0.0
    %1422 = vmatpush1.msra.mxu0 0.0
    %1423 = vmatprep.subr.mxu0 0.0
    %1424 = vmatpush1.msra.mxu0 0.0
    %1425 = vmatprep.subr.mxu0 0.0
    %1426 = vmatpush1.msra.mxu0 0.0
    %1427 = vmatprep.subr.mxu0 0.0
    %1428 = vmatpush1.msra.mxu0 0.0
    %1429 = vmatprep.subr.mxu0 0.0
    %1430 = vmatpush1.msra.mxu0 0.0
    %1431 = vmatprep.subr.mxu0 0.0
    %1432 = vmatpush1.msra.mxu0 0.0
    %1433 = vmatprep.subr.mxu0 0.0
    %1434 = vmatpush1.msra.mxu0 0.0
    %1435 = vmatprep.subr.mxu0 0.0
    %1436 = vmatpush1.msra.mxu0 0.0
    %1437 = vmatprep.subr.mxu0 0.0
    %1438 = vmatpush1.msra.mxu0 0.0
    %1439 = vmatprep.subr.mxu0 0.0
    %1440 = vmatpush1.msra.mxu0 0.0
    %1441 = vmatprep.subr.mxu0 0.0
    %1442 = vmatpush1.msra.mxu0 0.0
    %1443 = vmatprep.subr.mxu0 0.0
    %1444 = vmatpush1.msra.mxu0 0.0
    %1445 = vmatprep.subr.mxu0 0.0
    %1446 = vmatpush1.msra.mxu0 0.0
    %1447 = vmatprep.subr.mxu0 0.0
    %1448 = vmatpush1.msra.mxu0 0.0
    %1449 = vmatprep.subr.mxu0 0.0
    %1450 = vmatpush1.msra.mxu0 0.0
    %1451 = vmatprep.subr.mxu0 0.0
    %1452 = vmatpush1.msra.mxu0 0.0
    %1453 = vmatprep.subr.mxu0 0.0
    %1454 = vmatpush1.msra.mxu0 0.0
    %1455 = vmatprep.subr.mxu0 0.0
    %1456 = vmatpush1.msra.mxu0 0.0
    %1457 = vmatprep.subr.mxu0 0.0
    %1458 = vmatpush1.msra.mxu0 0.0
    %1459 = vmatprep.subr.mxu0 0.0
    %1460 = vmatpush1.msra.mxu0 0.0
    %1461 = vmatprep.subr.mxu0 0.0
    %1462 = vmatpush1.msra.mxu0 0.0
    %1463 = vmatprep.subr.mxu0 0.0
    %1464 = vmatpush1.msra.mxu0 0.0
    %1465 = vmatprep.subr.mxu0 0.0
    %1466 = vmatpush1.msra.mxu0 0.0
    %1467 = vmatprep.subr.mxu0 0.0
    %1468 = vmatpush1.msra.mxu0 0.0
    %1469 = vmatprep.subr.mxu0 0.0
    %1470 = vmatpush1.msra.mxu0 0.0
    %1471 = vmatprep.subr.mxu0 0.0
    %1472 = vmatpush1.msra.mxu0 0.0
    %1473 = vmatprep.mubr.f32.mxu0 0.0
    %1474 = vmatmul.mubr.f32.gmra.mrb[0].mxu0 %v1336
    %v1475 = vpop.f32.mrb[0].mxu0
    %v1476 = vadd.f32 0.0, %v1475
    %v1477 = vpop.f32.mrb[0].mxu0
    %v1478 = vadd.f32 0.0, %v1477
    %1479 = vdwg.mxu0
    %1480 = vmatprep.subr.mxu0 0.0
    %1481 = vmatpush1.msra.mxu0 %v1324
    %1482 = vmatprep.subr.mxu0 0.0
    %1483 = vmatpush1.msra.mxu0 0.0
    %1484 = vmatprep.subr.mxu0 0.0
    %1485 = vmatpush1.msra.mxu0 0.0
    %1486 = vmatprep.subr.mxu0 0.0
    %1487 = vmatpush1.msra.mxu0 0.0
    %1488 = vmatprep.subr.mxu0 0.0
    %1489 = vmatpush1.msra.mxu0 0.0
    %1490 = vmatprep.subr.mxu0 0.0
    %1491 = vmatpush1.msra.mxu0 0.0
    %1492 = vmatprep.subr.mxu0 0.0
    %1493 = vmatpush1.msra.mxu0 0.0
    %1494 = vmatprep.subr.mxu0 0.0
    %1495 = vmatpush1.msra.mxu0 0.0
    %1496 = vmatprep.subr.mxu0 0.0
    %1497 = vmatpush1.msra.mxu0 0.0
    %1498 = vmatprep.subr.mxu0 0.0
    %1499 = vmatpush1.msra.mxu0 0.0
    %1500 = vmatprep.subr.mxu0 0.0
    %1501 = vmatpush1.msra.mxu0 0.0
    %1502 = vmatprep.subr.mxu0 0.0
    %1503 = vmatpush1.msra.mxu0 0.0
    %1504 = vmatprep.subr.mxu0 0.0
    %1505 = vmatpush1.msra.mxu0 0.0
    %1506 = vmatprep.subr.mxu0 0.0
    %1507 = vmatpush1.msra.mxu0 0.0
    %1508 = vmatprep.subr.mxu0 0.0
    %1509 = vmatpush1.msra.mxu0 0.0
    %1510 = vmatprep.subr.mxu0 0.0
    %1511 = vmatpush1.msra.mxu0 0.0
    %1512 = vmatprep.subr.mxu0 0.0
    %1513 = vmatpush1.msra.mxu0 0.0
    %1514 = vmatprep.subr.mxu0 0.0
    %1515 = vmatpush1.msra.mxu0 0.0
    %1516 = vmatprep.subr.mxu0 0.0
    %1517 = vmatpush1.msra.mxu0 0.0
    %1518 = vmatprep.subr.mxu0 0.0
    %1519 = vmatpush1.msra.mxu0 0.0
    %1520 = vmatprep.subr.mxu0 0.0
    %1521 = vmatpush1.msra.mxu0 0.0
    %1522 = vmatprep.subr.mxu0 0.0
    %1523 = vmatpush1.msra.mxu0 0.0
    %1524 = vmatprep.subr.mxu0 0.0
    %1525 = vmatpush1.msra.mxu0 0.0
    %1526 = vmatprep.subr.mxu0 0.0
    %1527 = vmatpush1.msra.mxu0 0.0
    %1528 = vmatprep.subr.mxu0 0.0
    %1529 = vmatpush1.msra.mxu0 0.0
    %1530 = vmatprep.subr.mxu0 0.0
    %1531 = vmatpush1.msra.mxu0 0.0
    %1532 = vmatprep.subr.mxu0 0.0
    %1533 = vmatpush1.msra.mxu0 0.0
    %1534 = vmatprep.subr.mxu0 0.0
    %1535 = vmatpush1.msra.mxu0 0.0
    %1536 = vmatprep.subr.mxu0 0.0
    %1537 = vmatpush1.msra.mxu0 0.0
    %1538 = vmatprep.subr.mxu0 0.0
    %1539 = vmatpush1.msra.mxu0 0.0
    %1540 = vmatprep.subr.mxu0 0.0
    %1541 = vmatpush1.msra.mxu0 0.0
    %1542 = vmatprep.subr.mxu0 0.0
    %1543 = vmatpush1.msra.mxu0 0.0
    %1544 = vmatprep.mubr.f32.mxu0 0.0
    %1545 = vmatmul.mubr.f32.gmra.mrb[0].mxu0 %v1336
    %v1546 = vpop.f32.mrb[0].mxu0
    %v1547 = vadd.f32 0.0, %v1546
    %v1548 = vpop.f32.mrb[0].mxu0
    %1549 = vdwg.mxu0
    %v1550 = vadd.f32 %v1278, %v1405
    %v1551 = vadd.f32 %v1279, %v1407
    %v1552 = vadd.f32 %v1280, %v1476
    %v1553 = vadd.f32 %v1281, %v1478
    %v1554 = vadd.f32 %v1282, %v1547
    %s1555 = scalar_lea.vmem %s3, 16
    %v1556 = vld [vmem:[%s1555] sm:$0xf]
    %1557 = vrot.lane.b32.xlu0 %v493, 111
    %v1558 = vpop.permute.xlu0 %1557
    %1559 = vrot.lane.b32.xlu0 %v494, 111
    %v1560 = vpop.permute.xlu0 %1559
    %1561 = vrot.lane.b32.xlu0 %v495, 111
    %v1562 = vpop.permute.xlu0 %1561
    %1563 = vrot.lane.b32.xlu0 %v496, 111
    %v1564 = vpop.permute.xlu0 %1563
    %1565 = vrot.lane.b32.xlu0 %v497, 111
    %v1566 = vpop.permute.xlu0 %1565
    %vm1567 = vcmask 908288
    %v1568 = vsel %vm1567, %v1558, %v1560
    %v1569 = vsel %vm1567, %v1560, %v1562
    %v1570 = vsel %vm1567, %v1562, %v1564
    %v1571 = vsel %vm1567, %v1564, %v1566
    %v1578 = vsel %vm33, %v1556, 0
    %1580 = vmatprep.subr.mxu0 %v1569
    %1581 = vmatpush1.msra.mxu0 %v1568
    %1582 = vmatprep.subr.mxu0 0.0
    %1583 = vmatpush1.msra.mxu0 0.0
    %1584 = vmatprep.subr.mxu0 0.0
    %1585 = vmatpush1.msra.mxu0 0.0
    %1586 = vmatprep.subr.mxu0 0.0
    %1587 = vmatpush1.msra.mxu0 0.0
    %1588 = vmatprep.subr.mxu0 0.0
    %1589 = vmatpush1.msra.mxu0 0.0
    %1590 = vmatprep.subr.mxu0 0.0
    %1591 = vmatpush1.msra.mxu0 0.0
    %1592 = vmatprep.subr.mxu0 0.0
    %1593 = vmatpush1.msra.mxu0 0.0
    %1594 = vmatprep.subr.mxu0 0.0
    %1595 = vmatpush1.msra.mxu0 0.0
    %1596 = vmatprep.subr.mxu0 0.0
    %1597 = vmatpush1.msra.mxu0 0.0
    %1598 = vmatprep.subr.mxu0 0.0
    %1599 = vmatpush1.msra.mxu0 0.0
    %1600 = vmatprep.subr.mxu0 0.0
    %1601 = vmatpush1.msra.mxu0 0.0
    %1602 = vmatprep.subr.mxu0 0.0
    %1603 = vmatpush1.msra.mxu0 0.0
    %1604 = vmatprep.subr.mxu0 0.0
    %1605 = vmatpush1.msra.mxu0 0.0
    %1606 = vmatprep.subr.mxu0 0.0
    %1607 = vmatpush1.msra.mxu0 0.0
    %1608 = vmatprep.subr.mxu0 0.0
    %1609 = vmatpush1.msra.mxu0 0.0
    %1610 = vmatprep.subr.mxu0 0.0
    %1611 = vmatpush1.msra.mxu0 0.0
    %1612 = vmatprep.subr.mxu0 0.0
    %1613 = vmatpush1.msra.mxu0 0.0
    %1614 = vmatprep.subr.mxu0 0.0
    %1615 = vmatpush1.msra.mxu0 0.0
    %1616 = vmatprep.subr.mxu0 0.0
    %1617 = vmatpush1.msra.mxu0 0.0
    %1618 = vmatprep.subr.mxu0 0.0
    %1619 = vmatpush1.msra.mxu0 0.0
    %1620 = vmatprep.subr.mxu0 0.0
    %1621 = vmatpush1.msra.mxu0 0.0
    %1622 = vmatprep.subr.mxu0 0.0
    %1623 = vmatpush1.msra.mxu0 0.0
    %1624 = vmatprep.subr.mxu0 0.0
    %1625 = vmatpush1.msra.mxu0 0.0
    %1626 = vmatprep.subr.mxu0 0.0
    %1627 = vmatpush1.msra.mxu0 0.0
    %1628 = vmatprep.subr.mxu0 0.0
    %1629 = vmatpush1.msra.mxu0 0.0
    %1630 = vmatprep.subr.mxu0 0.0
    %1631 = vmatpush1.msra.mxu0 0.0
    %1632 = vmatprep.subr.mxu0 0.0
    %1633 = vmatpush1.msra.mxu0 0.0
    %1634 = vmatprep.subr.mxu0 0.0
    %1635 = vmatpush1.msra.mxu0 0.0
    %1636 = vmatprep.subr.mxu0 0.0
    %1637 = vmatpush1.msra.mxu0 0.0
    %1638 = vmatprep.subr.mxu0 0.0
    %1639 = vmatpush1.msra.mxu0 0.0
    %1640 = vmatprep.subr.mxu0 0.0
    %1641 = vmatpush1.msra.mxu0 0.0
    %1642 = vmatprep.subr.mxu0 0.0
    %1643 = vmatpush1.msra.mxu0 0.0
    %1644 = vmatprep.mubr.f32.mxu0 0.0
    %1645 = vmatmul.mubr.f32.gmra.mrb[0].mxu0 %v1578
    %v1646 = vpop.f32.mrb[0].mxu0
    %v1647 = vadd.f32 0.0, %v1646
    %v1648 = vpop.f32.mrb[0].mxu0
    %v1649 = vadd.f32 0.0, %v1648
    %1650 = vdwg.mxu0
    %1651 = vmatprep.subr.mxu0 %v1571
    %1652 = vmatpush1.msra.mxu0 %v1570
    %1653 = vmatprep.subr.mxu0 0.0
    %1654 = vmatpush1.msra.mxu0 0.0
    %1655 = vmatprep.subr.mxu0 0.0
    %1656 = vmatpush1.msra.mxu0 0.0
    %1657 = vmatprep.subr.mxu0 0.0
    %1658 = vmatpush1.msra.mxu0 0.0
    %1659 = vmatprep.subr.mxu0 0.0
    %1660 = vmatpush1.msra.mxu0 0.0
    %1661 = vmatprep.subr.mxu0 0.0
    %1662 = vmatpush1.msra.mxu0 0.0
    %1663 = vmatprep.subr.mxu0 0.0
    %1664 = vmatpush1.msra.mxu0 0.0
    %1665 = vmatprep.subr.mxu0 0.0
    %1666 = vmatpush1.msra.mxu0 0.0
    %1667 = vmatprep.subr.mxu0 0.0
    %1668 = vmatpush1.msra.mxu0 0.0
    %1669 = vmatprep.subr.mxu0 0.0
    %1670 = vmatpush1.msra.mxu0 0.0
    %1671 = vmatprep.subr.mxu0 0.0
    %1672 = vmatpush1.msra.mxu0 0.0
    %1673 = vmatprep.subr.mxu0 0.0
    %1674 = vmatpush1.msra.mxu0 0.0
    %1675 = vmatprep.subr.mxu0 0.0
    %1676 = vmatpush1.msra.mxu0 0.0
    %1677 = vmatprep.subr.mxu0 0.0
    %1678 = vmatpush1.msra.mxu0 0.0
    %1679 = vmatprep.subr.mxu0 0.0
    %1680 = vmatpush1.msra.mxu0 0.0
    %1681 = vmatprep.subr.mxu0 0.0
    %1682 = vmatpush1.msra.mxu0 0.0
    %1683 = vmatprep.subr.mxu0 0.0
    %1684 = vmatpush1.msra.mxu0 0.0
    %1685 = vmatprep.subr.mxu0 0.0
    %1686 = vmatpush1.msra.mxu0 0.0
    %1687 = vmatprep.subr.mxu0 0.0
    %1688 = vmatpush1.msra.mxu0 0.0
    %1689 = vmatprep.subr.mxu0 0.0
    %1690 = vmatpush1.msra.mxu0 0.0
    %1691 = vmatprep.subr.mxu0 0.0
    %1692 = vmatpush1.msra.mxu0 0.0
    %1693 = vmatprep.subr.mxu0 0.0
    %1694 = vmatpush1.msra.mxu0 0.0
    %1695 = vmatprep.subr.mxu0 0.0
    %1696 = vmatpush1.msra.mxu0 0.0
    %1697 = vmatprep.subr.mxu0 0.0
    %1698 = vmatpush1.msra.mxu0 0.0
    %1699 = vmatprep.subr.mxu0 0.0
    %1700 = vmatpush1.msra.mxu0 0.0
    %1701 = vmatprep.subr.mxu0 0.0
    %1702 = vmatpush1.msra.mxu0 0.0
    %1703 = vmatprep.subr.mxu0 0.0
    %1704 = vmatpush1.msra.mxu0 0.0
    %1705 = vmatprep.subr.mxu0 0.0
    %1706 = vmatpush1.msra.mxu0 0.0
    %1707 = vmatprep.subr.mxu0 0.0
    %1708 = vmatpush1.msra.mxu0 0.0
    %1709 = vmatprep.subr.mxu0 0.0
    %1710 = vmatpush1.msra.mxu0 0.0
    %1711 = vmatprep.subr.mxu0 0.0
    %1712 = vmatpush1.msra.mxu0 0.0
    %1713 = vmatprep.subr.mxu0 0.0
    %1714 = vmatpush1.msra.mxu0 0.0
    %1715 = vmatprep.mubr.f32.mxu0 0.0
    %1716 = vmatmul.mubr.f32.gmra.mrb[0].mxu0 %v1578
    %v1717 = vpop.f32.mrb[0].mxu0
    %v1718 = vadd.f32 0.0, %v1717
    %v1719 = vpop.f32.mrb[0].mxu0
    %v1720 = vadd.f32 0.0, %v1719
    %1721 = vdwg.mxu0
    %1722 = vmatprep.subr.mxu0 0.0
    %1723 = vmatpush1.msra.mxu0 %v1566
    %1724 = vmatprep.subr.mxu0 0.0
    %1725 = vmatpush1.msra.mxu0 0.0
    %1726 = vmatprep.subr.mxu0 0.0
    %1727 = vmatpush1.msra.mxu0 0.0
    %1728 = vmatprep.subr.mxu0 0.0
    %1729 = vmatpush1.msra.mxu0 0.0
    %1730 = vmatprep.subr.mxu0 0.0
    %1731 = vmatpush1.msra.mxu0 0.0
    %1732 = vmatprep.subr.mxu0 0.0
    %1733 = vmatpush1.msra.mxu0 0.0
    %1734 = vmatprep.subr.mxu0 0.0
    %1735 = vmatpush1.msra.mxu0 0.0
    %1736 = vmatprep.subr.mxu0 0.0
    %1737 = vmatpush1.msra.mxu0 0.0
    %1738 = vmatprep.subr.mxu0 0.0
    %1739 = vmatpush1.msra.mxu0 0.0
    %1740 = vmatprep.subr.mxu0 0.0
    %1741 = vmatpush1.msra.mxu0 0.0
    %1742 = vmatprep.subr.mxu0 0.0
    %1743 = vmatpush1.msra.mxu0 0.0
    %1744 = vmatprep.subr.mxu0 0.0
    %1745 = vmatpush1.msra.mxu0 0.0
    %1746 = vmatprep.subr.mxu0 0.0
    %1747 = vmatpush1.msra.mxu0 0.0
    %1748 = vmatprep.subr.mxu0 0.0
    %1749 = vmatpush1.msra.mxu0 0.0
    %1750 = vmatprep.subr.mxu0 0.0
    %1751 = vmatpush1.msra.mxu0 0.0
    %1752 = vmatprep.subr.mxu0 0.0
    %1753 = vmatpush1.msra.mxu0 0.0
    %1754 = vmatprep.subr.mxu0 0.0
    %1755 = vmatpush1.msra.mxu0 0.0
    %1756 = vmatprep.subr.mxu0 0.0
    %1757 = vmatpush1.msra.mxu0 0.0
    %1758 = vmatprep.subr.mxu0 0.0
    %1759 = vmatpush1.msra.mxu0 0.0
    %1760 = vmatprep.subr.mxu0 0.0
    %1761 = vmatpush1.msra.mxu0 0.0
    %1762 = vmatprep.subr.mxu0 0.0
    %1763 = vmatpush1.msra.mxu0 0.0
    %1764 = vmatprep.subr.mxu0 0.0
    %1765 = vmatpush1.msra.mxu0 0.0
    %1766 = vmatprep.subr.mxu0 0.0
    %1767 = vmatpush1.msra.mxu0 0.0
    %1768 = vmatprep.subr.mxu0 0.0
    %1769 = vmatpush1.msra.mxu0 0.0
    %1770 = vmatprep.subr.mxu0 0.0
    %1771 = vmatpush1.msra.mxu0 0.0
    %1772 = vmatprep.subr.mxu0 0.0
    %1773 = vmatpush1.msra.mxu0 0.0
    %1774 = vmatprep.subr.mxu0 0.0
    %1775 = vmatpush1.msra.mxu0 0.0
    %1776 = vmatprep.subr.mxu0 0.0
    %1777 = vmatpush1.msra.mxu0 0.0
    %1778 = vmatprep.subr.mxu0 0.0
    %1779 = vmatpush1.msra.mxu0 0.0
    %1780 = vmatprep.subr.mxu0 0.0
    %1781 = vmatpush1.msra.mxu0 0.0
    %1782 = vmatprep.subr.mxu0 0.0
    %1783 = vmatpush1.msra.mxu0 0.0
    %1784 = vmatprep.subr.mxu0 0.0
    %1785 = vmatpush1.msra.mxu0 0.0
    %1786 = vmatprep.mubr.f32.mxu0 0.0
    %1787 = vmatmul.mubr.f32.gmra.mrb[0].mxu0 %v1578
    %v1788 = vpop.f32.mrb[0].mxu0
    %v1789 = vadd.f32 0.0, %v1788
    %v1790 = vpop.f32.mrb[0].mxu0
    %1791 = vdwg.mxu0
    %v1792 = vadd.f32 %v1550, %v1647
    %v1793 = vadd.f32 %v1551, %v1649
    %v1794 = vadd.f32 %v1552, %v1718
    %v1795 = vadd.f32 %v1553, %v1720
    %v1796 = vadd.f32 %v1554, %v1789
    %1797 = vrot.lane.b32.xlu0 %v994, 18
    %v1798 = vpop.permute.xlu0 %1797
    %1799 = vrot.lane.b32.xlu0 %v998, 18
    %v1800 = vpop.permute.xlu0 %1799
    %1801 = vrot.lane.b32.xlu0 %v1002, 18
    %v1802 = vpop.permute.xlu0 %1801
    %1803 = vrot.lane.b32.xlu0 %v1006, 18
    %v1804 = vpop.permute.xlu0 %1803
    %1805 = vrot.lane.b32.xlu0 %v1010, 18
    %v1806 = vpop.permute.xlu0 %1805
    %vm1807 = vcmask 146432
    %v1808 = vsel %vm1807, %v1798, %v1800
    %v1809 = vsel %vm1807, %v1800, %v1802
    %v1810 = vsel %vm1807, %v1802, %v1804
    %v1811 = vsel %vm1807, %v1804, %v1806
    %v1817 = vmul.f32 %v493, %v1798
    %v1818 = vmul.f32 %v494, %v1808
    %v1819 = vmul.f32 %v495, %v1809
    %v1820 = vmul.f32 %v496, %v1810
    %v1821 = vmul.f32 %v497, %v1811
    %s1822 = scalar_lea.vmem %s3, 20
    %v1823 = vld [vmem:[%s1822] sm:$0xf]
    %1829 = vrot.lane.b32.xlu0 %v1817, 110
    %v1830 = vpop.permute.xlu0 %1829
    %1831 = vrot.lane.b32.xlu0 %v1818, 110
    %v1832 = vpop.permute.xlu0 %1831
    %1833 = vrot.lane.b32.xlu0 %v1819, 110
    %v1834 = vpop.permute.xlu0 %1833
    %1835 = vrot.lane.b32.xlu0 %v1820, 110
    %v1836 = vpop.permute.xlu0 %1835
    %1837 = vrot.lane.b32.xlu0 %v1821, 110
    %v1838 = vpop.permute.xlu0 %1837
    %vm1839 = vcmask 900096
    %v1840 = vsel %vm1839, %v1830, %v1832
    %v1841 = vsel %vm1839, %v1832, %v1834
    %v1842 = vsel %vm1839, %v1834, %v1836
    %v1843 = vsel %vm1839, %v1836, %v1838
    %v1850 = vsel %vm33, %v1823, 0
    %1852 = vmatprep.subr.mxu0 %v1841
    %1853 = vmatpush1.msra.mxu0 %v1840
    %1854 = vmatprep.subr.mxu0 0.0
    %1855 = vmatpush1.msra.mxu0 0.0
    %1856 = vmatprep.subr.mxu0 0.0
    %1857 = vmatpush1.msra.mxu0 0.0
    %1858 = vmatprep.subr.mxu0 0.0
    %1859 = vmatpush1.msra.mxu0 0.0
    %1860 = vmatprep.subr.mxu0 0.0
    %1861 = vmatpush1.msra.mxu0 0.0
    %1862 = vmatprep.subr.mxu0 0.0
    %1863 = vmatpush1.msra.mxu0 0.0
    %1864 = vmatprep.subr.mxu0 0.0
    %1865 = vmatpush1.msra.mxu0 0.0
    %1866 = vmatprep.subr.mxu0 0.0
    %1867 = vmatpush1.msra.mxu0 0.0
    %1868 = vmatprep.subr.mxu0 0.0
    %1869 = vmatpush1.msra.mxu0 0.0
    %1870 = vmatprep.subr.mxu0 0.0
    %1871 = vmatpush1.msra.mxu0 0.0
    %1872 = vmatprep.subr.mxu0 0.0
    %1873 = vmatpush1.msra.mxu0 0.0
    %1874 = vmatprep.subr.mxu0 0.0
    %1875 = vmatpush1.msra.mxu0 0.0
    %1876 = vmatprep.subr.mxu0 0.0
    %1877 = vmatpush1.msra.mxu0 0.0
    %1878 = vmatprep.subr.mxu0 0.0
    %1879 = vmatpush1.msra.mxu0 0.0
    %1880 = vmatprep.subr.mxu0 0.0
    %1881 = vmatpush1.msra.mxu0 0.0
    %1882 = vmatprep.subr.mxu0 0.0
    %1883 = vmatpush1.msra.mxu0 0.0
    %1884 = vmatprep.subr.mxu0 0.0
    %1885 = vmatpush1.msra.mxu0 0.0
    %1886 = vmatprep.subr.mxu0 0.0
    %1887 = vmatpush1.msra.mxu0 0.0
    %1888 = vmatprep.subr.mxu0 0.0
    %1889 = vmatpush1.msra.mxu0 0.0
    %1890 = vmatprep.subr.mxu0 0.0
    %1891 = vmatpush1.msra.mxu0 0.0
    %1892 = vmatprep.subr.mxu0 0.0
    %1893 = vmatpush1.msra.mxu0 0.0
    %1894 = vmatprep.subr.mxu0 0.0
    %1895 = vmatpush1.msra.mxu0 0.0
    %1896 = vmatprep.subr.mxu0 0.0
    %1897 = vmatpush1.msra.mxu0 0.0
    %1898 = vmatprep.subr.mxu0 0.0
    %1899 = vmatpush1.msra.mxu0 0.0
    %1900 = vmatprep.subr.mxu0 0.0
    %1901 = vmatpush1.msra.mxu0 0.0
    %1902 = vmatprep.subr.mxu0 0.0
    %1903 = vmatpush1.msra.mxu0 0.0
    %1904 = vmatprep.subr.mxu0 0.0
    %1905 = vmatpush1.msra.mxu0 0.0
    %1906 = vmatprep.subr.mxu0 0.0
    %1907 = vmatpush1.msra.mxu0 0.0
    %1908 = vmatprep.subr.mxu0 0.0
    %1909 = vmatpush1.msra.mxu0 0.0
    %1910 = vmatprep.subr.mxu0 0.0
    %1911 = vmatpush1.msra.mxu0 0.0
    %1912 = vmatprep.subr.mxu0 0.0
    %1913 = vmatpush1.msra.mxu0 0.0
    %1914 = vmatprep.subr.mxu0 0.0
    %1915 = vmatpush1.msra.mxu0 0.0
    %1916 = vmatprep.mubr.f32.mxu0 0.0
    %1917 = vmatmul.mubr.f32.gmra.mrb[0].mxu0 %v1850
    %v1918 = vpop.f32.mrb[0].mxu0
    %v1919 = vadd.f32 0.0, %v1918
    %v1920 = vpop.f32.mrb[0].mxu0
    %v1921 = vadd.f32 0.0, %v1920
    %1922 = vdwg.mxu0
    %1923 = vmatprep.subr.mxu0 %v1843
    %1924 = vmatpush1.msra.mxu0 %v1842
    %1925 = vmatprep.subr.mxu0 0.0
    %1926 = vmatpush1.msra.mxu0 0.0
    %1927 = vmatprep.subr.mxu0 0.0
    %1928 = vmatpush1.msra.mxu0 0.0
    %1929 = vmatprep.subr.mxu0 0.0
    %1930 = vmatpush1.msra.mxu0 0.0
    %1931 = vmatprep.subr.mxu0 0.0
    %1932 = vmatpush1.msra.mxu0 0.0
    %1933 = vmatprep.subr.mxu0 0.0
    %1934 = vmatpush1.msra.mxu0 0.0
    %1935 = vmatprep.subr.mxu0 0.0
    %1936 = vmatpush1.msra.mxu0 0.0
    %1937 = vmatprep.subr.mxu0 0.0
    %1938 = vmatpush1.msra.mxu0 0.0
    %1939 = vmatprep.subr.mxu0 0.0
    %1940 = vmatpush1.msra.mxu0 0.0
    %1941 = vmatprep.subr.mxu0 0.0
    %1942 = vmatpush1.msra.mxu0 0.0
    %1943 = vmatprep.subr.mxu0 0.0
    %1944 = vmatpush1.msra.mxu0 0.0
    %1945 = vmatprep.subr.mxu0 0.0
    %1946 = vmatpush1.msra.mxu0 0.0
    %1947 = vmatprep.subr.mxu0 0.0
    %1948 = vmatpush1.msra.mxu0 0.0
    %1949 = vmatprep.subr.mxu0 0.0
    %1950 = vmatpush1.msra.mxu0 0.0
    %1951 = vmatprep.subr.mxu0 0.0
    %1952 = vmatpush1.msra.mxu0 0.0
    %1953 = vmatprep.subr.mxu0 0.0
    %1954 = vmatpush1.msra.mxu0 0.0
    %1955 = vmatprep.subr.mxu0 0.0
    %1956 = vmatpush1.msra.mxu0 0.0
    %1957 = vmatprep.subr.mxu0 0.0
    %1958 = vmatpush1.msra.mxu0 0.0
    %1959 = vmatprep.subr.mxu0 0.0
    %1960 = vmatpush1.msra.mxu0 0.0
    %1961 = vmatprep.subr.mxu0 0.0
    %1962 = vmatpush1.msra.mxu0 0.0
    %1963 = vmatprep.subr.mxu0 0.0
    %1964 = vmatpush1.msra.mxu0 0.0
    %1965 = vmatprep.subr.mxu0 0.0
    %1966 = vmatpush1.msra.mxu0 0.0
    %1967 = vmatprep.subr.mxu0 0.0
    %1968 = vmatpush1.msra.mxu0 0.0
    %1969 = vmatprep.subr.mxu0 0.0
    %1970 = vmatpush1.msra.mxu0 0.0
    %1971 = vmatprep.subr.mxu0 0.0
    %1972 = vmatpush1.msra.mxu0 0.0
    %1973 = vmatprep.subr.mxu0 0.0
    %1974 = vmatpush1.msra.mxu0 0.0
    %1975 = vmatprep.subr.mxu0 0.0
    %1976 = vmatpush1.msra.mxu0 0.0
    %1977 = vmatprep.subr.mxu0 0.0
    %1978 = vmatpush1.msra.mxu0 0.0
    %1979 = vmatprep.subr.mxu0 0.0
    %1980 = vmatpush1.msra.mxu0 0.0
    %1981 = vmatprep.subr.mxu0 0.0
    %1982 = vmatpush1.msra.mxu0 0.0
    %1983 = vmatprep.subr.mxu0 0.0
    %1984 = vmatpush1.msra.mxu0 0.0
    %1985 = vmatprep.subr.mxu0 0.0
    %1986 = vmatpush1.msra.mxu0 0.0
    %1987 = vmatprep.mubr.f32.mxu0 0.0
    %1988 = vmatmul.mubr.f32.gmra.mrb[0].mxu0 %v1850
    %v1989 = vpop.f32.mrb[0].mxu0
    %v1990 = vadd.f32 0.0, %v1989
    %v1991 = vpop.f32.mrb[0].mxu0
    %v1992 = vadd.f32 0.0, %v1991
    %1993 = vdwg.mxu0
    %1994 = vmatprep.subr.mxu0 0.0
    %1995 = vmatpush1.msra.mxu0 %v1838
    %1996 = vmatprep.subr.mxu0 0.0
    %1997 = vmatpush1.msra.mxu0 0.0
    %1998 = vmatprep.subr.mxu0 0.0
    %1999 = vmatpush1.msra.mxu0 0.0
    %2000 = vmatprep.subr.mxu0 0.0
    %2001 = vmatpush1.msra.mxu0 0.0
    %2002 = vmatprep.subr.mxu0 0.0
    %2003 = vmatpush1.msra.mxu0 0.0
    %2004 = vmatprep.subr.mxu0 0.0
    %2005 = vmatpush1.msra.mxu0 0.0
    %2006 = vmatprep.subr.mxu0 0.0
    %2007 = vmatpush1.msra.mxu0 0.0
    %2008 = vmatprep.subr.mxu0 0.0
    %2009 = vmatpush1.msra.mxu0 0.0
    %2010 = vmatprep.subr.mxu0 0.0
    %2011 = vmatpush1.msra.mxu0 0.0
    %2012 = vmatprep.subr.mxu0 0.0
    %2013 = vmatpush1.msra.mxu0 0.0
    %2014 = vmatprep.subr.mxu0 0.0
    %2015 = vmatpush1.msra.mxu0 0.0
    %2016 = vmatprep.subr.mxu0 0.0
    %2017 = vmatpush1.msra.mxu0 0.0
    %2018 = vmatprep.subr.mxu0 0.0
    %2019 = vmatpush1.msra.mxu0 0.0
    %2020 = vmatprep.subr.mxu0 0.0
    %2021 = vmatpush1.msra.mxu0 0.0
    %2022 = vmatprep.subr.mxu0 0.0
    %2023 = vmatpush1.msra.mxu0 0.0
    %2024 = vmatprep.subr.mxu0 0.0
    %2025 = vmatpush1.msra.mxu0 0.0
    %2026 = vmatprep.subr.mxu0 0.0
    %2027 = vmatpush1.msra.mxu0 0.0
    %2028 = vmatprep.subr.mxu0 0.0
    %2029 = vmatpush1.msra.mxu0 0.0
    %2030 = vmatprep.subr.mxu0 0.0
    %2031 = vmatpush1.msra.mxu0 0.0
    %2032 = vmatprep.subr.mxu0 0.0
    %2033 = vmatpush1.msra.mxu0 0.0
    %2034 = vmatprep.subr.mxu0 0.0
    %2035 = vmatpush1.msra.mxu0 0.0
    %2036 = vmatprep.subr.mxu0 0.0
    %2037 = vmatpush1.msra.mxu0 0.0
    %2038 = vmatprep.subr.mxu0 0.0
    %2039 = vmatpush1.msra.mxu0 0.0
    %2040 = vmatprep.subr.mxu0 0.0
    %2041 = vmatpush1.msra.mxu0 0.0
    %2042 = vmatprep.subr.mxu0 0.0
    %2043 = vmatpush1.msra.mxu0 0.0
    %2044 = vmatprep.subr.mxu0 0.0
    %2045 = vmatpush1.msra.mxu0 0.0
    %2046 = vmatprep.subr.mxu0 0.0
    %2047 = vmatpush1.msra.mxu0 0.0
    %2048 = vmatprep.subr.mxu0 0.0
    %2049 = vmatpush1.msra.mxu0 0.0
    %2050 = vmatprep.subr.mxu0 0.0
    %2051 = vmatpush1.msra.mxu0 0.0
    %2052 = vmatprep.subr.mxu0 0.0
    %2053 = vmatpush1.msra.mxu0 0.0
    %2054 = vmatprep.subr.mxu0 0.0
    %2055 = vmatpush1.msra.mxu0 0.0
    %2056 = vmatprep.subr.mxu0 0.0
    %2057 = vmatpush1.msra.mxu0 0.0
    %2058 = vmatprep.mubr.f32.mxu0 0.0
    %2059 = vmatmul.mubr.f32.gmra.mrb[0].mxu0 %v1850
    %v2060 = vpop.f32.mrb[0].mxu0
    %v2061 = vadd.f32 0.0, %v2060
    %v2062 = vpop.f32.mrb[0].mxu0
    %2063 = vdwg.mxu0
    %v2064 = vadd.f32 %v1792, %v1919
    %v2065 = vadd.f32 %v1793, %v1921
    %v2066 = vadd.f32 %v1794, %v1990
    %v2067 = vadd.f32 %v1795, %v1992
    %v2068 = vadd.f32 %v1796, %v2061
    %2069 = vrot.lane.b32.xlu0 %v503, 32
    %v2070 = vpop.permute.xlu0 %2069
    %2071 = vrot.lane.b32.xlu0 %v507, 32
    %v2072 = vpop.permute.xlu0 %2071
    %2073 = vrot.lane.b32.xlu0 %v511, 32
    %v2074 = vpop.permute.xlu0 %2073
    %2075 = vrot.lane.b32.xlu0 %v515, 32
    %v2076 = vpop.permute.xlu0 %2075
    %2077 = vrot.lane.b32.xlu0 %v519, 32
    %v2078 = vpop.permute.xlu0 %2077
    %vm2079 = vcmask 261120
    %v2080 = vsel %vm2079, %v2070, %v2072
    %v2081 = vsel %vm2079, %v2072, %v2074
    %v2082 = vsel %vm2079, %v2074, %v2076
    %v2083 = vsel %vm2079, %v2076, %v2078
    %v2089 = vmul.f32 %v493, %v2070
    %v2090 = vmul.f32 %v494, %v2080
    %v2091 = vmul.f32 %v495, %v2081
    %v2092 = vmul.f32 %v496, %v2082
    %v2093 = vmul.f32 %v497, %v2083
    %s2094 = scalar_lea.vmem %s3, 24
    %v2095 = vld [vmem:[%s2094] sm:$0xf]
    %2101 = vrot.lane.b32.xlu0 %v2089, 96
    %v2102 = vpop.permute.xlu0 %2101
    %2103 = vrot.lane.b32.xlu0 %v2090, 96
    %v2104 = vpop.permute.xlu0 %2103
    %2105 = vrot.lane.b32.xlu0 %v2091, 96
    %v2106 = vpop.permute.xlu0 %2105
    %2107 = vrot.lane.b32.xlu0 %v2092, 96
    %v2108 = vpop.permute.xlu0 %2107
    %2109 = vrot.lane.b32.xlu0 %v2093, 96
    %v2110 = vpop.permute.xlu0 %2109
    %vm2111 = vcmask 785408
    %v2112 = vsel %vm2111, %v2102, %v2104
    %v2113 = vsel %vm2111, %v2104, %v2106
    %v2114 = vsel %vm2111, %v2106, %v2108
    %v2115 = vsel %vm2111, %v2108, %v2110
    %v2122 = vsel %vm33, %v2095, 0
    %2124 = vmatprep.subr.mxu0 %v2113
    %2125 = vmatpush1.msra.mxu0 %v2112
    %2126 = vmatprep.subr.mxu0 0.0
    %2127 = vmatpush1.msra.mxu0 0.0
    %2128 = vmatprep.subr.mxu0 0.0
    %2129 = vmatpush1.msra.mxu0 0.0
    %2130 = vmatprep.subr.mxu0 0.0
    %2131 = vmatpush1.msra.mxu0 0.0
    %2132 = vmatprep.subr.mxu0 0.0
    %2133 = vmatpush1.msra.mxu0 0.0
    %2134 = vmatprep.subr.mxu0 0.0
    %2135 = vmatpush1.msra.mxu0 0.0
    %2136 = vmatprep.subr.mxu0 0.0
    %2137 = vmatpush1.msra.mxu0 0.0
    %2138 = vmatprep.subr.mxu0 0.0
    %2139 = vmatpush1.msra.mxu0 0.0
    %2140 = vmatprep.subr.mxu0 0.0
    %2141 = vmatpush1.msra.mxu0 0.0
    %2142 = vmatprep.subr.mxu0 0.0
    %2143 = vmatpush1.msra.mxu0 0.0
    %2144 = vmatprep.subr.mxu0 0.0
    %2145 = vmatpush1.msra.mxu0 0.0
    %2146 = vmatprep.subr.mxu0 0.0
    %2147 = vmatpush1.msra.mxu0 0.0
    %2148 = vmatprep.subr.mxu0 0.0
    %2149 = vmatpush1.msra.mxu0 0.0
    %2150 = vmatprep.subr.mxu0 0.0
    %2151 = vmatpush1.msra.mxu0 0.0
    %2152 = vmatprep.subr.mxu0 0.0
    %2153 = vmatpush1.msra.mxu0 0.0
    %2154 = vmatprep.subr.mxu0 0.0
    %2155 = vmatpush1.msra.mxu0 0.0
    %2156 = vmatprep.subr.mxu0 0.0
    %2157 = vmatpush1.msra.mxu0 0.0
    %2158 = vmatprep.subr.mxu0 0.0
    %2159 = vmatpush1.msra.mxu0 0.0
    %2160 = vmatprep.subr.mxu0 0.0
    %2161 = vmatpush1.msra.mxu0 0.0
    %2162 = vmatprep.subr.mxu0 0.0
    %2163 = vmatpush1.msra.mxu0 0.0
    %2164 = vmatprep.subr.mxu0 0.0
    %2165 = vmatpush1.msra.mxu0 0.0
    %2166 = vmatprep.subr.mxu0 0.0
    %2167 = vmatpush1.msra.mxu0 0.0
    %2168 = vmatprep.subr.mxu0 0.0
    %2169 = vmatpush1.msra.mxu0 0.0
    %2170 = vmatprep.subr.mxu0 0.0
    %2171 = vmatpush1.msra.mxu0 0.0
    %2172 = vmatprep.subr.mxu0 0.0
    %2173 = vmatpush1.msra.mxu0 0.0
    %2174 = vmatprep.subr.mxu0 0.0
    %2175 = vmatpush1.msra.mxu0 0.0
    %2176 = vmatprep.subr.mxu0 0.0
    %2177 = vmatpush1.msra.mxu0 0.0
    %2178 = vmatprep.subr.mxu0 0.0
    %2179 = vmatpush1.msra.mxu0 0.0
    %2180 = vmatprep.subr.mxu0 0.0
    %2181 = vmatpush1.msra.mxu0 0.0
    %2182 = vmatprep.subr.mxu0 0.0
    %2183 = vmatpush1.msra.mxu0 0.0
    %2184 = vmatprep.subr.mxu0 0.0
    %2185 = vmatpush1.msra.mxu0 0.0
    %2186 = vmatprep.subr.mxu0 0.0
    %2187 = vmatpush1.msra.mxu0 0.0
    %2188 = vmatprep.mubr.f32.mxu0 0.0
    %2189 = vmatmul.mubr.f32.gmra.mrb[0].mxu0 %v2122
    %v2190 = vpop.f32.mrb[0].mxu0
    %v2191 = vadd.f32 0.0, %v2190
    %v2192 = vpop.f32.mrb[0].mxu0
    %v2193 = vadd.f32 0.0, %v2192
    %2194 = vdwg.mxu0
    %2195 = vmatprep.subr.mxu0 %v2115
    %2196 = vmatpush1.msra.mxu0 %v2114
    %2197 = vmatprep.subr.mxu0 0.0
    %2198 = vmatpush1.msra.mxu0 0.0
    %2199 = vmatprep.subr.mxu0 0.0
    %2200 = vmatpush1.msra.mxu0 0.0
    %2201 = vmatprep.subr.mxu0 0.0
    %2202 = vmatpush1.msra.mxu0 0.0
    %2203 = vmatprep.subr.mxu0 0.0
    %2204 = vmatpush1.msra.mxu0 0.0
    %2205 = vmatprep.subr.mxu0 0.0
    %2206 = vmatpush1.msra.mxu0 0.0
    %2207 = vmatprep.subr.mxu0 0.0
    %2208 = vmatpush1.msra.mxu0 0.0
    %2209 = vmatprep.subr.mxu0 0.0
    %2210 = vmatpush1.msra.mxu0 0.0
    %2211 = vmatprep.subr.mxu0 0.0
    %2212 = vmatpush1.msra.mxu0 0.0
    %2213 = vmatprep.subr.mxu0 0.0
    %2214 = vmatpush1.msra.mxu0 0.0
    %2215 = vmatprep.subr.mxu0 0.0
    %2216 = vmatpush1.msra.mxu0 0.0
    %2217 = vmatprep.subr.mxu0 0.0
    %2218 = vmatpush1.msra.mxu0 0.0
    %2219 = vmatprep.subr.mxu0 0.0
    %2220 = vmatpush1.msra.mxu0 0.0
    %2221 = vmatprep.subr.mxu0 0.0
    %2222 = vmatpush1.msra.mxu0 0.0
    %2223 = vmatprep.subr.mxu0 0.0
    %2224 = vmatpush1.msra.mxu0 0.0
    %2225 = vmatprep.subr.mxu0 0.0
    %2226 = vmatpush1.msra.mxu0 0.0
    %2227 = vmatprep.subr.mxu0 0.0
    %2228 = vmatpush1.msra.mxu0 0.0
    %2229 = vmatprep.subr.mxu0 0.0
    %2230 = vmatpush1.msra.mxu0 0.0
    %2231 = vmatprep.subr.mxu0 0.0
    %2232 = vmatpush1.msra.mxu0 0.0
    %2233 = vmatprep.subr.mxu0 0.0
    %2234 = vmatpush1.msra.mxu0 0.0
    %2235 = vmatprep.subr.mxu0 0.0
    %2236 = vmatpush1.msra.mxu0 0.0
    %2237 = vmatprep.subr.mxu0 0.0
    %2238 = vmatpush1.msra.mxu0 0.0
    %2239 = vmatprep.subr.mxu0 0.0
    %2240 = vmatpush1.msra.mxu0 0.0
    %2241 = vmatprep.subr.mxu0 0.0
    %2242 = vmatpush1.msra.mxu0 0.0
    %2243 = vmatprep.subr.mxu0 0.0
    %2244 = vmatpush1.msra.mxu0 0.0
    %2245 = vmatprep.subr.mxu0 0.0
    %2246 = vmatpush1.msra.mxu0 0.0
    %2247 = vmatprep.subr.mxu0 0.0
    %2248 = vmatpush1.msra.mxu0 0.0
    %2249 = vmatprep.subr.mxu0 0.0
    %2250 = vmatpush1.msra.mxu0 0.0
    %2251 = vmatprep.subr.mxu0 0.0
    %2252 = vmatpush1.msra.mxu0 0.0
    %2253 = vmatprep.subr.mxu0 0.0
    %2254 = vmatpush1.msra.mxu0 0.0
    %2255 = vmatprep.subr.mxu0 0.0
    %2256 = vmatpush1.msra.mxu0 0.0
    %2257 = vmatprep.subr.mxu0 0.0
    %2258 = vmatpush1.msra.mxu0 0.0
    %2259 = vmatprep.mubr.f32.mxu0 0.0
    %2260 = vmatmul.mubr.f32.gmra.mrb[0].mxu0 %v2122
    %v2261 = vpop.f32.mrb[0].mxu0
    %v2262 = vadd.f32 0.0, %v2261
    %v2263 = vpop.f32.mrb[0].mxu0
    %v2264 = vadd.f32 0.0, %v2263
    %2265 = vdwg.mxu0
    %2266 = vmatprep.subr.mxu0 0.0
    %2267 = vmatpush1.msra.mxu0 %v2110
    %2268 = vmatprep.subr.mxu0 0.0
    %2269 = vmatpush1.msra.mxu0 0.0
    %2270 = vmatprep.subr.mxu0 0.0
    %2271 = vmatpush1.msra.mxu0 0.0
    %2272 = vmatprep.subr.mxu0 0.0
    %2273 = vmatpush1.msra.mxu0 0.0
    %2274 = vmatprep.subr.mxu0 0.0
    %2275 = vmatpush1.msra.mxu0 0.0
    %2276 = vmatprep.subr.mxu0 0.0
    %2277 = vmatpush1.msra.mxu0 0.0
    %2278 = vmatprep.subr.mxu0 0.0
    %2279 = vmatpush1.msra.mxu0 0.0
    %2280 = vmatprep.subr.mxu0 0.0
    %2281 = vmatpush1.msra.mxu0 0.0
    %2282 = vmatprep.subr.mxu0 0.0
    %2283 = vmatpush1.msra.mxu0 0.0
    %2284 = vmatprep.subr.mxu0 0.0
    %2285 = vmatpush1.msra.mxu0 0.0
    %2286 = vmatprep.subr.mxu0 0.0
    %2287 = vmatpush1.msra.mxu0 0.0
    %2288 = vmatprep.subr.mxu0 0.0
    %2289 = vmatpush1.msra.mxu0 0.0
    %2290 = vmatprep.subr.mxu0 0.0
    %2291 = vmatpush1.msra.mxu0 0.0
    %2292 = vmatprep.subr.mxu0 0.0
    %2293 = vmatpush1.msra.mxu0 0.0
    %2294 = vmatprep.subr.mxu0 0.0
    %2295 = vmatpush1.msra.mxu0 0.0
    %2296 = vmatprep.subr.mxu0 0.0
    %2297 = vmatpush1.msra.mxu0 0.0
    %2298 = vmatprep.subr.mxu0 0.0
    %2299 = vmatpush1.msra.mxu0 0.0
    %2300 = vmatprep.subr.mxu0 0.0
    %2301 = vmatpush1.msra.mxu0 0.0
    %2302 = vmatprep.subr.mxu0 0.0
    %2303 = vmatpush1.msra.mxu0 0.0
    %2304 = vmatprep.subr.mxu0 0.0
    %2305 = vmatpush1.msra.mxu0 0.0
    %2306 = vmatprep.subr.mxu0 0.0
    %2307 = vmatpush1.msra.mxu0 0.0
    %2308 = vmatprep.subr.mxu0 0.0
    %2309 = vmatpush1.msra.mxu0 0.0
    %2310 = vmatprep.subr.mxu0 0.0
    %2311 = vmatpush1.msra.mxu0 0.0
    %2312 = vmatprep.subr.mxu0 0.0
    %2313 = vmatpush1.msra.mxu0 0.0
    %2314 = vmatprep.subr.mxu0 0.0
    %2315 = vmatpush1.msra.mxu0 0.0
    %2316 = vmatprep.subr.mxu0 0.0
    %2317 = vmatpush1.msra.mxu0 0.0
    %2318 = vmatprep.subr.mxu0 0.0
    %2319 = vmatpush1.msra.mxu0 0.0
    %2320 = vmatprep.subr.mxu0 0.0
    %2321 = vmatpush1.msra.mxu0 0.0
    %2322 = vmatprep.subr.mxu0 0.0
    %2323 = vmatpush1.msra.mxu0 0.0
    %2324 = vmatprep.subr.mxu0 0.0
    %2325 = vmatpush1.msra.mxu0 0.0
    %2326 = vmatprep.subr.mxu0 0.0
    %2327 = vmatpush1.msra.mxu0 0.0
    %2328 = vmatprep.subr.mxu0 0.0
    %2329 = vmatpush1.msra.mxu0 0.0
    %2330 = vmatprep.mubr.f32.mxu0 0.0
    %2331 = vmatmul.mubr.f32.gmra.mrb[0].mxu0 %v2122
    %v2332 = vpop.f32.mrb[0].mxu0
    %v2333 = vadd.f32 0.0, %v2332
    %v2334 = vpop.f32.mrb[0].mxu0
    %2335 = vdwg.mxu0
    %v2336 = vadd.f32 %v2064, %v2191
    %v2337 = vadd.f32 %v2065, %v2193
    %v2338 = vadd.f32 %v2066, %v2262
    %v2339 = vadd.f32 %v2067, %v2264
    %v2340 = vadd.f32 %v2068, %v2333
    %s2341 = scalar_lea.vmem %s3, 28
    %v2342 = vld [vmem:[%s2341] sm:$0xf]
    %2343 = vrot.lane.b32.xlu0 %v493, 95
    %v2344 = vpop.permute.xlu0 %2343
    %2345 = vrot.lane.b32.xlu0 %v494, 95
    %v2346 = vpop.permute.xlu0 %2345
    %2347 = vrot.lane.b32.xlu0 %v495, 95
    %v2348 = vpop.permute.xlu0 %2347
    %2349 = vrot.lane.b32.xlu0 %v496, 95
    %v2350 = vpop.permute.xlu0 %2349
    %2351 = vrot.lane.b32.xlu0 %v497, 95
    %v2352 = vpop.permute.xlu0 %2351
    %vm2353 = vcmask 777216
    %v2354 = vsel %vm2353, %v2344, %v2346
    %v2355 = vsel %vm2353, %v2346, %v2348
    %v2356 = vsel %vm2353, %v2348, %v2350
    %v2357 = vsel %vm2353, %v2350, %v2352
    %v2364 = vsel %vm33, %v2342, 0
    %2366 = vmatprep.subr.mxu0 %v2355
    %2367 = vmatpush1.msra.mxu0 %v2354
    %2368 = vmatprep.subr.mxu0 0.0
    %2369 = vmatpush1.msra.mxu0 0.0
    %2370 = vmatprep.subr.mxu0 0.0
    %2371 = vmatpush1.msra.mxu0 0.0
    %2372 = vmatprep.subr.mxu0 0.0
    %2373 = vmatpush1.msra.mxu0 0.0
    %2374 = vmatprep.subr.mxu0 0.0
    %2375 = vmatpush1.msra.mxu0 0.0
    %2376 = vmatprep.subr.mxu0 0.0
    %2377 = vmatpush1.msra.mxu0 0.0
    %2378 = vmatprep.subr.mxu0 0.0
    %2379 = vmatpush1.msra.mxu0 0.0
    %2380 = vmatprep.subr.mxu0 0.0
    %2381 = vmatpush1.msra.mxu0 0.0
    %2382 = vmatprep.subr.mxu0 0.0
    %2383 = vmatpush1.msra.mxu0 0.0
    %2384 = vmatprep.subr.mxu0 0.0
    %2385 = vmatpush1.msra.mxu0 0.0
    %2386 = vmatprep.subr.mxu0 0.0
    %2387 = vmatpush1.msra.mxu0 0.0
    %2388 = vmatprep.subr.mxu0 0.0
    %2389 = vmatpush1.msra.mxu0 0.0
    %2390 = vmatprep.subr.mxu0 0.0
    %2391 = vmatpush1.msra.mxu0 0.0
    %2392 = vmatprep.subr.mxu0 0.0
    %2393 = vmatpush1.msra.mxu0 0.0
    %2394 = vmatprep.subr.mxu0 0.0
    %2395 = vmatpush1.msra.mxu0 0.0
    %2396 = vmatprep.subr.mxu0 0.0
    %2397 = vmatpush1.msra.mxu0 0.0
    %2398 = vmatprep.subr.mxu0 0.0
    %2399 = vmatpush1.msra.mxu0 0.0
    %2400 = vmatprep.subr.mxu0 0.0
    %2401 = vmatpush1.msra.mxu0 0.0
    %2402 = vmatprep.subr.mxu0 0.0
    %2403 = vmatpush1.msra.mxu0 0.0
    %2404 = vmatprep.subr.mxu0 0.0
    %2405 = vmatpush1.msra.mxu0 0.0
    %2406 = vmatprep.subr.mxu0 0.0
    %2407 = vmatpush1.msra.mxu0 0.0
    %2408 = vmatprep.subr.mxu0 0.0
    %2409 = vmatpush1.msra.mxu0 0.0
    %2410 = vmatprep.subr.mxu0 0.0
    %2411 = vmatpush1.msra.mxu0 0.0
    %2412 = vmatprep.subr.mxu0 0.0
    %2413 = vmatpush1.msra.mxu0 0.0
    %2414 = vmatprep.subr.mxu0 0.0
    %2415 = vmatpush1.msra.mxu0 0.0
    %2416 = vmatprep.subr.mxu0 0.0
    %2417 = vmatpush1.msra.mxu0 0.0
    %2418 = vmatprep.subr.mxu0 0.0
    %2419 = vmatpush1.msra.mxu0 0.0
    %2420 = vmatprep.subr.mxu0 0.0
    %2421 = vmatpush1.msra.mxu0 0.0
    %2422 = vmatprep.subr.mxu0 0.0
    %2423 = vmatpush1.msra.mxu0 0.0
    %2424 = vmatprep.subr.mxu0 0.0
    %2425 = vmatpush1.msra.mxu0 0.0
    %2426 = vmatprep.subr.mxu0 0.0
    %2427 = vmatpush1.msra.mxu0 0.0
    %2428 = vmatprep.subr.mxu0 0.0
    %2429 = vmatpush1.msra.mxu0 0.0
    %2430 = vmatprep.mubr.f32.mxu0 0.0
    %2431 = vmatmul.mubr.f32.gmra.mrb[0].mxu0 %v2364
    %v2432 = vpop.f32.mrb[0].mxu0
    %v2433 = vadd.f32 0.0, %v2432
    %v2434 = vpop.f32.mrb[0].mxu0
    %v2435 = vadd.f32 0.0, %v2434
    %2436 = vdwg.mxu0
    %2437 = vmatprep.subr.mxu0 %v2357
    %2438 = vmatpush1.msra.mxu0 %v2356
    %2439 = vmatprep.subr.mxu0 0.0
    %2440 = vmatpush1.msra.mxu0 0.0
    %2441 = vmatprep.subr.mxu0 0.0
    %2442 = vmatpush1.msra.mxu0 0.0
    %2443 = vmatprep.subr.mxu0 0.0
    %2444 = vmatpush1.msra.mxu0 0.0
    %2445 = vmatprep.subr.mxu0 0.0
    %2446 = vmatpush1.msra.mxu0 0.0
    %2447 = vmatprep.subr.mxu0 0.0
    %2448 = vmatpush1.msra.mxu0 0.0
    %2449 = vmatprep.subr.mxu0 0.0
    %2450 = vmatpush1.msra.mxu0 0.0
    %2451 = vmatprep.subr.mxu0 0.0
    %2452 = vmatpush1.msra.mxu0 0.0
    %2453 = vmatprep.subr.mxu0 0.0
    %2454 = vmatpush1.msra.mxu0 0.0
    %2455 = vmatprep.subr.mxu0 0.0
    %2456 = vmatpush1.msra.mxu0 0.0
    %2457 = vmatprep.subr.mxu0 0.0
    %2458 = vmatpush1.msra.mxu0 0.0
    %2459 = vmatprep.subr.mxu0 0.0
    %2460 = vmatpush1.msra.mxu0 0.0
    %2461 = vmatprep.subr.mxu0 0.0
    %2462 = vmatpush1.msra.mxu0 0.0
    %2463 = vmatprep.subr.mxu0 0.0
    %2464 = vmatpush1.msra.mxu0 0.0
    %2465 = vmatprep.subr.mxu0 0.0
    %2466 = vmatpush1.msra.mxu0 0.0
    %2467 = vmatprep.subr.mxu0 0.0
    %2468 = vmatpush1.msra.mxu0 0.0
    %2469 = vmatprep.subr.mxu0 0.0
    %2470 = vmatpush1.msra.mxu0 0.0
    %2471 = vmatprep.subr.mxu0 0.0
    %2472 = vmatpush1.msra.mxu0 0.0
    %2473 = vmatprep.subr.mxu0 0.0
    %2474 = vmatpush1.msra.mxu0 0.0
    %2475 = vmatprep.subr.mxu0 0.0
    %2476 = vmatpush1.msra.mxu0 0.0
    %2477 = vmatprep.subr.mxu0 0.0
    %2478 = vmatpush1.msra.mxu0 0.0
    %2479 = vmatprep.subr.mxu0 0.0
    %2480 = vmatpush1.msra.mxu0 0.0
    %2481 = vmatprep.subr.mxu0 0.0
    %2482 = vmatpush1.msra.mxu0 0.0
    %2483 = vmatprep.subr.mxu0 0.0
    %2484 = vmatpush1.msra.mxu0 0.0
    %2485 = vmatprep.subr.mxu0 0.0
    %2486 = vmatpush1.msra.mxu0 0.0
    %2487 = vmatprep.subr.mxu0 0.0
    %2488 = vmatpush1.msra.mxu0 0.0
    %2489 = vmatprep.subr.mxu0 0.0
    %2490 = vmatpush1.msra.mxu0 0.0
    %2491 = vmatprep.subr.mxu0 0.0
    %2492 = vmatpush1.msra.mxu0 0.0
    %2493 = vmatprep.subr.mxu0 0.0
    %2494 = vmatpush1.msra.mxu0 0.0
    %2495 = vmatprep.subr.mxu0 0.0
    %2496 = vmatpush1.msra.mxu0 0.0
    %2497 = vmatprep.subr.mxu0 0.0
    %2498 = vmatpush1.msra.mxu0 0.0
    %2499 = vmatprep.subr.mxu0 0.0
    %2500 = vmatpush1.msra.mxu0 0.0
    %2501 = vmatprep.mubr.f32.mxu0 0.0
    %2502 = vmatmul.mubr.f32.gmra.mrb[0].mxu0 %v2364
    %v2503 = vpop.f32.mrb[0].mxu0
    %v2504 = vadd.f32 0.0, %v2503
    %v2505 = vpop.f32.mrb[0].mxu0
    %v2506 = vadd.f32 0.0, %v2505
    %2507 = vdwg.mxu0
    %2508 = vmatprep.subr.mxu0 0.0
    %2509 = vmatpush1.msra.mxu0 %v2352
    %2510 = vmatprep.subr.mxu0 0.0
    %2511 = vmatpush1.msra.mxu0 0.0
    %2512 = vmatprep.subr.mxu0 0.0
    %2513 = vmatpush1.msra.mxu0 0.0
    %2514 = vmatprep.subr.mxu0 0.0
    %2515 = vmatpush1.msra.mxu0 0.0
    %2516 = vmatprep.subr.mxu0 0.0
    %2517 = vmatpush1.msra.mxu0 0.0
    %2518 = vmatprep.subr.mxu0 0.0
    %2519 = vmatpush1.msra.mxu0 0.0
    %2520 = vmatprep.subr.mxu0 0.0
    %2521 = vmatpush1.msra.mxu0 0.0
    %2522 = vmatprep.subr.mxu0 0.0
    %2523 = vmatpush1.msra.mxu0 0.0
    %2524 = vmatprep.subr.mxu0 0.0
    %2525 = vmatpush1.msra.mxu0 0.0
    %2526 = vmatprep.subr.mxu0 0.0
    %2527 = vmatpush1.msra.mxu0 0.0
    %2528 = vmatprep.subr.mxu0 0.0
    %2529 = vmatpush1.msra.mxu0 0.0
    %2530 = vmatprep.subr.mxu0 0.0
    %2531 = vmatpush1.msra.mxu0 0.0
    %2532 = vmatprep.subr.mxu0 0.0
    %2533 = vmatpush1.msra.mxu0 0.0
    %2534 = vmatprep.subr.mxu0 0.0
    %2535 = vmatpush1.msra.mxu0 0.0
    %2536 = vmatprep.subr.mxu0 0.0
    %2537 = vmatpush1.msra.mxu0 0.0
    %2538 = vmatprep.subr.mxu0 0.0
    %2539 = vmatpush1.msra.mxu0 0.0
    %2540 = vmatprep.subr.mxu0 0.0
    %2541 = vmatpush1.msra.mxu0 0.0
    %2542 = vmatprep.subr.mxu0 0.0
    %2543 = vmatpush1.msra.mxu0 0.0
    %2544 = vmatprep.subr.mxu0 0.0
    %2545 = vmatpush1.msra.mxu0 0.0
    %2546 = vmatprep.subr.mxu0 0.0
    %2547 = vmatpush1.msra.mxu0 0.0
    %2548 = vmatprep.subr.mxu0 0.0
    %2549 = vmatpush1.msra.mxu0 0.0
    %2550 = vmatprep.subr.mxu0 0.0
    %2551 = vmatpush1.msra.mxu0 0.0
    %2552 = vmatprep.subr.mxu0 0.0
    %2553 = vmatpush1.msra.mxu0 0.0
    %2554 = vmatprep.subr.mxu0 0.0
    %2555 = vmatpush1.msra.mxu0 0.0
    %2556 = vmatprep.subr.mxu0 0.0
    %2557 = vmatpush1.msra.mxu0 0.0
    %2558 = vmatprep.subr.mxu0 0.0
    %2559 = vmatpush1.msra.mxu0 0.0
    %2560 = vmatprep.subr.mxu0 0.0
    %2561 = vmatpush1.msra.mxu0 0.0
    %2562 = vmatprep.subr.mxu0 0.0
    %2563 = vmatpush1.msra.mxu0 0.0
    %2564 = vmatprep.subr.mxu0 0.0
    %2565 = vmatpush1.msra.mxu0 0.0
    %2566 = vmatprep.subr.mxu0 0.0
    %2567 = vmatpush1.msra.mxu0 0.0
    %2568 = vmatprep.subr.mxu0 0.0
    %2569 = vmatpush1.msra.mxu0 0.0
    %2570 = vmatprep.subr.mxu0 0.0
    %2571 = vmatpush1.msra.mxu0 0.0
    %2572 = vmatprep.mubr.f32.mxu0 0.0
    %2573 = vmatmul.mubr.f32.gmra.mrb[0].mxu0 %v2364
    %v2574 = vpop.f32.mrb[0].mxu0
    %v2575 = vadd.f32 0.0, %v2574
    %v2576 = vpop.f32.mrb[0].mxu0
    %2577 = vdwg.mxu0
    %v2578 = vadd.f32 %v2336, %v2433
    %v2579 = vadd.f32 %v2337, %v2435
    %v2580 = vadd.f32 %v2338, %v2504
    %v2581 = vadd.f32 %v2339, %v2506
    %v2582 = vadd.f32 %v2340, %v2575
    %2583 = vrot.lane.b32.xlu0 %v994, 34
    %v2584 = vpop.permute.xlu0 %2583
    %2585 = vrot.lane.b32.xlu0 %v998, 34
    %v2586 = vpop.permute.xlu0 %2585
    %2587 = vrot.lane.b32.xlu0 %v1002, 34
    %v2588 = vpop.permute.xlu0 %2587
    %2589 = vrot.lane.b32.xlu0 %v1006, 34
    %v2590 = vpop.permute.xlu0 %2589
    %2591 = vrot.lane.b32.xlu0 %v1010, 34
    %v2592 = vpop.permute.xlu0 %2591
    %vm2593 = vcmask 277504
    %v2594 = vsel %vm2593, %v2584, %v2586
    %v2595 = vsel %vm2593, %v2586, %v2588
    %v2596 = vsel %vm2593, %v2588, %v2590
    %v2597 = vsel %vm2593, %v2590, %v2592
    %v2603 = vmul.f32 %v493, %v2584
    %v2604 = vmul.f32 %v494, %v2594
    %v2605 = vmul.f32 %v495, %v2595
    %v2606 = vmul.f32 %v496, %v2596
    %v2607 = vmul.f32 %v497, %v2597
    %s2608 = scalar_lea.vmem %s3, 32
    %v2609 = vld [vmem:[%s2608] sm:$0xf]
    %2615 = vrot.lane.b32.xlu0 %v2603, 94
    %v2616 = vpop.permute.xlu0 %2615
    %2617 = vrot.lane.b32.xlu0 %v2604, 94
    %v2618 = vpop.permute.xlu0 %2617
    %2619 = vrot.lane.b32.xlu0 %v2605, 94
    %v2620 = vpop.permute.xlu0 %2619
    %2621 = vrot.lane.b32.xlu0 %v2606, 94
    %v2622 = vpop.permute.xlu0 %2621
    %2623 = vrot.lane.b32.xlu0 %v2607, 94
    %v2624 = vpop.permute.xlu0 %2623
    %vm2625 = vcmask 769024
    %v2626 = vsel %vm2625, %v2616, %v2618
    %v2627 = vsel %vm2625, %v2618, %v2620
    %v2628 = vsel %vm2625, %v2620, %v2622
    %v2629 = vsel %vm2625, %v2622, %v2624
    %v2636 = vsel %vm33, %v2609, 0
    %2638 = vmatprep.subr.mxu0 %v2627
    %2639 = vmatpush1.msra.mxu0 %v2626
    %2640 = vmatprep.subr.mxu0 0.0
    %2641 = vmatpush1.msra.mxu0 0.0
    %2642 = vmatprep.subr.mxu0 0.0
    %2643 = vmatpush1.msra.mxu0 0.0
    %2644 = vmatprep.subr.mxu0 0.0
    %2645 = vmatpush1.msra.mxu0 0.0
    %2646 = vmatprep.subr.mxu0 0.0
    %2647 = vmatpush1.msra.mxu0 0.0
    %2648 = vmatprep.subr.mxu0 0.0
    %2649 = vmatpush1.msra.mxu0 0.0
    %2650 = vmatprep.subr.mxu0 0.0
    %2651 = vmatpush1.msra.mxu0 0.0
    %2652 = vmatprep.subr.mxu0 0.0
    %2653 = vmatpush1.msra.mxu0 0.0
    %2654 = vmatprep.subr.mxu0 0.0
    %2655 = vmatpush1.msra.mxu0 0.0
    %2656 = vmatprep.subr.mxu0 0.0
    %2657 = vmatpush1.msra.mxu0 0.0
    %2658 = vmatprep.subr.mxu0 0.0
    %2659 = vmatpush1.msra.mxu0 0.0
    %2660 = vmatprep.subr.mxu0 0.0
    %2661 = vmatpush1.msra.mxu0 0.0
    %2662 = vmatprep.subr.mxu0 0.0
    %2663 = vmatpush1.msra.mxu0 0.0
    %2664 = vmatprep.subr.mxu0 0.0
    %2665 = vmatpush1.msra.mxu0 0.0
    %2666 = vmatprep.subr.mxu0 0.0
    %2667 = vmatpush1.msra.mxu0 0.0
    %2668 = vmatprep.subr.mxu0 0.0
    %2669 = vmatpush1.msra.mxu0 0.0
    %2670 = vmatprep.subr.mxu0 0.0
    %2671 = vmatpush1.msra.mxu0 0.0
    %2672 = vmatprep.subr.mxu0 0.0
    %2673 = vmatpush1.msra.mxu0 0.0
    %2674 = vmatprep.subr.mxu0 0.0
    %2675 = vmatpush1.msra.mxu0 0.0
    %2676 = vmatprep.subr.mxu0 0.0
    %2677 = vmatpush1.msra.mxu0 0.0
    %2678 = vmatprep.subr.mxu0 0.0
    %2679 = vmatpush1.msra.mxu0 0.0
    %2680 = vmatprep.subr.mxu0 0.0
    %2681 = vmatpush1.msra.mxu0 0.0
    %2682 = vmatprep.subr.mxu0 0.0
    %2683 = vmatpush1.msra.mxu0 0.0
    %2684 = vmatprep.subr.mxu0 0.0
    %2685 = vmatpush1.msra.mxu0 0.0
    %2686 = vmatprep.subr.mxu0 0.0
    %2687 = vmatpush1.msra.mxu0 0.0
    %2688 = vmatprep.subr.mxu0 0.0
    %2689 = vmatpush1.msra.mxu0 0.0
    %2690 = vmatprep.subr.mxu0 0.0
    %2691 = vmatpush1.msra.mxu0 0.0
    %2692 = vmatprep.subr.mxu0 0.0
    %2693 = vmatpush1.msra.mxu0 0.0
    %2694 = vmatprep.subr.mxu0 0.0
    %2695 = vmatpush1.msra.mxu0 0.0
    %2696 = vmatprep.subr.mxu0 0.0
    %2697 = vmatpush1.msra.mxu0 0.0
    %2698 = vmatprep.subr.mxu0 0.0
    %2699 = vmatpush1.msra.mxu0 0.0
    %2700 = vmatprep.subr.mxu0 0.0
    %2701 = vmatpush1.msra.mxu0 0.0
    %2702 = vmatprep.mubr.f32.mxu0 0.0
    %2703 = vmatmul.mubr.f32.gmra.mrb[0].mxu0 %v2636
    %v2704 = vpop.f32.mrb[0].mxu0
    %v2705 = vadd.f32 0.0, %v2704
    %v2706 = vpop.f32.mrb[0].mxu0
    %v2707 = vadd.f32 0.0, %v2706
    %2708 = vdwg.mxu0
    %2709 = vmatprep.subr.mxu0 %v2629
    %2710 = vmatpush1.msra.mxu0 %v2628
    %2711 = vmatprep.subr.mxu0 0.0
    %2712 = vmatpush1.msra.mxu0 0.0
    %2713 = vmatprep.subr.mxu0 0.0
    %2714 = vmatpush1.msra.mxu0 0.0
    %2715 = vmatprep.subr.mxu0 0.0
    %2716 = vmatpush1.msra.mxu0 0.0
    %2717 = vmatprep.subr.mxu0 0.0
    %2718 = vmatpush1.msra.mxu0 0.0
    %2719 = vmatprep.subr.mxu0 0.0
    %2720 = vmatpush1.msra.mxu0 0.0
    %2721 = vmatprep.subr.mxu0 0.0
    %2722 = vmatpush1.msra.mxu0 0.0
    %2723 = vmatprep.subr.mxu0 0.0
    %2724 = vmatpush1.msra.mxu0 0.0
    %2725 = vmatprep.subr.mxu0 0.0
    %2726 = vmatpush1.msra.mxu0 0.0
    %2727 = vmatprep.subr.mxu0 0.0
    %2728 = vmatpush1.msra.mxu0 0.0
    %2729 = vmatprep.subr.mxu0 0.0
    %2730 = vmatpush1.msra.mxu0 0.0
    %2731 = vmatprep.subr.mxu0 0.0
    %2732 = vmatpush1.msra.mxu0 0.0
    %2733 = vmatprep.subr.mxu0 0.0
    %2734 = vmatpush1.msra.mxu0 0.0
    %2735 = vmatprep.subr.mxu0 0.0
    %2736 = vmatpush1.msra.mxu0 0.0
    %2737 = vmatprep.subr.mxu0 0.0
    %2738 = vmatpush1.msra.mxu0 0.0
    %2739 = vmatprep.subr.mxu0 0.0
    %2740 = vmatpush1.msra.mxu0 0.0
    %2741 = vmatprep.subr.mxu0 0.0
    %2742 = vmatpush1.msra.mxu0 0.0
    %2743 = vmatprep.subr.mxu0 0.0
    %2744 = vmatpush1.msra.mxu0 0.0
    %2745 = vmatprep.subr.mxu0 0.0
    %2746 = vmatpush1.msra.mxu0 0.0
    %2747 = vmatprep.subr.mxu0 0.0
    %2748 = vmatpush1.msra.mxu0 0.0
    %2749 = vmatprep.subr.mxu0 0.0
    %2750 = vmatpush1.msra.mxu0 0.0
    %2751 = vmatprep.subr.mxu0 0.0
    %2752 = vmatpush1.msra.mxu0 0.0
    %2753 = vmatprep.subr.mxu0 0.0
    %2754 = vmatpush1.msra.mxu0 0.0
    %2755 = vmatprep.subr.mxu0 0.0
    %2756 = vmatpush1.msra.mxu0 0.0
    %2757 = vmatprep.subr.mxu0 0.0
    %2758 = vmatpush1.msra.mxu0 0.0
    %2759 = vmatprep.subr.mxu0 0.0
    %2760 = vmatpush1.msra.mxu0 0.0
    %2761 = vmatprep.subr.mxu0 0.0
    %2762 = vmatpush1.msra.mxu0 0.0
    %2763 = vmatprep.subr.mxu0 0.0
    %2764 = vmatpush1.msra.mxu0 0.0
    %2765 = vmatprep.subr.mxu0 0.0
    %2766 = vmatpush1.msra.mxu0 0.0
    %2767 = vmatprep.subr.mxu0 0.0
    %2768 = vmatpush1.msra.mxu0 0.0
    %2769 = vmatprep.subr.mxu0 0.0
    %2770 = vmatpush1.msra.mxu0 0.0
    %2771 = vmatprep.subr.mxu0 0.0
    %2772 = vmatpush1.msra.mxu0 0.0
    %2773 = vmatprep.mubr.f32.mxu0 0.0
    %2774 = vmatmul.mubr.f32.gmra.mrb[0].mxu0 %v2636
    %v2775 = vpop.f32.mrb[0].mxu0
    %v2776 = vadd.f32 0.0, %v2775
    %v2777 = vpop.f32.mrb[0].mxu0
    %v2778 = vadd.f32 0.0, %v2777
    %2779 = vdwg.mxu0
    %2780 = vmatprep.subr.mxu0 0.0
    %2781 = vmatpush1.msra.mxu0 %v2624
    %2782 = vmatprep.subr.mxu0 0.0
    %2783 = vmatpush1.msra.mxu0 0.0
    %2784 = vmatprep.subr.mxu0 0.0
    %2785 = vmatpush1.msra.mxu0 0.0
    %2786 = vmatprep.subr.mxu0 0.0
    %2787 = vmatpush1.msra.mxu0 0.0
    %2788 = vmatprep.subr.mxu0 0.0
    %2789 = vmatpush1.msra.mxu0 0.0
    %2790 = vmatprep.subr.mxu0 0.0
    %2791 = vmatpush1.msra.mxu0 0.0
    %2792 = vmatprep.subr.mxu0 0.0
    %2793 = vmatpush1.msra.mxu0 0.0
    %2794 = vmatprep.subr.mxu0 0.0
    %2795 = vmatpush1.msra.mxu0 0.0
    %2796 = vmatprep.subr.mxu0 0.0
    %2797 = vmatpush1.msra.mxu0 0.0
    %2798 = vmatprep.subr.mxu0 0.0
    %2799 = vmatpush1.msra.mxu0 0.0
    %2800 = vmatprep.subr.mxu0 0.0
    %2801 = vmatpush1.msra.mxu0 0.0
    %2802 = vmatprep.subr.mxu0 0.0
    %2803 = vmatpush1.msra.mxu0 0.0
    %2804 = vmatprep.subr.mxu0 0.0
    %2805 = vmatpush1.msra.mxu0 0.0
    %2806 = vmatprep.subr.mxu0 0.0
    %2807 = vmatpush1.msra.mxu0 0.0
    %2808 = vmatprep.subr.mxu0 0.0
    %2809 = vmatpush1.msra.mxu0 0.0
    %2810 = vmatprep.subr.mxu0 0.0
    %2811 = vmatpush1.msra.mxu0 0.0
    %2812 = vmatprep.subr.mxu0 0.0
    %2813 = vmatpush1.msra.mxu0 0.0
    %2814 = vmatprep.subr.mxu0 0.0
    %2815 = vmatpush1.msra.mxu0 0.0
    %2816 = vmatprep.subr.mxu0 0.0
    %2817 = vmatpush1.msra.mxu0 0.0
    %2818 = vmatprep.subr.mxu0 0.0
    %2819 = vmatpush1.msra.mxu0 0.0
    %2820 = vmatprep.subr.mxu0 0.0
    %2821 = vmatpush1.msra.mxu0 0.0
    %2822 = vmatprep.subr.mxu0 0.0
    %2823 = vmatpush1.msra.mxu0 0.0
    %2824 = vmatprep.subr.mxu0 0.0
    %2825 = vmatpush1.msra.mxu0 0.0
    %2826 = vmatprep.subr.mxu0 0.0
    %2827 = vmatpush1.msra.mxu0 0.0
    %2828 = vmatprep.subr.mxu0 0.0
    %2829 = vmatpush1.msra.mxu0 0.0
    %2830 = vmatprep.subr.mxu0 0.0
    %2831 = vmatpush1.msra.mxu0 0.0
    %2832 = vmatprep.subr.mxu0 0.0
    %2833 = vmatpush1.msra.mxu0 0.0
    %2834 = vmatprep.subr.mxu0 0.0
    %2835 = vmatpush1.msra.mxu0 0.0
    %2836 = vmatprep.subr.mxu0 0.0
    %2837 = vmatpush1.msra.mxu0 0.0
    %2838 = vmatprep.subr.mxu0 0.0
    %2839 = vmatpush1.msra.mxu0 0.0
    %2840 = vmatprep.subr.mxu0 0.0
    %2841 = vmatpush1.msra.mxu0 0.0
    %2842 = vmatprep.subr.mxu0 0.0
    %2843 = vmatpush1.msra.mxu0 0.0
    %2844 = vmatprep.mubr.f32.mxu0 0.0
    %2845 = vmatmul.mubr.f32.gmra.mrb[0].mxu0 %v2636
    %v2846 = vpop.f32.mrb[0].mxu0
    %v2847 = vadd.f32 0.0, %v2846
    %v2848 = vpop.f32.mrb[0].mxu0
    %2849 = vdwg.mxu0
    %v2850 = vadd.f32 %v2578, %v2705
    %v2851 = vadd.f32 %v2579, %v2707
    %v2852 = vadd.f32 %v2580, %v2776
    %v2853 = vadd.f32 %v2581, %v2778
    %v2854 = vadd.f32 %v2582, %v2847
    %v2855 = vld [vmem:[%s4] sm:$0xf]
    %2857 = vset.pattern.permute.xlu0 0
    %2858 = vperm.xlu0 %2857, %v2855
    %v2859 = vpop.permute.xlu0 %2858
    %v2861 = vadd.f32 %v2850, %v2859
    %v2862 = vadd.f32 %v2851, %v2859
    %v2863 = vmax.f32 %v2861, 0.0
    %v2864 = vmax.f32 %v2862, 0.0
    %v2867 = vcombine.low %v2863, %v2864
    %2869 = vst [vmem:[#allocation3] sm:$0xff] %v2867
    %v2870 = vld [vmem:[%s4] sm:$0xf]
    %2872 = vset.pattern.permute.xlu0 0
    %2873 = vperm.xlu0 %2872, %v2870
    %v2874 = vpop.permute.xlu0 %2873
    %v2876 = vadd.f32 %v2852, %v2874
    %v2877 = vadd.f32 %v2853, %v2874
    %v2878 = vadd.f32 %v2854, %v2874
    %v2879 = vmax.f32 %v2876, 0.0
    %v2880 = vmax.f32 %v2877, 0.0
    %v2881 = vmax.f32 %v2878, 0.0
    %v2885 = vcombine.low %v2879, %v2880
    %2886 = vrot.lane.b32.xlu0 %v2885, 94
    %v2887 = vpop.permute.xlu0 %2886
    %2888 = vrot.lane.b32.xlu0 %v2881, 94
    %v2889 = vpop.permute.xlu0 %2888
    %v2890 = vrot.slane %v2887, 4
    %v2891 = vrot.slane %v2889, 4
    %vm2892 = vcmask 1043456
    %v2893 = vsel %vm2892, %v2890, %v2891
    %v2894 = vsel %vm2625, %v2887, %v2893
    %s2896 = scalar_lea.vmem [#allocation3], 8
    %2897 = vst [vmem:[%s2896] sm:$0xff] %v2894
    // Predicated region
    $region26: #{tpu_custom_call.1} parent=1 // pred_check
      _
    $region27: #{tpu_custom_call.1} parent=1 // pred_check_branch
      %2899 = sbr.rel (0) target = $region29
    $region28: #{tpu_custom_call.1} parent=1 // pred_region
      %s2901 = ssub.s32 256, 256
      %2902 = vsyncadd [#allocation4], %s2901
      %s2903 = sshll.u32 [#allocation3], 4
      %s2904 = int_to_ptr.vmem [resolvable:$true] %s2903
      %2909 = dma.vmem_to_hbm [thread:$0]  %s2904, 256, %s6, [#allocation4], 128, 128, 8
    $region29: #{tpu_custom_call.1} parent=1 // pred_fallthru
      _
    // Predicated region
    $region30: #{tpu_custom_call.1} parent=1 // pred_check
      _
    $region31: #{tpu_custom_call.1} parent=1 // pred_check_branch
      %2911 = sbr.rel (0) target = $region33
    $region32: #{tpu_custom_call.1} parent=1 // pred_region
      %2912 = dma.done [#allocation4], 256
    $region33: #{tpu_custom_call.1} parent=1 // pred_fallthru
      _
    %2913 = vsyncpa [#allocation4], 1

</llo_original>
